<compile_context>
chip_gen: v6e
topology: v6e:2x2x1
jax: 0.10.0
libtpu: 0.0.40
codegen_flags: <defaults>
</compile_context>

<pallas_src>
import jax
import jax.numpy as jnp
from jax import lax
from jax.experimental import pallas as pl
from jax.experimental.pallas import tpu as pltpu

# ---------------- model / problem sizes (small, consistent with forward) ------
BATCH = 2
SEQ0 = 8          # initial prompt length
VOCAB = 128       # lane-friendly vocab
HIDDEN = 32
MAX_NEW = 10      # max_new_tokens in forward()
N_DRAFT = 5       # N in forward()

_VMEM = pl.BlockSpec(memory_space=pltpu.MemorySpace.VMEM)


# ---------------- single fused speculative-decoding kernel --------------------
def _spec_decode_kernel(sd0_ref, st0_ref,
                        emb_d_ref, w1d_ref, b1d_ref, w2d_ref, b2d_ref,
                        emb_t_ref, w1t_ref, b1t_ref, w2t_ref, b2t_ref,
                        out_ref):
    # Load all weights once; they stay resident for the whole decode (<100 KiB).
    emb_d = emb_d_ref[...]
    w1d, b1d = w1d_ref[...], b1d_ref[...]
    w2d, b2d = w2d_ref[...], b2d_ref[...]
    emb_t = emb_t_ref[...]
    w1t, b1t = w1t_ref[...], b1t_ref[...]
    w2t, b2t = w2t_ref[...], b2t_ref[...]

    # Hoisted iotas (broadcasts are not CSE'd -> build once, reuse in the loop).
    vocab_ids = lax.broadcasted_iota(jnp.int32, (BATCH, VOCAB), 1)
    col_ids = lax.broadcasted_iota(jnp.int32, (BATCH, N_DRAFT), 1)

    def head(feat, w1, b1, w2, b2):
        h = jnp.tanh(jnp.dot(feat, w1, preferred_element_type=jnp.float32) + b1)
        return jnp.dot(h, w2, preferred_element_type=jnp.float32) + b2

    def max_lse_argmax(logits):
        m = jnp.max(logits, axis=-1, keepdims=True)
        lse = m + jnp.log(jnp.sum(jnp.exp(logits - m), axis=-1, keepdims=True))
        amax = jnp.min(jnp.where(logits == m, vocab_ids, VOCAB),
                       axis=-1, keepdims=True).astype(jnp.int32)
        return m, lse, amax

    def outer_body(step, carry):
        s_d, s_t = carry                                  # running emb sums [B, H]
        base_len = (jnp.float32(SEQ0)
                    + step.astype(jnp.float32) * jnp.float32(N_DRAFT))

        # -------- draft model: greedily propose N_DRAFT tokens (fused) --------
        toks, onehots, dlogp = [], [], []
        add_d = jnp.zeros((BATCH, HIDDEN), jnp.float32)
        for j in range(N_DRAFT):                          # static unroll (N=5)
            feat = (s_d + add_d) / (base_len + jnp.float32(j))
            logits = head(feat, w1d, b1d, w2d, b2d)
            m, lse, tok = max_lse_argmax(logits)
            onehot = (vocab_ids == tok).astype(jnp.float32)
            toks.append(tok)
            onehots.append(onehot)
            dlogp.append(m - lse)                         # log p_draft(tok); tok = argmax
            add_d = add_d + jnp.dot(onehot, emb_d,
                                    preferred_element_type=jnp.float32)

        # -------- target scoring of the N draft positions + accept/select -----
        add_t = jnp.zeros((BATCH, HIDDEN), jnp.float32)
        acc_counthot = jnp.zeros((BATCH, VOCAB), jnp.float32)
        accepted = jnp.zeros((BATCH, N_DRAFT), jnp.int32)
        for k in range(N_DRAFT):                          # static unroll (N=5)
            add_t = add_t + jnp.dot(onehots[k], emb_t,
                                    preferred_element_type=jnp.float32)
            feat = (s_t + add_t) / (base_len + jnp.float32(k + 1))
            t_logits = head(feat, w1t, b1t, w2t, b2t)
            _, tlse, t_amax = max_lse_argmax(t_logits)
            t_at_d = jnp.sum(t_logits * onehots[k], axis=-1, keepdims=True)
            # log-space compare == softmax prob compare (exact, monotone).
            accept = (t_at_d - tlse) >= dlogp[k]          # [B, 1] bool
            acc_tok = jnp.where(accept, toks[k], t_amax)  # [B, 1] int32
            onehot_t = (vocab_ids == t_amax).astype(jnp.float32)
            acc_counthot = acc_counthot + jnp.where(accept, onehots[k], onehot_t)
            accepted = jnp.where(col_ids == k, acc_tok, accepted)

        out_ref[step] = accepted                          # [B, N] this outer step

        # Update running embedding sums with the tokens actually appended.
        s_d = s_d + jnp.dot(acc_counthot, emb_d, preferred_element_type=jnp.float32)
        s_t = s_t + jnp.dot(acc_counthot, emb_t, preferred_element_type=jnp.float32)
        return s_d, s_t

    lax.fori_loop(0, MAX_NEW, outer_body, (sd0_ref[...], st0_ref[...]))


# ---------------- synthetic tiny "causal LM" parameters ------------------------
def init_lm_params(key):
    k1, k2, k3, k4, k5 = jax.random.split(key, 5)
    return dict(
        emb=jax.random.normal(k1, (VOCAB, HIDDEN), jnp.float32) * 0.1,
        w1=jax.random.normal(k2, (HIDDEN, HIDDEN), jnp.float32) / jnp.sqrt(HIDDEN),
        b1=jax.random.normal(k3, (1, HIDDEN), jnp.float32) * 0.01,
        w2=jax.random.normal(k4, (HIDDEN, VOCAB), jnp.float32) / jnp.sqrt(HIDDEN),
        b2=jax.random.normal(k5, (1, VOCAB), jnp.float32) * 0.01,
    )


# ---------------- SpeculativeDecoderExp.forward --------------------------------
@jax.jit
def speculative_forward(input_ids, draft_params, target_params):
    # One-time init of the causal-mean running state from the prompt.
    s_d0 = jnp.sum(draft_params["emb"][input_ids], axis=1)    # [B, H]
    s_t0 = jnp.sum(target_params["emb"][input_ids], axis=1)   # [B, H]

    acc = pl.pallas_call(
        _spec_decode_kernel,
        in_specs=[_VMEM] * 12,
        out_specs=_VMEM,
        out_shape=jax.ShapeDtypeStruct((MAX_NEW, BATCH, N_DRAFT), jnp.int32),
    )(s_d0, s_t0,
      draft_params["emb"], draft_params["w1"], draft_params["b1"],
      draft_params["w2"], draft_params["b2"],
      target_params["emb"], target_params["w1"], target_params["b1"],
      target_params["w2"], target_params["b2"])

    new_tokens = jnp.transpose(acc, (1, 0, 2)).reshape(
        input_ids.shape[0], MAX_NEW * N_DRAFT)
    return jnp.concatenate([input_ids, new_tokens], axis=-1)


# ---------------- main ----------------------------------------------------------
if __name__ == "__main__":
    key = jax.random.PRNGKey(0)
    k_in, k_draft, k_target = jax.random.split(key, 3)

    input_ids = jax.random.randint(k_in, (BATCH, SEQ0), 0, VOCAB, dtype=jnp.int32)
    draft_params = init_lm_params(k_draft)
    target_params = init_lm_params(k_target)

    out = speculative_forward(input_ids, draft_params, target_params)
    out = jax.block_until_ready(out)

    expected_len = SEQ0 + MAX_NEW * N_DRAFT
    assert out.shape == (BATCH, expected_len), out.shape
    assert out.dtype == jnp.int32, out.dtype
    print("KERNEL_OK")
</pallas_src>

<mosaic_0001>
module attributes {stable_mosaic.version = 11 : i64} {
  func.func @_spec_decode_kernel(%arg0: memref<2x32xf32, #tpu.memory_space<vmem>>, %arg1: memref<2x32xf32, #tpu.memory_space<vmem>>, %arg2: memref<128x32xf32, #tpu.memory_space<vmem>>, %arg3: memref<32x32xf32, #tpu.memory_space<vmem>>, %arg4: memref<1x32xf32, #tpu.memory_space<vmem>>, %arg5: memref<32x128xf32, #tpu.memory_space<vmem>>, %arg6: memref<1x128xf32, #tpu.memory_space<vmem>>, %arg7: memref<128x32xf32, #tpu.memory_space<vmem>>, %arg8: memref<32x32xf32, #tpu.memory_space<vmem>>, %arg9: memref<1x32xf32, #tpu.memory_space<vmem>>, %arg10: memref<32x128xf32, #tpu.memory_space<vmem>>, %arg11: memref<1x128xf32, #tpu.memory_space<vmem>>, %arg12: memref<10x2x5xi32, #tpu.memory_space<vmem>>) attributes {dimension_semantics = [], scalar_prefetch = 0 : i64, scratch_operands = 0 : i64, tpu.core_type = #tpu.core_type<tc>} {
    %c0 = arith.constant 0 : index
    %c0_0 = arith.constant 0 : index
    %0 = vector.load %arg2[%c0, %c0_0] : memref<128x32xf32, #tpu.memory_space<vmem>>, vector<128x32xf32>
    %c0_1 = arith.constant 0 : index
    %c0_2 = arith.constant 0 : index
    %1 = vector.load %arg3[%c0_1, %c0_2] : memref<32x32xf32, #tpu.memory_space<vmem>>, vector<32x32xf32>
    %c0_3 = arith.constant 0 : index
    %c0_4 = arith.constant 0 : index
    %2 = vector.load %arg4[%c0_3, %c0_4] : memref<1x32xf32, #tpu.memory_space<vmem>>, vector<1x32xf32>
    %c0_5 = arith.constant 0 : index
    %c0_6 = arith.constant 0 : index
    %3 = vector.load %arg5[%c0_5, %c0_6] : memref<32x128xf32, #tpu.memory_space<vmem>>, vector<32x128xf32>
    %c0_7 = arith.constant 0 : index
    %c0_8 = arith.constant 0 : index
    %4 = vector.load %arg6[%c0_7, %c0_8] : memref<1x128xf32, #tpu.memory_space<vmem>>, vector<1x128xf32>
    %c0_9 = arith.constant 0 : index
    %c0_10 = arith.constant 0 : index
    %5 = vector.load %arg7[%c0_9, %c0_10] : memref<128x32xf32, #tpu.memory_space<vmem>>, vector<128x32xf32>
    %c0_11 = arith.constant 0 : index
    %c0_12 = arith.constant 0 : index
    %6 = vector.load %arg8[%c0_11, %c0_12] : memref<32x32xf32, #tpu.memory_space<vmem>>, vector<32x32xf32>
    %c0_13 = arith.constant 0 : index
    %c0_14 = arith.constant 0 : index
    %7 = vector.load %arg9[%c0_13, %c0_14] : memref<1x32xf32, #tpu.memory_space<vmem>>, vector<1x32xf32>
    %c0_15 = arith.constant 0 : index
    %c0_16 = arith.constant 0 : index
    %8 = vector.load %arg10[%c0_15, %c0_16] : memref<32x128xf32, #tpu.memory_space<vmem>>, vector<32x128xf32>
    %c0_17 = arith.constant 0 : index
    %c0_18 = arith.constant 0 : index
    %9 = vector.load %arg11[%c0_17, %c0_18] : memref<1x128xf32, #tpu.memory_space<vmem>>, vector<1x128xf32>
    %10 = tpu.iota {dimensions = array<i32: 1>} : vector<2x128xi32>
    %11 = tpu.iota {dimensions = array<i32: 1>} : vector<2x5xi32>
    %c0_19 = arith.constant 0 : index
    %c0_20 = arith.constant 0 : index
    %12 = vector.load %arg0[%c0_19, %c0_20] : memref<2x32xf32, #tpu.memory_space<vmem>>, vector<2x32xf32>
    %c0_21 = arith.constant 0 : index
    %c0_22 = arith.constant 0 : index
    %13 = vector.load %arg1[%c0_21, %c0_22] : memref<2x32xf32, #tpu.memory_space<vmem>>, vector<2x32xf32>
    %c0_i32 = arith.constant 0 : i32
    %c10_i32 = arith.constant 10 : i32
    %14 = arith.addi %c0_i32, %c10_i32 : i32
    %c1_i32 = arith.constant 1 : i32
    %15:2 = scf.for %arg13 = %c0_i32 to %14 step %c1_i32 iter_args(%arg14 = %12, %arg15 = %13) -> (vector<2x32xf32>, vector<2x32xf32>)  : i32 {
      %16 = arith.sitofp %arg13 : i32 to f32
      %cst = arith.constant 5.000000e+00 : f32
      %17 = arith.mulf %16, %cst : f32
      %cst_24 = arith.constant 8.000000e+00 : f32
      %18 = arith.addf %cst_24, %17 : f32
      %cst_25 = arith.constant 0.000000e+00 : f32
      %19 = vector.broadcast %cst_25 : f32 to vector<2x32xf32>
      %20 = arith.addf %arg14, %19 : vector<2x32xf32>
      %cst_26 = arith.constant 0.000000e+00 : f32
      %21 = arith.addf %18, %cst_26 : f32
      %22 = vector.broadcast %21 : f32 to vector<2x32xf32>
      %23 = arith.divf %20, %22 : vector<2x32xf32>
      %cst_27 = arith.constant dense<0.000000e+00> : vector<2x32xf32>
      %24 = tpu.matmul %23, %1, %cst_27 {dimension_numbers = #tpu.dot_dimension_numbers<[1], [0], [0], [1], [0, 0, 1, 1], [], []>} : vector<2x32xf32>, vector<32x32xf32>, vector<2x32xf32> -> vector<2x32xf32>
      %25 = vector.broadcast %2 : vector<1x32xf32> to vector<2x32xf32>
      %26 = arith.addf %24, %25 : vector<2x32xf32>
      %27 = math.tanh %26 : vector<2x32xf32>
      %cst_28 = arith.constant dense<0.000000e+00> : vector<2x128xf32>
      %28 = tpu.matmul %27, %3, %cst_28 {dimension_numbers = #tpu.dot_dimension_numbers<[1], [0], [0], [1], [0, 0, 1, 1], [], []>} : vector<2x32xf32>, vector<32x128xf32>, vector<2x128xf32> -> vector<2x128xf32>
      %29 = vector.broadcast %4 : vector<1x128xf32> to vector<2x128xf32>
      %30 = arith.addf %28, %29 : vector<2x128xf32>
      %cst_29 = arith.constant dense<0xFF800000> : vector<2xf32>
      %31 = vector.multi_reduction <maximumf>, %30, %cst_29 [1] : vector<2x128xf32> to vector<2xf32>
      %32 = vector.shape_cast %31 : vector<2xf32> to vector<2x1xf32>
      %33 = vector.broadcast %32 : vector<2x1xf32> to vector<2x128xf32>
      %34 = arith.subf %30, %33 : vector<2x128xf32>
      %35 = math.exp %34 : vector<2x128xf32>
      %cst_30 = arith.constant dense<0.000000e+00> : vector<2xf32>
      %36 = vector.multi_reduction <add>, %35, %cst_30 [1] : vector<2x128xf32> to vector<2xf32>
      %37 = vector.shape_cast %36 : vector<2xf32> to vector<2x1xf32>
      %38 = math.log %37 : vector<2x1xf32>
      %39 = arith.addf %32, %38 : vector<2x1xf32>
      %40 = vector.broadcast %32 : vector<2x1xf32> to vector<2x128xf32>
      %41 = arith.cmpf oeq, %30, %40 : vector<2x128xf32>
      %c128_i32 = arith.constant 128 : i32
      %42 = vector.broadcast %c128_i32 : i32 to vector<2x128xi32>
      %43 = arith.select %41, %10, %42 : vector<2x128xi1>, vector<2x128xi32>
      %cst_31 = arith.constant dense<2147483647> : vector<2xi32>
      %44 = vector.multi_reduction <minsi>, %43, %cst_31 [1] : vector<2x128xi32> to vector<2xi32>
      %45 = vector.shape_cast %44 : vector<2xi32> to vector<2x1xi32>
      %46 = vector.broadcast %45 : vector<2x1xi32> to vector<2x128xi32>
      %47 = arith.cmpi eq, %10, %46 : vector<2x128xi32>
      %48 = arith.extui %47 : vector<2x128xi1> to vector<2x128xi32>
      %49 = arith.sitofp %48 : vector<2x128xi32> to vector<2x128xf32>
      %50 = arith.subf %32, %39 : vector<2x1xf32>
      %cst_32 = arith.constant dense<0.000000e+00> : vector<2x32xf32>
      %51 = tpu.matmul %49, %0, %cst_32 {dimension_numbers = #tpu.dot_dimension_numbers<[1], [0], [0], [1], [0, 0, 1, 1], [], []>} : vector<2x128xf32>, vector<128x32xf32>, vector<2x32xf32> -> vector<2x32xf32>
      %52 = arith.addf %19, %51 : vector<2x32xf32>
      %53 = arith.addf %arg14, %52 : vector<2x32xf32>
      %cst_33 = arith.constant 1.000000e+00 : f32
      %54 = arith.addf %18, %cst_33 : f32
      %55 = vector.broadcast %54 : f32 to vector<2x32xf32>
      %56 = arith.divf %53, %55 : vector<2x32xf32>
      %cst_34 = arith.constant dense<0.000000e+00> : vector<2x32xf32>
      %57 = tpu.matmul %56, %1, %cst_34 {dimension_numbers = #tpu.dot_dimension_numbers<[1], [0], [0], [1], [0, 0, 1, 1], [], []>} : vector<2x32xf32>, vector<32x32xf32>, vector<2x32xf32> -> vector<2x32xf32>
      %58 = vector.broadcast %2 : vector<1x32xf32> to vector<2x32xf32>
      %59 = arith.addf %57, %58 : vector<2x32xf32>
      %60 = math.tanh %59 : vector<2x32xf32>
      %cst_35 = arith.constant dense<0.000000e+00> : vector<2x128xf32>
      %61 = tpu.matmul %60, %3, %cst_35 {dimension_numbers = #tpu.dot_dimension_numbers<[1], [0], [0], [1], [0, 0, 1, 1], [], []>} : vector<2x32xf32>, vector<32x128xf32>, vector<2x128xf32> -> vector<2x128xf32>
      %62 = vector.broadcast %4 : vector<1x128xf32> to vector<2x128xf32>
      %63 = arith.addf %61, %62 : vector<2x128xf32>
      %cst_36 = arith.constant dense<0xFF800000> : vector<2xf32>
      %64 = vector.multi_reduction <maximumf>, %63, %cst_36 [1] : vector<2x128xf32> to vector<2xf32>
      %65 = vector.shape_cast %64 : vector<2xf32> to vector<2x1xf32>
      %66 = vector.broadcast %65 : vector<2x1xf32> to vector<2x128xf32>
      %67 = arith.subf %63, %66 : vector<2x128xf32>
      %68 = math.exp %67 : vector<2x128xf32>
      %cst_37 = arith.constant dense<0.000000e+00> : vector<2xf32>
      %69 = vector.multi_reduction <add>, %68, %cst_37 [1] : vector<2x128xf32> to vector<2xf32>
      %70 = vector.shape_cast %69 : vector<2xf32> to vector<2x1xf32>
      %71 = math.log %70 : vector<2x1xf32>
      %72 = arith.addf %65, %71 : vector<2x1xf32>
      %73 = vector.broadcast %65 : vector<2x1xf32> to vector<2x128xf32>
      %74 = arith.cmpf oeq, %63, %73 : vector<2x128xf32>
      %c128_i32_38 = arith.constant 128 : i32
      %75 = vector.broadcast %c128_i32_38 : i32 to vector<2x128xi32>
      %76 = arith.select %74, %10, %75 : vector<2x128xi1>, vector<2x128xi32>
      %cst_39 = arith.constant dense<2147483647> : vector<2xi32>
      %77 = vector.multi_reduction <minsi>, %76, %cst_39 [1] : vector<2x128xi32> to vector<2xi32>
      %78 = vector.shape_cast %77 : vector<2xi32> to vector<2x1xi32>
      %79 = vector.broadcast %78 : vector<2x1xi32> to vector<2x128xi32>
      %80 = arith.cmpi eq, %10, %79 : vector<2x128xi32>
      %81 = arith.extui %80 : vector<2x128xi1> to vector<2x128xi32>
      %82 = arith.sitofp %81 : vector<2x128xi32> to vector<2x128xf32>
      %83 = arith.subf %65, %72 : vector<2x1xf32>
      %cst_40 = arith.constant dense<0.000000e+00> : vector<2x32xf32>
      %84 = tpu.matmul %82, %0, %cst_40 {dimension_numbers = #tpu.dot_dimension_numbers<[1], [0], [0], [1], [0, 0, 1, 1], [], []>} : vector<2x128xf32>, vector<128x32xf32>, vector<2x32xf32> -> vector<2x32xf32>
      %85 = arith.addf %52, %84 : vector<2x32xf32>
      %86 = arith.addf %arg14, %85 : vector<2x32xf32>
      %cst_41 = arith.constant 2.000000e+00 : f32
      %87 = arith.addf %18, %cst_41 : f32
      %88 = vector.broadcast %87 : f32 to vector<2x32xf32>
      %89 = arith.divf %86, %88 : vector<2x32xf32>
      %cst_42 = arith.constant dense<0.000000e+00> : vector<2x32xf32>
      %90 = tpu.matmul %89, %1, %cst_42 {dimension_numbers = #tpu.dot_dimension_numbers<[1], [0], [0], [1], [0, 0, 1, 1], [], []>} : vector<2x32xf32>, vector<32x32xf32>, vector<2x32xf32> -> vector<2x32xf32>
      %91 = vector.broadcast %2 : vector<1x32xf32> to vector<2x32xf32>
      %92 = arith.addf %90, %91 : vector<2x32xf32>
      %93 = math.tanh %92 : vector<2x32xf32>
      %cst_43 = arith.constant dense<0.000000e+00> : vector<2x128xf32>
      %94 = tpu.matmul %93, %3, %cst_43 {dimension_numbers = #tpu.dot_dimension_numbers<[1], [0], [0], [1], [0, 0, 1, 1], [], []>} : vector<2x32xf32>, vector<32x128xf32>, vector<2x128xf32> -> vector<2x128xf32>
      %95 = vector.broadcast %4 : vector<1x128xf32> to vector<2x128xf32>
      %96 = arith.addf %94, %95 : vector<2x128xf32>
      %cst_44 = arith.constant dense<0xFF800000> : vector<2xf32>
      %97 = vector.multi_reduction <maximumf>, %96, %cst_44 [1] : vector<2x128xf32> to vector<2xf32>
      %98 = vector.shape_cast %97 : vector<2xf32> to vector<2x1xf32>
      %99 = vector.broadcast %98 : vector<2x1xf32> to vector<2x128xf32>
      %100 = arith.subf %96, %99 : vector<2x128xf32>
      %101 = math.exp %100 : vector<2x128xf32>
      %cst_45 = arith.constant dense<0.000000e+00> : vector<2xf32>
      %102 = vector.multi_reduction <add>, %101, %cst_45 [1] : vector<2x128xf32> to vector<2xf32>
      %103 = vector.shape_cast %102 : vector<2xf32> to vector<2x1xf32>
      %104 = math.log %103 : vector<2x1xf32>
      %105 = arith.addf %98, %104 : vector<2x1xf32>
      %106 = vector.broadcast %98 : vector<2x1xf32> to vector<2x128xf32>
      %107 = arith.cmpf oeq, %96, %106 : vector<2x128xf32>
      %c128_i32_46 = arith.constant 128 : i32
      %108 = vector.broadcast %c128_i32_46 : i32 to vector<2x128xi32>
      %109 = arith.select %107, %10, %108 : vector<2x128xi1>, vector<2x128xi32>
      %cst_47 = arith.constant dense<2147483647> : vector<2xi32>
      %110 = vector.multi_reduction <minsi>, %109, %cst_47 [1] : vector<2x128xi32> to vector<2xi32>
      %111 = vector.shape_cast %110 : vector<2xi32> to vector<2x1xi32>
      %112 = vector.broadcast %111 : vector<2x1xi32> to vector<2x128xi32>
      %113 = arith.cmpi eq, %10, %112 : vector<2x128xi32>
      %114 = arith.extui %113 : vector<2x128xi1> to vector<2x128xi32>
      %115 = arith.sitofp %114 : vector<2x128xi32> to vector<2x128xf32>
      %116 = arith.subf %98, %105 : vector<2x1xf32>
      %cst_48 = arith.constant dense<0.000000e+00> : vector<2x32xf32>
      %117 = tpu.matmul %115, %0, %cst_48 {dimension_numbers = #tpu.dot_dimension_numbers<[1], [0], [0], [1], [0, 0, 1, 1], [], []>} : vector<2x128xf32>, vector<128x32xf32>, vector<2x32xf32> -> vector<2x32xf32>
      %118 = arith.addf %85, %117 : vector<2x32xf32>
      %119 = arith.addf %arg14, %118 : vector<2x32xf32>
      %cst_49 = arith.constant 3.000000e+00 : f32
      %120 = arith.addf %18, %cst_49 : f32
      %121 = vector.broadcast %120 : f32 to vector<2x32xf32>
      %122 = arith.divf %119, %121 : vector<2x32xf32>
      %cst_50 = arith.constant dense<0.000000e+00> : vector<2x32xf32>
      %123 = tpu.matmul %122, %1, %cst_50 {dimension_numbers = #tpu.dot_dimension_numbers<[1], [0], [0], [1], [0, 0, 1, 1], [], []>} : vector<2x32xf32>, vector<32x32xf32>, vector<2x32xf32> -> vector<2x32xf32>
      %124 = vector.broadcast %2 : vector<1x32xf32> to vector<2x32xf32>
      %125 = arith.addf %123, %124 : vector<2x32xf32>
      %126 = math.tanh %125 : vector<2x32xf32>
      %cst_51 = arith.constant dense<0.000000e+00> : vector<2x128xf32>
      %127 = tpu.matmul %126, %3, %cst_51 {dimension_numbers = #tpu.dot_dimension_numbers<[1], [0], [0], [1], [0, 0, 1, 1], [], []>} : vector<2x32xf32>, vector<32x128xf32>, vector<2x128xf32> -> vector<2x128xf32>
      %128 = vector.broadcast %4 : vector<1x128xf32> to vector<2x128xf32>
      %129 = arith.addf %127, %128 : vector<2x128xf32>
      %cst_52 = arith.constant dense<0xFF800000> : vector<2xf32>
      %130 = vector.multi_reduction <maximumf>, %129, %cst_52 [1] : vector<2x128xf32> to vector<2xf32>
      %131 = vector.shape_cast %130 : vector<2xf32> to vector<2x1xf32>
      %132 = vector.broadcast %131 : vector<2x1xf32> to vector<2x128xf32>
      %133 = arith.subf %129, %132 : vector<2x128xf32>
      %134 = math.exp %133 : vector<2x128xf32>
      %cst_53 = arith.constant dense<0.000000e+00> : vector<2xf32>
      %135 = vector.multi_reduction <add>, %134, %cst_53 [1] : vector<2x128xf32> to vector<2xf32>
      %136 = vector.shape_cast %135 : vector<2xf32> to vector<2x1xf32>
      %137 = math.log %136 : vector<2x1xf32>
      %138 = arith.addf %131, %137 : vector<2x1xf32>
      %139 = vector.broadcast %131 : vector<2x1xf32> to vector<2x128xf32>
      %140 = arith.cmpf oeq, %129, %139 : vector<2x128xf32>
      %c128_i32_54 = arith.constant 128 : i32
      %141 = vector.broadcast %c128_i32_54 : i32 to vector<2x128xi32>
      %142 = arith.select %140, %10, %141 : vector<2x128xi1>, vector<2x128xi32>
      %cst_55 = arith.constant dense<2147483647> : vector<2xi32>
      %143 = vector.multi_reduction <minsi>, %142, %cst_55 [1] : vector<2x128xi32> to vector<2xi32>
      %144 = vector.shape_cast %143 : vector<2xi32> to vector<2x1xi32>
      %145 = vector.broadcast %144 : vector<2x1xi32> to vector<2x128xi32>
      %146 = arith.cmpi eq, %10, %145 : vector<2x128xi32>
      %147 = arith.extui %146 : vector<2x128xi1> to vector<2x128xi32>
      %148 = arith.sitofp %147 : vector<2x128xi32> to vector<2x128xf32>
      %149 = arith.subf %131, %138 : vector<2x1xf32>
      %cst_56 = arith.constant dense<0.000000e+00> : vector<2x32xf32>
      %150 = tpu.matmul %148, %0, %cst_56 {dimension_numbers = #tpu.dot_dimension_numbers<[1], [0], [0], [1], [0, 0, 1, 1], [], []>} : vector<2x128xf32>, vector<128x32xf32>, vector<2x32xf32> -> vector<2x32xf32>
      %151 = arith.addf %118, %150 : vector<2x32xf32>
      %152 = arith.addf %arg14, %151 : vector<2x32xf32>
      %cst_57 = arith.constant 4.000000e+00 : f32
      %153 = arith.addf %18, %cst_57 : f32
      %154 = vector.broadcast %153 : f32 to vector<2x32xf32>
      %155 = arith.divf %152, %154 : vector<2x32xf32>
      %cst_58 = arith.constant dense<0.000000e+00> : vector<2x32xf32>
      %156 = tpu.matmul %155, %1, %cst_58 {dimension_numbers = #tpu.dot_dimension_numbers<[1], [0], [0], [1], [0, 0, 1, 1], [], []>} : vector<2x32xf32>, vector<32x32xf32>, vector<2x32xf32> -> vector<2x32xf32>
      %157 = vector.broadcast %2 : vector<1x32xf32> to vector<2x32xf32>
      %158 = arith.addf %156, %157 : vector<2x32xf32>
      %159 = math.tanh %158 : vector<2x32xf32>
      %cst_59 = arith.constant dense<0.000000e+00> : vector<2x128xf32>
      %160 = tpu.matmul %159, %3, %cst_59 {dimension_numbers = #tpu.dot_dimension_numbers<[1], [0], [0], [1], [0, 0, 1, 1], [], []>} : vector<2x32xf32>, vector<32x128xf32>, vector<2x128xf32> -> vector<2x128xf32>
      %161 = vector.broadcast %4 : vector<1x128xf32> to vector<2x128xf32>
      %162 = arith.addf %160, %161 : vector<2x128xf32>
      %cst_60 = arith.constant dense<0xFF800000> : vector<2xf32>
      %163 = vector.multi_reduction <maximumf>, %162, %cst_60 [1] : vector<2x128xf32> to vector<2xf32>
      %164 = vector.shape_cast %163 : vector<2xf32> to vector<2x1xf32>
      %165 = vector.broadcast %164 : vector<2x1xf32> to vector<2x128xf32>
      %166 = arith.subf %162, %165 : vector<2x128xf32>
      %167 = math.exp %166 : vector<2x128xf32>
      %cst_61 = arith.constant dense<0.000000e+00> : vector<2xf32>
      %168 = vector.multi_reduction <add>, %167, %cst_61 [1] : vector<2x128xf32> to vector<2xf32>
      %169 = vector.shape_cast %168 : vector<2xf32> to vector<2x1xf32>
      %170 = math.log %169 : vector<2x1xf32>
      %171 = arith.addf %164, %170 : vector<2x1xf32>
      %172 = vector.broadcast %164 : vector<2x1xf32> to vector<2x128xf32>
      %173 = arith.cmpf oeq, %162, %172 : vector<2x128xf32>
      %c128_i32_62 = arith.constant 128 : i32
      %174 = vector.broadcast %c128_i32_62 : i32 to vector<2x128xi32>
      %175 = arith.select %173, %10, %174 : vector<2x128xi1>, vector<2x128xi32>
      %cst_63 = arith.constant dense<2147483647> : vector<2xi32>
      %176 = vector.multi_reduction <minsi>, %175, %cst_63 [1] : vector<2x128xi32> to vector<2xi32>
      %177 = vector.shape_cast %176 : vector<2xi32> to vector<2x1xi32>
      %178 = vector.broadcast %177 : vector<2x1xi32> to vector<2x128xi32>
      %179 = arith.cmpi eq, %10, %178 : vector<2x128xi32>
      %180 = arith.extui %179 : vector<2x128xi1> to vector<2x128xi32>
      %181 = arith.sitofp %180 : vector<2x128xi32> to vector<2x128xf32>
      %182 = arith.subf %164, %171 : vector<2x1xf32>
      %cst_64 = arith.constant 0.000000e+00 : f32
      %183 = vector.broadcast %cst_64 : f32 to vector<2x32xf32>
      %cst_65 = arith.constant 0.000000e+00 : f32
      %184 = vector.broadcast %cst_65 : f32 to vector<2x128xf32>
      %c0_i32_66 = arith.constant 0 : i32
      %185 = vector.broadcast %c0_i32_66 : i32 to vector<2x5xi32>
      %cst_67 = arith.constant dense<0.000000e+00> : vector<2x32xf32>
      %186 = tpu.matmul %49, %5, %cst_67 {dimension_numbers = #tpu.dot_dimension_numbers<[1], [0], [0], [1], [0, 0, 1, 1], [], []>} : vector<2x128xf32>, vector<128x32xf32>, vector<2x32xf32> -> vector<2x32xf32>
      %187 = arith.addf %183, %186 : vector<2x32xf32>
      %188 = arith.addf %arg15, %187 : vector<2x32xf32>
      %cst_68 = arith.constant 1.000000e+00 : f32
      %189 = arith.addf %18, %cst_68 : f32
      %190 = vector.broadcast %189 : f32 to vector<2x32xf32>
      %191 = arith.divf %188, %190 : vector<2x32xf32>
      %cst_69 = arith.constant dense<0.000000e+00> : vector<2x32xf32>
      %192 = tpu.matmul %191, %6, %cst_69 {dimension_numbers = #tpu.dot_dimension_numbers<[1], [0], [0], [1], [0, 0, 1, 1], [], []>} : vector<2x32xf32>, vector<32x32xf32>, vector<2x32xf32> -> vector<2x32xf32>
      %193 = vector.broadcast %7 : vector<1x32xf32> to vector<2x32xf32>
      %194 = arith.addf %192, %193 : vector<2x32xf32>
      %195 = math.tanh %194 : vector<2x32xf32>
      %cst_70 = arith.constant dense<0.000000e+00> : vector<2x128xf32>
      %196 = tpu.matmul %195, %8, %cst_70 {dimension_numbers = #tpu.dot_dimension_numbers<[1], [0], [0], [1], [0, 0, 1, 1], [], []>} : vector<2x32xf32>, vector<32x128xf32>, vector<2x128xf32> -> vector<2x128xf32>
      %197 = vector.broadcast %9 : vector<1x128xf32> to vector<2x128xf32>
      %198 = arith.addf %196, %197 : vector<2x128xf32>
      %cst_71 = arith.constant dense<0xFF800000> : vector<2xf32>
      %199 = vector.multi_reduction <maximumf>, %198, %cst_71 [1] : vector<2x128xf32> to vector<2xf32>
      %200 = vector.shape_cast %199 : vector<2xf32> to vector<2x1xf32>
      %201 = vector.broadcast %200 : vector<2x1xf32> to vector<2x128xf32>
      %202 = arith.subf %198, %201 : vector<2x128xf32>
      %203 = math.exp %202 : vector<2x128xf32>
      %cst_72 = arith.constant dense<0.000000e+00> : vector<2xf32>
      %204 = vector.multi_reduction <add>, %203, %cst_72 [1] : vector<2x128xf32> to vector<2xf32>
      %205 = vector.shape_cast %204 : vector<2xf32> to vector<2x1xf32>
      %206 = math.log %205 : vector<2x1xf32>
      %207 = arith.addf %200, %206 : vector<2x1xf32>
      %208 = vector.broadcast %200 : vector<2x1xf32> to vector<2x128xf32>
      %209 = arith.cmpf oeq, %198, %208 : vector<2x128xf32>
      %c128_i32_73 = arith.constant 128 : i32
      %210 = vector.broadcast %c128_i32_73 : i32 to vector<2x128xi32>
      %211 = arith.select %209, %10, %210 : vector<2x128xi1>, vector<2x128xi32>
      %cst_74 = arith.constant dense<2147483647> : vector<2xi32>
      %212 = vector.multi_reduction <minsi>, %211, %cst_74 [1] : vector<2x128xi32> to vector<2xi32>
      %213 = vector.shape_cast %212 : vector<2xi32> to vector<2x1xi32>
      %214 = arith.mulf %198, %49 : vector<2x128xf32>
      %cst_75 = arith.constant dense<0.000000e+00> : vector<2xf32>
      %215 = vector.multi_reduction <add>, %214, %cst_75 [1] : vector<2x128xf32> to vector<2xf32>
      %216 = vector.shape_cast %215 : vector<2xf32> to vector<2x1xf32>
      %217 = arith.subf %216, %207 : vector<2x1xf32>
      %218 = arith.cmpf oge, %217, %50 : vector<2x1xf32>
      %219 = arith.select %218, %45, %213 : vector<2x1xi1>, vector<2x1xi32>
      %220 = vector.broadcast %213 : vector<2x1xi32> to vector<2x128xi32>
      %221 = arith.cmpi eq, %10, %220 : vector<2x128xi32>
      %222 = arith.extui %221 : vector<2x128xi1> to vector<2x128xi32>
      %223 = arith.sitofp %222 : vector<2x128xi32> to vector<2x128xf32>
      %224 = vector.shape_cast %218 : vector<2x1xi1> to vector<2x1xi1>
      %225 = vector.broadcast %224 : vector<2x1xi1> to vector<2x128xi1>
      %226 = arith.select %225, %49, %223 : vector<2x128xi1>, vector<2x128xf32>
      %227 = arith.addf %184, %226 : vector<2x128xf32>
      %c0_i32_76 = arith.constant 0 : i32
      %228 = vector.broadcast %c0_i32_76 : i32 to vector<2x5xi32>
      %229 = arith.cmpi eq, %11, %228 : vector<2x5xi32>
      %230 = vector.shape_cast %219 : vector<2x1xi32> to vector<2x1xi32>
      %231 = vector.broadcast %230 : vector<2x1xi32> to vector<2x5xi32>
      %232 = arith.select %229, %231, %185 : vector<2x5xi1>, vector<2x5xi32>
      %cst_77 = arith.constant dense<0.000000e+00> : vector<2x32xf32>
      %233 = tpu.matmul %82, %5, %cst_77 {dimension_numbers = #tpu.dot_dimension_numbers<[1], [0], [0], [1], [0, 0, 1, 1], [], []>} : vector<2x128xf32>, vector<128x32xf32>, vector<2x32xf32> -> vector<2x32xf32>
      %234 = arith.addf %187, %233 : vector<2x32xf32>
      %235 = arith.addf %arg15, %234 : vector<2x32xf32>
      %cst_78 = arith.constant 2.000000e+00 : f32
      %236 = arith.addf %18, %cst_78 : f32
      %237 = vector.broadcast %236 : f32 to vector<2x32xf32>
      %238 = arith.divf %235, %237 : vector<2x32xf32>
      %cst_79 = arith.constant dense<0.000000e+00> : vector<2x32xf32>
      %239 = tpu.matmul %238, %6, %cst_79 {dimension_numbers = #tpu.dot_dimension_numbers<[1], [0], [0], [1], [0, 0, 1, 1], [], []>} : vector<2x32xf32>, vector<32x32xf32>, vector<2x32xf32> -> vector<2x32xf32>
      %240 = vector.broadcast %7 : vector<1x32xf32> to vector<2x32xf32>
      %241 = arith.addf %239, %240 : vector<2x32xf32>
      %242 = math.tanh %241 : vector<2x32xf32>
      %cst_80 = arith.constant dense<0.000000e+00> : vector<2x128xf32>
      %243 = tpu.matmul %242, %8, %cst_80 {dimension_numbers = #tpu.dot_dimension_numbers<[1], [0], [0], [1], [0, 0, 1, 1], [], []>} : vector<2x32xf32>, vector<32x128xf32>, vector<2x128xf32> -> vector<2x128xf32>
      %244 = vector.broadcast %9 : vector<1x128xf32> to vector<2x128xf32>
      %245 = arith.addf %243, %244 : vector<2x128xf32>
      %cst_81 = arith.constant dense<0xFF800000> : vector<2xf32>
      %246 = vector.multi_reduction <maximumf>, %245, %cst_81 [1] : vector<2x128xf32> to vector<2xf32>
      %247 = vector.shape_cast %246 : vector<2xf32> to vector<2x1xf32>
      %248 = vector.broadcast %247 : vector<2x1xf32> to vector<2x128xf32>
      %249 = arith.subf %245, %248 : vector<2x128xf32>
      %250 = math.exp %249 : vector<2x128xf32>
      %cst_82 = arith.constant dense<0.000000e+00> : vector<2xf32>
      %251 = vector.multi_reduction <add>, %250, %cst_82 [1] : vector<2x128xf32> to vector<2xf32>
      %252 = vector.shape_cast %251 : vector<2xf32> to vector<2x1xf32>
      %253 = math.log %252 : vector<2x1xf32>
      %254 = arith.addf %247, %253 : vector<2x1xf32>
      %255 = vector.broadcast %247 : vector<2x1xf32> to vector<2x128xf32>
      %256 = arith.cmpf oeq, %245, %255 : vector<2x128xf32>
      %c128_i32_83 = arith.constant 128 : i32
      %257 = vector.broadcast %c128_i32_83 : i32 to vector<2x128xi32>
      %258 = arith.select %256, %10, %257 : vector<2x128xi1>, vector<2x128xi32>
      %cst_84 = arith.constant dense<2147483647> : vector<2xi32>
      %259 = vector.multi_reduction <minsi>, %258, %cst_84 [1] : vector<2x128xi32> to vector<2xi32>
      %260 = vector.shape_cast %259 : vector<2xi32> to vector<2x1xi32>
      %261 = arith.mulf %245, %82 : vector<2x128xf32>
      %cst_85 = arith.constant dense<0.000000e+00> : vector<2xf32>
      %262 = vector.multi_reduction <add>, %261, %cst_85 [1] : vector<2x128xf32> to vector<2xf32>
      %263 = vector.shape_cast %262 : vector<2xf32> to vector<2x1xf32>
      %264 = arith.subf %263, %254 : vector<2x1xf32>
      %265 = arith.cmpf oge, %264, %83 : vector<2x1xf32>
      %266 = arith.select %265, %78, %260 : vector<2x1xi1>, vector<2x1xi32>
      %267 = vector.broadcast %260 : vector<2x1xi32> to vector<2x128xi32>
      %268 = arith.cmpi eq, %10, %267 : vector<2x128xi32>
      %269 = arith.extui %268 : vector<2x128xi1> to vector<2x128xi32>
      %270 = arith.sitofp %269 : vector<2x128xi32> to vector<2x128xf32>
      %271 = vector.shape_cast %265 : vector<2x1xi1> to vector<2x1xi1>
      %272 = vector.broadcast %271 : vector<2x1xi1> to vector<2x128xi1>
      %273 = arith.select %272, %82, %270 : vector<2x128xi1>, vector<2x128xf32>
      %274 = arith.addf %227, %273 : vector<2x128xf32>
      %c1_i32_86 = arith.constant 1 : i32
      %275 = vector.broadcast %c1_i32_86 : i32 to vector<2x5xi32>
      %276 = arith.cmpi eq, %11, %275 : vector<2x5xi32>
      %277 = vector.shape_cast %266 : vector<2x1xi32> to vector<2x1xi32>
      %278 = vector.broadcast %277 : vector<2x1xi32> to vector<2x5xi32>
      %279 = arith.select %276, %278, %232 : vector<2x5xi1>, vector<2x5xi32>
      %cst_87 = arith.constant dense<0.000000e+00> : vector<2x32xf32>
      %280 = tpu.matmul %115, %5, %cst_87 {dimension_numbers = #tpu.dot_dimension_numbers<[1], [0], [0], [1], [0, 0, 1, 1], [], []>} : vector<2x128xf32>, vector<128x32xf32>, vector<2x32xf32> -> vector<2x32xf32>
      %281 = arith.addf %234, %280 : vector<2x32xf32>
      %282 = arith.addf %arg15, %281 : vector<2x32xf32>
      %cst_88 = arith.constant 3.000000e+00 : f32
      %283 = arith.addf %18, %cst_88 : f32
      %284 = vector.broadcast %283 : f32 to vector<2x32xf32>
      %285 = arith.divf %282, %284 : vector<2x32xf32>
      %cst_89 = arith.constant dense<0.000000e+00> : vector<2x32xf32>
      %286 = tpu.matmul %285, %6, %cst_89 {dimension_numbers = #tpu.dot_dimension_numbers<[1], [0], [0], [1], [0, 0, 1, 1], [], []>} : vector<2x32xf32>, vector<32x32xf32>, vector<2x32xf32> -> vector<2x32xf32>
      %287 = vector.broadcast %7 : vector<1x32xf32> to vector<2x32xf32>
      %288 = arith.addf %286, %287 : vector<2x32xf32>
      %289 = math.tanh %288 : vector<2x32xf32>
      %cst_90 = arith.constant dense<0.000000e+00> : vector<2x128xf32>
      %290 = tpu.matmul %289, %8, %cst_90 {dimension_numbers = #tpu.dot_dimension_numbers<[1], [0], [0], [1], [0, 0, 1, 1], [], []>} : vector<2x32xf32>, vector<32x128xf32>, vector<2x128xf32> -> vector<2x128xf32>
      %291 = vector.broadcast %9 : vector<1x128xf32> to vector<2x128xf32>
      %292 = arith.addf %290, %291 : vector<2x128xf32>
      %cst_91 = arith.constant dense<0xFF800000> : vector<2xf32>
      %293 = vector.multi_reduction <maximumf>, %292, %cst_91 [1] : vector<2x128xf32> to vector<2xf32>
      %294 = vector.shape_cast %293 : vector<2xf32> to vector<2x1xf32>
      %295 = vector.broadcast %294 : vector<2x1xf32> to vector<2x128xf32>
      %296 = arith.subf %292, %295 : vector<2x128xf32>
      %297 = math.exp %296 : vector<2x128xf32>
      %cst_92 = arith.constant dense<0.000000e+00> : vector<2xf32>
      %298 = vector.multi_reduction <add>, %297, %cst_92 [1] : vector<2x128xf32> to vector<2xf32>
      %299 = vector.shape_cast %298 : vector<2xf32> to vector<2x1xf32>
      %300 = math.log %299 : vector<2x1xf32>
      %301 = arith.addf %294, %300 : vector<2x1xf32>
      %302 = vector.broadcast %294 : vector<2x1xf32> to vector<2x128xf32>
      %303 = arith.cmpf oeq, %292, %302 : vector<2x128xf32>
      %c128_i32_93 = arith.constant 128 : i32
      %304 = vector.broadcast %c128_i32_93 : i32 to vector<2x128xi32>
      %305 = arith.select %303, %10, %304 : vector<2x128xi1>, vector<2x128xi32>
      %cst_94 = arith.constant dense<2147483647> : vector<2xi32>
      %306 = vector.multi_reduction <minsi>, %305, %cst_94 [1] : vector<2x128xi32> to vector<2xi32>
      %307 = vector.shape_cast %306 : vector<2xi32> to vector<2x1xi32>
      %308 = arith.mulf %292, %115 : vector<2x128xf32>
      %cst_95 = arith.constant dense<0.000000e+00> : vector<2xf32>
      %309 = vector.multi_reduction <add>, %308, %cst_95 [1] : vector<2x128xf32> to vector<2xf32>
      %310 = vector.shape_cast %309 : vector<2xf32> to vector<2x1xf32>
      %311 = arith.subf %310, %301 : vector<2x1xf32>
      %312 = arith.cmpf oge, %311, %116 : vector<2x1xf32>
      %313 = arith.select %312, %111, %307 : vector<2x1xi1>, vector<2x1xi32>
      %314 = vector.broadcast %307 : vector<2x1xi32> to vector<2x128xi32>
      %315 = arith.cmpi eq, %10, %314 : vector<2x128xi32>
      %316 = arith.extui %315 : vector<2x128xi1> to vector<2x128xi32>
      %317 = arith.sitofp %316 : vector<2x128xi32> to vector<2x128xf32>
      %318 = vector.shape_cast %312 : vector<2x1xi1> to vector<2x1xi1>
      %319 = vector.broadcast %318 : vector<2x1xi1> to vector<2x128xi1>
      %320 = arith.select %319, %115, %317 : vector<2x128xi1>, vector<2x128xf32>
      %321 = arith.addf %274, %320 : vector<2x128xf32>
      %c2_i32 = arith.constant 2 : i32
      %322 = vector.broadcast %c2_i32 : i32 to vector<2x5xi32>
      %323 = arith.cmpi eq, %11, %322 : vector<2x5xi32>
      %324 = vector.shape_cast %313 : vector<2x1xi32> to vector<2x1xi32>
      %325 = vector.broadcast %324 : vector<2x1xi32> to vector<2x5xi32>
      %326 = arith.select %323, %325, %279 : vector<2x5xi1>, vector<2x5xi32>
      %cst_96 = arith.constant dense<0.000000e+00> : vector<2x32xf32>
      %327 = tpu.matmul %148, %5, %cst_96 {dimension_numbers = #tpu.dot_dimension_numbers<[1], [0], [0], [1], [0, 0, 1, 1], [], []>} : vector<2x128xf32>, vector<128x32xf32>, vector<2x32xf32> -> vector<2x32xf32>
      %328 = arith.addf %281, %327 : vector<2x32xf32>
      %329 = arith.addf %arg15, %328 : vector<2x32xf32>
      %cst_97 = arith.constant 4.000000e+00 : f32
      %330 = arith.addf %18, %cst_97 : f32
      %331 = vector.broadcast %330 : f32 to vector<2x32xf32>
      %332 = arith.divf %329, %331 : vector<2x32xf32>
      %cst_98 = arith.constant dense<0.000000e+00> : vector<2x32xf32>
      %333 = tpu.matmul %332, %6, %cst_98 {dimension_numbers = #tpu.dot_dimension_numbers<[1], [0], [0], [1], [0, 0, 1, 1], [], []>} : vector<2x32xf32>, vector<32x32xf32>, vector<2x32xf32> -> vector<2x32xf32>
      %334 = vector.broadcast %7 : vector<1x32xf32> to vector<2x32xf32>
      %335 = arith.addf %333, %334 : vector<2x32xf32>
      %336 = math.tanh %335 : vector<2x32xf32>
      %cst_99 = arith.constant dense<0.000000e+00> : vector<2x128xf32>
      %337 = tpu.matmul %336, %8, %cst_99 {dimension_numbers = #tpu.dot_dimension_numbers<[1], [0], [0], [1], [0, 0, 1, 1], [], []>} : vector<2x32xf32>, vector<32x128xf32>, vector<2x128xf32> -> vector<2x128xf32>
      %338 = vector.broadcast %9 : vector<1x128xf32> to vector<2x128xf32>
      %339 = arith.addf %337, %338 : vector<2x128xf32>
      %cst_100 = arith.constant dense<0xFF800000> : vector<2xf32>
      %340 = vector.multi_reduction <maximumf>, %339, %cst_100 [1] : vector<2x128xf32> to vector<2xf32>
      %341 = vector.shape_cast %340 : vector<2xf32> to vector<2x1xf32>
      %342 = vector.broadcast %341 : vector<2x1xf32> to vector<2x128xf32>
      %343 = arith.subf %339, %342 : vector<2x128xf32>
      %344 = math.exp %343 : vector<2x128xf32>
      %cst_101 = arith.constant dense<0.000000e+00> : vector<2xf32>
      %345 = vector.multi_reduction <add>, %344, %cst_101 [1] : vector<2x128xf32> to vector<2xf32>
      %346 = vector.shape_cast %345 : vector<2xf32> to vector<2x1xf32>
      %347 = math.log %346 : vector<2x1xf32>
      %348 = arith.addf %341, %347 : vector<2x1xf32>
      %349 = vector.broadcast %341 : vector<2x1xf32> to vector<2x128xf32>
      %350 = arith.cmpf oeq, %339, %349 : vector<2x128xf32>
      %c128_i32_102 = arith.constant 128 : i32
      %351 = vector.broadcast %c128_i32_102 : i32 to vector<2x128xi32>
      %352 = arith.select %350, %10, %351 : vector<2x128xi1>, vector<2x128xi32>
      %cst_103 = arith.constant dense<2147483647> : vector<2xi32>
      %353 = vector.multi_reduction <minsi>, %352, %cst_103 [1] : vector<2x128xi32> to vector<2xi32>
      %354 = vector.shape_cast %353 : vector<2xi32> to vector<2x1xi32>
      %355 = arith.mulf %339, %148 : vector<2x128xf32>
      %cst_104 = arith.constant dense<0.000000e+00> : vector<2xf32>
      %356 = vector.multi_reduction <add>, %355, %cst_104 [1] : vector<2x128xf32> to vector<2xf32>
      %357 = vector.shape_cast %356 : vector<2xf32> to vector<2x1xf32>
      %358 = arith.subf %357, %348 : vector<2x1xf32>
      %359 = arith.cmpf oge, %358, %149 : vector<2x1xf32>
      %360 = arith.select %359, %144, %354 : vector<2x1xi1>, vector<2x1xi32>
      %361 = vector.broadcast %354 : vector<2x1xi32> to vector<2x128xi32>
      %362 = arith.cmpi eq, %10, %361 : vector<2x128xi32>
      %363 = arith.extui %362 : vector<2x128xi1> to vector<2x128xi32>
      %364 = arith.sitofp %363 : vector<2x128xi32> to vector<2x128xf32>
      %365 = vector.shape_cast %359 : vector<2x1xi1> to vector<2x1xi1>
      %366 = vector.broadcast %365 : vector<2x1xi1> to vector<2x128xi1>
      %367 = arith.select %366, %148, %364 : vector<2x128xi1>, vector<2x128xf32>
      %368 = arith.addf %321, %367 : vector<2x128xf32>
      %c3_i32 = arith.constant 3 : i32
      %369 = vector.broadcast %c3_i32 : i32 to vector<2x5xi32>
      %370 = arith.cmpi eq, %11, %369 : vector<2x5xi32>
      %371 = vector.shape_cast %360 : vector<2x1xi32> to vector<2x1xi32>
      %372 = vector.broadcast %371 : vector<2x1xi32> to vector<2x5xi32>
      %373 = arith.select %370, %372, %326 : vector<2x5xi1>, vector<2x5xi32>
      %cst_105 = arith.constant dense<0.000000e+00> : vector<2x32xf32>
      %374 = tpu.matmul %181, %5, %cst_105 {dimension_numbers = #tpu.dot_dimension_numbers<[1], [0], [0], [1], [0, 0, 1, 1], [], []>} : vector<2x128xf32>, vector<128x32xf32>, vector<2x32xf32> -> vector<2x32xf32>
      %375 = arith.addf %328, %374 : vector<2x32xf32>
      %376 = arith.addf %arg15, %375 : vector<2x32xf32>
      %cst_106 = arith.constant 5.000000e+00 : f32
      %377 = arith.addf %18, %cst_106 : f32
      %378 = vector.broadcast %377 : f32 to vector<2x32xf32>
      %379 = arith.divf %376, %378 : vector<2x32xf32>
      %cst_107 = arith.constant dense<0.000000e+00> : vector<2x32xf32>
      %380 = tpu.matmul %379, %6, %cst_107 {dimension_numbers = #tpu.dot_dimension_numbers<[1], [0], [0], [1], [0, 0, 1, 1], [], []>} : vector<2x32xf32>, vector<32x32xf32>, vector<2x32xf32> -> vector<2x32xf32>
      %381 = vector.broadcast %7 : vector<1x32xf32> to vector<2x32xf32>
      %382 = arith.addf %380, %381 : vector<2x32xf32>
      %383 = math.tanh %382 : vector<2x32xf32>
      %cst_108 = arith.constant dense<0.000000e+00> : vector<2x128xf32>
      %384 = tpu.matmul %383, %8, %cst_108 {dimension_numbers = #tpu.dot_dimension_numbers<[1], [0], [0], [1], [0, 0, 1, 1], [], []>} : vector<2x32xf32>, vector<32x128xf32>, vector<2x128xf32> -> vector<2x128xf32>
      %385 = vector.broadcast %9 : vector<1x128xf32> to vector<2x128xf32>
      %386 = arith.addf %384, %385 : vector<2x128xf32>
      %cst_109 = arith.constant dense<0xFF800000> : vector<2xf32>
      %387 = vector.multi_reduction <maximumf>, %386, %cst_109 [1] : vector<2x128xf32> to vector<2xf32>
      %388 = vector.shape_cast %387 : vector<2xf32> to vector<2x1xf32>
      %389 = vector.broadcast %388 : vector<2x1xf32> to vector<2x128xf32>
      %390 = arith.subf %386, %389 : vector<2x128xf32>
      %391 = math.exp %390 : vector<2x128xf32>
      %cst_110 = arith.constant dense<0.000000e+00> : vector<2xf32>
      %392 = vector.multi_reduction <add>, %391, %cst_110 [1] : vector<2x128xf32> to vector<2xf32>
      %393 = vector.shape_cast %392 : vector<2xf32> to vector<2x1xf32>
      %394 = math.log %393 : vector<2x1xf32>
      %395 = arith.addf %388, %394 : vector<2x1xf32>
      %396 = vector.broadcast %388 : vector<2x1xf32> to vector<2x128xf32>
      %397 = arith.cmpf oeq, %386, %396 : vector<2x128xf32>
      %c128_i32_111 = arith.constant 128 : i32
      %398 = vector.broadcast %c128_i32_111 : i32 to vector<2x128xi32>
      %399 = arith.select %397, %10, %398 : vector<2x128xi1>, vector<2x128xi32>
      %cst_112 = arith.constant dense<2147483647> : vector<2xi32>
      %400 = vector.multi_reduction <minsi>, %399, %cst_112 [1] : vector<2x128xi32> to vector<2xi32>
      %401 = vector.shape_cast %400 : vector<2xi32> to vector<2x1xi32>
      %402 = arith.mulf %386, %181 : vector<2x128xf32>
      %cst_113 = arith.constant dense<0.000000e+00> : vector<2xf32>
      %403 = vector.multi_reduction <add>, %402, %cst_113 [1] : vector<2x128xf32> to vector<2xf32>
      %404 = vector.shape_cast %403 : vector<2xf32> to vector<2x1xf32>
      %405 = arith.subf %404, %395 : vector<2x1xf32>
      %406 = arith.cmpf oge, %405, %182 : vector<2x1xf32>
      %407 = arith.select %406, %177, %401 : vector<2x1xi1>, vector<2x1xi32>
      %408 = vector.broadcast %401 : vector<2x1xi32> to vector<2x128xi32>
      %409 = arith.cmpi eq, %10, %408 : vector<2x128xi32>
      %410 = arith.extui %409 : vector<2x128xi1> to vector<2x128xi32>
      %411 = arith.sitofp %410 : vector<2x128xi32> to vector<2x128xf32>
      %412 = vector.shape_cast %406 : vector<2x1xi1> to vector<2x1xi1>
      %413 = vector.broadcast %412 : vector<2x1xi1> to vector<2x128xi1>
      %414 = arith.select %413, %181, %411 : vector<2x128xi1>, vector<2x128xf32>
      %415 = arith.addf %368, %414 : vector<2x128xf32>
      %c4_i32 = arith.constant 4 : i32
      %416 = vector.broadcast %c4_i32 : i32 to vector<2x5xi32>
      %417 = arith.cmpi eq, %11, %416 : vector<2x5xi32>
      %418 = vector.shape_cast %407 : vector<2x1xi32> to vector<2x1xi32>
      %419 = vector.broadcast %418 : vector<2x1xi32> to vector<2x5xi32>
      %420 = arith.select %417, %419, %373 : vector<2x5xi1>, vector<2x5xi32>
      %421 = arith.index_cast %arg13 : i32 to index
      %c0_114 = arith.constant 0 : index
      %c0_115 = arith.constant 0 : index
      %422 = vector.load %arg12[%421, %c0_114, %c0_115] : memref<10x2x5xi32, #tpu.memory_space<vmem>>, vector<1x2x5xi32>
      %423 = vector.shape_cast %422 : vector<1x2x5xi32> to vector<2x5xi32>
      %424 = vector.shape_cast %420 : vector<2x5xi32> to vector<1x2x5xi32>
      tpu.vector_store %arg12[%421, %c0_114, %c0_115], %424 {strides = array<i32>} : memref<10x2x5xi32, #tpu.memory_space<vmem>>, vector<1x2x5xi32>,
      %cst_116 = arith.constant dense<0.000000e+00> : vector<2x32xf32>
      %425 = tpu.matmul %415, %0, %cst_116 {dimension_numbers = #tpu.dot_dimension_numbers<[1], [0], [0], [1], [0, 0, 1, 1], [], []>} : vector<2x128xf32>, vector<128x32xf32>, vector<2x32xf32> -> vector<2x32xf32>
      %426 = arith.addf %arg14, %425 : vector<2x32xf32>
      %cst_117 = arith.constant dense<0.000000e+00> : vector<2x32xf32>
      %427 = tpu.matmul %415, %5, %cst_117 {dimension_numbers = #tpu.dot_dimension_numbers<[1], [0], [0], [1], [0, 0, 1, 1], [], []>} : vector<2x128xf32>, vector<128x32xf32>, vector<2x32xf32> -> vector<2x32xf32>
      %428 = arith.addf %arg15, %427 : vector<2x32xf32>
      scf.yield %426, %428 : vector<2x32xf32>, vector<2x32xf32>
    }
    %c10_i32_23 = arith.constant 10 : i32
    return
  }
}

</mosaic_0001>

<llo_original>
// kernel: speculative_forward.1
$region0: #{speculative_forward.1}
  #allocation0 [shape = 'u32[]', space=smem, size = 0x4, offset = 0x4, fixed_abs, tag = 'smem constant byte address 0x4 - core index']
  #allocation1 [shape = 'u32[144,128]{1,0:T(1,128)}', space=vmem, size = 0x12000, scoped, tag = 'internal scratch']
  %s0 = inlined_call_operand.vmem [shape: f32[2,32], index: 0, kind: input, shape index: {}]
  %s1 = inlined_call_operand.vmem [shape: f32[2,32], index: 1, kind: input, shape index: {}]
  %s2 = inlined_call_operand.vmem [shape: f32[128,32], index: 2, kind: input, shape index: {}]
  %s3 = inlined_call_operand.vmem [shape: f32[32,32], index: 3, kind: input, shape index: {}]
  %s4 = inlined_call_operand.vmem [shape: f32[1,32], index: 4, kind: input, shape index: {}]
  %s5 = inlined_call_operand.vmem [shape: f32[32,128], index: 5, kind: input, shape index: {}]
  %s6 = inlined_call_operand.vmem [shape: f32[1,128], index: 6, kind: input, shape index: {}]
  %s7 = inlined_call_operand.vmem [shape: f32[128,32], index: 7, kind: input, shape index: {}]
  %s8 = inlined_call_operand.vmem [shape: f32[32,32], index: 8, kind: input, shape index: {}]
  %s9 = inlined_call_operand.vmem [shape: f32[1,32], index: 9, kind: input, shape index: {}]
  %s10 = inlined_call_operand.vmem [shape: f32[32,128], index: 10, kind: input, shape index: {}]
  %s11 = inlined_call_operand.vmem [shape: f32[1,128], index: 11, kind: input, shape index: {}]
  %s12 = inlined_call_operand.vmem [shape: s32[10,2,5], index: 12, kind: output, shape index: {}]
  %s13 = sld [smem:[#allocation0]]
  $region65: #{speculative_forward.1} parent=0
    _
  %s15 = ssub.s32 1, %s13
  %s16 = scalar_select 0, %s15, %s13
  // Predicated region
  $region2: #{speculative_forward.1} parent=0 // pred_check
    _
  $region3: #{speculative_forward.1} parent=0 // pred_check_branch
    %18 = sbr.rel (0) target = $region5
  $region4: #{speculative_forward.1} parent=0 // pred_region
    _
  $region5: #{speculative_forward.1} parent=0 // pred_fallthru
    _
  // Predicated region
  $region6: #{speculative_forward.1} parent=0 // pred_check
    _
  $region7: #{speculative_forward.1} parent=0 // pred_check_branch
    %20 = sbr.rel (0) target = $region9
  $region8: #{speculative_forward.1} parent=0 // pred_region
    _
  $region9: #{speculative_forward.1} parent=0 // pred_fallthru
    _
  // Predicated region
  $region10: #{speculative_forward.1} parent=0 // pred_check
    _
  $region11: #{speculative_forward.1} parent=0 // pred_check_branch
    %22 = sbr.rel (0) target = $region13
  $region12: #{speculative_forward.1} parent=0 // pred_region
    _
  $region13: #{speculative_forward.1} parent=0 // pred_fallthru
    _
  // Predicated region
  $region14: #{speculative_forward.1} parent=0 // pred_check
    _
  $region15: #{speculative_forward.1} parent=0 // pred_check_branch
    %24 = sbr.rel (0) target = $region17
  $region16: #{speculative_forward.1} parent=0 // pred_region
    _
  $region17: #{speculative_forward.1} parent=0 // pred_fallthru
    _
  // Predicated region
  $region18: #{speculative_forward.1} parent=0 // pred_check
    _
  $region19: #{speculative_forward.1} parent=0 // pred_check_branch
    %26 = sbr.rel (0) target = $region21
  $region20: #{speculative_forward.1} parent=0 // pred_region
    _
  $region21: #{speculative_forward.1} parent=0 // pred_fallthru
    _
  // Predicated region
  $region22: #{speculative_forward.1} parent=0 // pred_check
    _
  $region23: #{speculative_forward.1} parent=0 // pred_check_branch
    %28 = sbr.rel (0) target = $region25
  $region24: #{speculative_forward.1} parent=0 // pred_region
    _
  $region25: #{speculative_forward.1} parent=0 // pred_fallthru
    _
  // Predicated region
  $region26: #{speculative_forward.1} parent=0 // pred_check
    _
  $region27: #{speculative_forward.1} parent=0 // pred_check_branch
    %30 = sbr.rel (0) target = $region29
  $region28: #{speculative_forward.1} parent=0 // pred_region
    _
  $region29: #{speculative_forward.1} parent=0 // pred_fallthru
    _
  // Predicated region
  $region30: #{speculative_forward.1} parent=0 // pred_check
    _
  $region31: #{speculative_forward.1} parent=0 // pred_check_branch
    %32 = sbr.rel (0) target = $region33
  $region32: #{speculative_forward.1} parent=0 // pred_region
    _
  $region33: #{speculative_forward.1} parent=0 // pred_fallthru
    _
  // Predicated region
  $region34: #{speculative_forward.1} parent=0 // pred_check
    _
  $region35: #{speculative_forward.1} parent=0 // pred_check_branch
    %34 = sbr.rel (0) target = $region37
  $region36: #{speculative_forward.1} parent=0 // pred_region
    _
  $region37: #{speculative_forward.1} parent=0 // pred_fallthru
    _
  // Predicated region
  $region38: #{speculative_forward.1} parent=0 // pred_check
    _
  $region39: #{speculative_forward.1} parent=0 // pred_check_branch
    %36 = sbr.rel (0) target = $region41
  $region40: #{speculative_forward.1} parent=0 // pred_region
    _
  $region41: #{speculative_forward.1} parent=0 // pred_fallthru
    _
  // Predicated region
  $region42: #{speculative_forward.1} parent=0 // pred_check
    _
  $region43: #{speculative_forward.1} parent=0 // pred_check_branch
    %38 = sbr.rel (0) target = $region45
  $region44: #{speculative_forward.1} parent=0 // pred_region
    _
  $region45: #{speculative_forward.1} parent=0 // pred_fallthru
    _
  // Predicated region
  $region46: #{speculative_forward.1} parent=0 // pred_check
    _
  $region47: #{speculative_forward.1} parent=0 // pred_check_branch
    %40 = sbr.rel (0) target = $region49
  $region48: #{speculative_forward.1} parent=0 // pred_region
    _
  $region49: #{speculative_forward.1} parent=0 // pred_fallthru
    _
  %v41 = vld [vmem:[%s2] sm:$0xff]
  %v42 = vld [vmem:[%s2 + $0x8] sm:$0xff]
  %v43 = vld [vmem:[%s2 + $0x10] sm:$0xff]
  %v44 = vld [vmem:[%s2 + $0x18] sm:$0xff]
  %v45 = vld [vmem:[%s2 + $0x20] sm:$0xff]
  %v46 = vld [vmem:[%s2 + $0x28] sm:$0xff]
  %v47 = vld [vmem:[%s2 + $0x30] sm:$0xff]
  %v48 = vld [vmem:[%s2 + $0x38] sm:$0xff]
  %v49 = vld [vmem:[%s2 + $0x40] sm:$0xff]
  %v50 = vld [vmem:[%s2 + $0x48] sm:$0xff]
  %v51 = vld [vmem:[%s2 + $0x50] sm:$0xff]
  %v52 = vld [vmem:[%s2 + $0x58] sm:$0xff]
  %v53 = vld [vmem:[%s2 + $0x60] sm:$0xff]
  %v54 = vld [vmem:[%s2 + $0x68] sm:$0xff]
  %v55 = vld [vmem:[%s2 + $0x70] sm:$0xff]
  %v56 = vld [vmem:[%s2 + $0x78] sm:$0xff]
  %v57 = vld [vmem:[%s3] sm:$0xff]
  %v58 = vld [vmem:[%s3 + $0x8] sm:$0xff]
  %v59 = vld [vmem:[%s3 + $0x10] sm:$0xff]
  %v60 = vld [vmem:[%s3 + $0x18] sm:$0xff]
  %v61 = vld [vmem:[%s4] sm:$0x1]
  %v62 = vld [vmem:[%s5] sm:$0xff]
  %v63 = vld [vmem:[%s5 + $0x8] sm:$0xff]
  %v64 = vld [vmem:[%s5 + $0x10] sm:$0xff]
  %v65 = vld [vmem:[%s5 + $0x18] sm:$0xff]
  %v66 = vld [vmem:[%s6] sm:$0x1]
  %v67 = vld [vmem:[%s7] sm:$0xff]
  %v68 = vld [vmem:[%s7 + $0x8] sm:$0xff]
  %v69 = vld [vmem:[%s7 + $0x10] sm:$0xff]
  %v70 = vld [vmem:[%s7 + $0x18] sm:$0xff]
  %v71 = vld [vmem:[%s7 + $0x20] sm:$0xff]
  %v72 = vld [vmem:[%s7 + $0x28] sm:$0xff]
  %v73 = vld [vmem:[%s7 + $0x30] sm:$0xff]
  %v74 = vld [vmem:[%s7 + $0x38] sm:$0xff]
  %v75 = vld [vmem:[%s7 + $0x40] sm:$0xff]
  %v76 = vld [vmem:[%s7 + $0x48] sm:$0xff]
  %v77 = vld [vmem:[%s7 + $0x50] sm:$0xff]
  %v78 = vld [vmem:[%s7 + $0x58] sm:$0xff]
  %v79 = vld [vmem:[%s7 + $0x60] sm:$0xff]
  %v80 = vld [vmem:[%s7 + $0x68] sm:$0xff]
  %v81 = vld [vmem:[%s7 + $0x70] sm:$0xff]
  %v82 = vld [vmem:[%s7 + $0x78] sm:$0xff]
  %v83 = vld [vmem:[%s8] sm:$0xff]
  %v84 = vld [vmem:[%s8 + $0x8] sm:$0xff]
  %v85 = vld [vmem:[%s8 + $0x10] sm:$0xff]
  %v86 = vld [vmem:[%s8 + $0x18] sm:$0xff]
  %v87 = vld [vmem:[%s9] sm:$0x1]
  %v88 = vld [vmem:[%s10] sm:$0xff]
  %v89 = vld [vmem:[%s10 + $0x8] sm:$0xff]
  %v90 = vld [vmem:[%s10 + $0x10] sm:$0xff]
  %v91 = vld [vmem:[%s10 + $0x18] sm:$0xff]
  %v92 = vld [vmem:[%s11] sm:$0x1]
  %v93 = vlaneseq
  %v94 = vand.u32 %v93, 127
  %v95 = vld [vmem:[%s0] sm:$0x3]
  %v96 = vld [vmem:[%s1] sm:$0x3]
  loop: start=0, step=1, limit=10
  $region50: #{speculative_forward.1} parent=0 // loop_pre_header
    _
  $region51: #{speculative_forward.1} parent=0 // loop_header
    %s98 = sphi 0, %s102
    %p99 = scmp.ge.s32.totalorder %s98, 10
    %v103 = vphi %v95, %v2743
    %v104 = vphi %v96, %v2814
  $region52: #{speculative_forward.1} parent=0 // loop_header_branch
    %101 = sbr.rel (%p99) target = $region56
  $region53: #{speculative_forward.1} parent=0 // loop_body
    %s105 = scvt.s32.f32 %s98
    %s106 = smul.f32 %s105, 5.0
    %s107 = sadd.f32 %s106, 8.0
    %v108 = vadd.f32 %v103, 0.0
    %s109 = sadd.f32 %s107, 0.0
    %v110 = vstv %s109
    %v111 = vrcp.pop %v110
    %v112 = vmul.f32 %v108, %v111
    %v114 = vlaneseq
    %v115 = vshrl.u32 %v114, 7
    %v116 = vsub.s32 0, %v115
    %v117 = vrot.slane %v61, %v116
    %vm119 = vcmask 261120
    %v121 = vsel %vm119, %v112, 0
    %123 = vmatprep.subr.mxu0 0.0
    %124 = vmatpush1.msra.mxu0 0.0
    %125 = vmatprep.subr.mxu0 0.0
    %126 = vmatpush1.msra.mxu0 0.0
    %127 = vmatprep.subr.mxu0 0.0
    %128 = vmatpush1.msra.mxu0 0.0
    %129 = vmatprep.subr.mxu0 0.0
    %130 = vmatpush1.msra.mxu0 0.0
    %131 = vmatprep.subr.mxu0 0.0
    %132 = vmatpush1.msra.mxu0 0.0
    %133 = vmatprep.subr.mxu0 0.0
    %134 = vmatpush1.msra.mxu0 0.0
    %135 = vmatprep.subr.mxu0 0.0
    %136 = vmatpush1.msra.mxu0 0.0
    %137 = vmatprep.subr.mxu0 0.0
    %138 = vmatpush1.msra.mxu0 0.0
    %139 = vmatprep.subr.mxu0 0.0
    %140 = vmatpush1.msra.mxu0 0.0
    %141 = vmatprep.subr.mxu0 0.0
    %142 = vmatpush1.msra.mxu0 0.0
    %143 = vmatprep.subr.mxu0 0.0
    %144 = vmatpush1.msra.mxu0 0.0
    %145 = vmatprep.subr.mxu0 0.0
    %146 = vmatpush1.msra.mxu0 0.0
    %147 = vmatprep.subr.mxu0 0.0
    %148 = vmatpush1.msra.mxu0 %v60
    %149 = vmatprep.subr.mxu0 0.0
    %150 = vmatpush1.msra.mxu0 %v59
    %151 = vmatprep.subr.mxu0 0.0
    %152 = vmatpush1.msra.mxu0 %v58
    %153 = vmatprep.subr.mxu0 0.0
    %154 = vmatpush1.msra.mxu0 %v57
    %155 = vmatprep.subr.mxu0 0.0
    %156 = vmatpush2.msra.mxu0 0.0
    %157 = vmatprep.subr.mxu0 0.0
    %158 = vmatpush2.msra.mxu0 0.0
    %159 = vmatprep.subr.mxu0 0.0
    %160 = vmatpush2.msra.mxu0 0.0
    %161 = vmatprep.subr.mxu0 0.0
    %162 = vmatpush2.msra.mxu0 0.0
    %163 = vmatprep.subr.mxu0 0.0
    %164 = vmatpush2.msra.mxu0 0.0
    %165 = vmatprep.subr.mxu0 0.0
    %166 = vmatpush2.msra.mxu0 0.0
    %167 = vmatprep.subr.mxu0 0.0
    %168 = vmatpush2.msra.mxu0 0.0
    %169 = vmatprep.subr.mxu0 0.0
    %170 = vmatpush2.msra.mxu0 0.0
    %171 = vmatprep.subr.mxu0 0.0
    %172 = vmatpush2.msra.mxu0 0.0
    %173 = vmatprep.subr.mxu0 0.0
    %174 = vmatpush2.msra.mxu0 0.0
    %175 = vmatprep.subr.mxu0 0.0
    %176 = vmatpush2.msra.mxu0 0.0
    %177 = vmatprep.subr.mxu0 0.0
    %178 = vmatpush2.msra.mxu0 0.0
    %179 = vmatprep.subr.mxu0 0.0
    %180 = vmatpush2.msra.mxu0 0.0
    %181 = vmatprep.subr.mxu0 0.0
    %182 = vmatpush2.msra.mxu0 0.0
    %183 = vmatprep.subr.mxu0 0.0
    %184 = vmatpush2.msra.mxu0 0.0
    %185 = vmatprep.subr.mxu0 0.0
    %186 = vmatpush2.msra.mxu0 0.0
    %187 = vmatprep.mubr.f32.mxu0 0.0
    %188 = vmatmul.mubr.f32.gmra.mxu0 %v121
    %v189 = vpop.f32.mrf.mxu0
    %v190 = vadd.f32 %v117, %v189
    %v191 = vpop.f32.mrf.mxu0
    %192 = vdwg.mxu0
    %v193 = vtanh.pop %v190
    %v195 = vlaneseq
    %v196 = vshrl.u32 %v195, 7
    %v197 = vsub.s32 0, %v196
    %v198 = vrot.slane %v66, %v197
    %v201 = vsel %vm119, %v193, 0
    %203 = vmatprep.subr.mxu0 0.0
    %204 = vmatpush1.msra.mxu0 0.0
    %205 = vmatprep.subr.mxu0 0.0
    %206 = vmatpush1.msra.mxu0 0.0
    %207 = vmatprep.subr.mxu0 0.0
    %208 = vmatpush1.msra.mxu0 0.0
    %209 = vmatprep.subr.mxu0 0.0
    %210 = vmatpush1.msra.mxu0 0.0
    %211 = vmatprep.subr.mxu0 0.0
    %212 = vmatpush1.msra.mxu0 0.0
    %213 = vmatprep.subr.mxu0 0.0
    %214 = vmatpush1.msra.mxu0 0.0
    %215 = vmatprep.subr.mxu0 0.0
    %216 = vmatpush1.msra.mxu0 0.0
    %217 = vmatprep.subr.mxu0 0.0
    %218 = vmatpush1.msra.mxu0 0.0
    %219 = vmatprep.subr.mxu0 0.0
    %220 = vmatpush1.msra.mxu0 0.0
    %221 = vmatprep.subr.mxu0 0.0
    %222 = vmatpush1.msra.mxu0 0.0
    %223 = vmatprep.subr.mxu0 0.0
    %224 = vmatpush1.msra.mxu0 0.0
    %225 = vmatprep.subr.mxu0 0.0
    %226 = vmatpush1.msra.mxu0 0.0
    %227 = vmatprep.subr.mxu0 0.0
    %228 = vmatpush1.msra.mxu0 %v65
    %229 = vmatprep.subr.mxu0 0.0
    %230 = vmatpush1.msra.mxu0 %v64
    %231 = vmatprep.subr.mxu0 0.0
    %232 = vmatpush1.msra.mxu0 %v63
    %233 = vmatprep.subr.mxu0 0.0
    %234 = vmatpush1.msra.mxu0 %v62
    %235 = vmatprep.subr.mxu0 0.0
    %236 = vmatpush2.msra.mxu0 0.0
    %237 = vmatprep.subr.mxu0 0.0
    %238 = vmatpush2.msra.mxu0 0.0
    %239 = vmatprep.subr.mxu0 0.0
    %240 = vmatpush2.msra.mxu0 0.0
    %241 = vmatprep.subr.mxu0 0.0
    %242 = vmatpush2.msra.mxu0 0.0
    %243 = vmatprep.subr.mxu0 0.0
    %244 = vmatpush2.msra.mxu0 0.0
    %245 = vmatprep.subr.mxu0 0.0
    %246 = vmatpush2.msra.mxu0 0.0
    %247 = vmatprep.subr.mxu0 0.0
    %248 = vmatpush2.msra.mxu0 0.0
    %249 = vmatprep.subr.mxu0 0.0
    %250 = vmatpush2.msra.mxu0 0.0
    %251 = vmatprep.subr.mxu0 0.0
    %252 = vmatpush2.msra.mxu0 0.0
    %253 = vmatprep.subr.mxu0 0.0
    %254 = vmatpush2.msra.mxu0 0.0
    %255 = vmatprep.subr.mxu0 0.0
    %256 = vmatpush2.msra.mxu0 0.0
    %257 = vmatprep.subr.mxu0 0.0
    %258 = vmatpush2.msra.mxu0 0.0
    %259 = vmatprep.subr.mxu0 0.0
    %260 = vmatpush2.msra.mxu0 0.0
    %261 = vmatprep.subr.mxu0 0.0
    %262 = vmatpush2.msra.mxu0 0.0
    %263 = vmatprep.subr.mxu0 0.0
    %264 = vmatpush2.msra.mxu0 0.0
    %265 = vmatprep.subr.mxu0 0.0
    %266 = vmatpush2.msra.mxu0 0.0
    %267 = vmatprep.mubr.f32.mxu0 0.0
    %268 = vmatmul.mubr.f32.gmra.mxu0 %v201
    %v269 = vpop.f32.mrf.mxu0
    %v270 = vadd.f32 %v198, %v269
    %v271 = vpop.f32.mrf.mxu0
    %272 = vdwg.mxu0
    %vm273 = vcmask 1041408
    %v274 = vsel %vm273, %v270, -inf
    %275 = vmax.xlane.f32.xlu0 %v274
    %v276 = vpop.xlane.xlu0 %275
    %v277 = vsub.f32 %v270, %v276
    %v278 = vmul.f32 %v277, 1.442695
    %v279 = vpow.pop %v278
    %v280 = vsel %vm273, %v279, 0.0
    %281 = vadd.xlane.f32.xlu0 %v280
    %v282 = vpop.xlane.xlu0 %281
    %v283 = vlog2.pop %v282
    %v284 = vmul.f32 %v283, 0.6931472
    %v285 = vadd.f32 %v276, %v284
    %vm286 = vcmp.eq.f32.partialorder %v270, %v276
    %v287 = vsel %vm286, %v94, 128
    %v288 = vsel %vm273, %v287, 2147483647
    %v289 = vand.u32 %v288, 65535
    %v290 = vshra.s32 %v288, 16
    %v291 = vcvt.s32.f32 %v289
    %v292 = vcvt.s32.f32 %v290
    %293 = vmin.xlane.f32.xlu0 %v292
    %v294 = vpop.xlane.xlu0 %293
    %vm295 = vcmp.eq.f32.partialorder %v292, %v294
    %v296 = vsel %vm295, %v291, inf
    %297 = vmin.xlane.f32.xlu0 %v296
    %v298 = vpop.xlane.xlu0 %297
    %v299 = vcvt.f32.s32 %v298
    %v300 = vcvt.f32.s32 %v294
    %v301 = vshll.u32 %v300, 16
    %v302 = vadd.s32 %v301, %v299
    %vm303 = vcmp.eq.s32.totalorder %v94, %v302
    %v304 = vsel %vm303, 1, 0
    %v305 = vcvt.s32.f32 %v304
    %v306 = vsub.f32 %v276, %v285
    %307 = vmatprep.subr.mxu0 0.0
    %308 = vmatpush1.msra.mxu0 %v56
    %309 = vmatprep.subr.mxu0 0.0
    %310 = vmatpush1.msra.mxu0 %v55
    %311 = vmatprep.subr.mxu0 0.0
    %312 = vmatpush1.msra.mxu0 %v54
    %313 = vmatprep.subr.mxu0 0.0
    %314 = vmatpush1.msra.mxu0 %v53
    %315 = vmatprep.subr.mxu0 0.0
    %316 = vmatpush1.msra.mxu0 %v52
    %317 = vmatprep.subr.mxu0 0.0
    %318 = vmatpush1.msra.mxu0 %v51
    %319 = vmatprep.subr.mxu0 0.0
    %320 = vmatpush1.msra.mxu0 %v50
    %321 = vmatprep.subr.mxu0 0.0
    %322 = vmatpush1.msra.mxu0 %v49
    %323 = vmatprep.subr.mxu0 0.0
    %324 = vmatpush1.msra.mxu0 %v48
    %325 = vmatprep.subr.mxu0 0.0
    %326 = vmatpush1.msra.mxu0 %v47
    %327 = vmatprep.subr.mxu0 0.0
    %328 = vmatpush1.msra.mxu0 %v46
    %329 = vmatprep.subr.mxu0 0.0
    %330 = vmatpush1.msra.mxu0 %v45
    %331 = vmatprep.subr.mxu0 0.0
    %332 = vmatpush1.msra.mxu0 %v44
    %333 = vmatprep.subr.mxu0 0.0
    %334 = vmatpush1.msra.mxu0 %v43
    %335 = vmatprep.subr.mxu0 0.0
    %336 = vmatpush1.msra.mxu0 %v42
    %337 = vmatprep.subr.mxu0 0.0
    %338 = vmatpush1.msra.mxu0 %v41
    %339 = vmatprep.subr.mxu0 0.0
    %340 = vmatpush2.msra.mxu0 0.0
    %341 = vmatprep.subr.mxu0 0.0
    %342 = vmatpush2.msra.mxu0 0.0
    %343 = vmatprep.subr.mxu0 0.0
    %344 = vmatpush2.msra.mxu0 0.0
    %345 = vmatprep.subr.mxu0 0.0
    %346 = vmatpush2.msra.mxu0 0.0
    %347 = vmatprep.subr.mxu0 0.0
    %348 = vmatpush2.msra.mxu0 0.0
    %349 = vmatprep.subr.mxu0 0.0
    %350 = vmatpush2.msra.mxu0 0.0
    %351 = vmatprep.subr.mxu0 0.0
    %352 = vmatpush2.msra.mxu0 0.0
    %353 = vmatprep.subr.mxu0 0.0
    %354 = vmatpush2.msra.mxu0 0.0
    %355 = vmatprep.subr.mxu0 0.0
    %356 = vmatpush2.msra.mxu0 0.0
    %357 = vmatprep.subr.mxu0 0.0
    %358 = vmatpush2.msra.mxu0 0.0
    %359 = vmatprep.subr.mxu0 0.0
    %360 = vmatpush2.msra.mxu0 0.0
    %361 = vmatprep.subr.mxu0 0.0
    %362 = vmatpush2.msra.mxu0 0.0
    %363 = vmatprep.subr.mxu0 0.0
    %364 = vmatpush2.msra.mxu0 0.0
    %365 = vmatprep.subr.mxu0 0.0
    %366 = vmatpush2.msra.mxu0 0.0
    %367 = vmatprep.subr.mxu0 0.0
    %368 = vmatpush2.msra.mxu0 0.0
    %369 = vmatprep.subr.mxu0 0.0
    %370 = vmatpush2.msra.mxu0 0.0
    %371 = vmatprep.mubr.f32.mxu0 0.0
    %372 = vmatmul.mubr.f32.gmra.mxu0 %v305
    %v373 = vpop.f32.mrf.mxu0
    %v374 = vadd.f32 0.0, %v373
    %v375 = vpop.f32.mrf.mxu0
    %376 = vdwg.mxu0
    %v377 = vadd.f32 %v103, %v374
    %s378 = sadd.f32 %s107, 1.0
    %v379 = vstv %s378
    %v380 = vrcp.pop %v379
    %v381 = vmul.f32 %v377, %v380
    %v383 = vsel %vm119, %v381, 0
    %385 = vmatprep.subr.mxu0 0.0
    %386 = vmatpush1.msra.mxu0 0.0
    %387 = vmatprep.subr.mxu0 0.0
    %388 = vmatpush1.msra.mxu0 0.0
    %389 = vmatprep.subr.mxu0 0.0
    %390 = vmatpush1.msra.mxu0 0.0
    %391 = vmatprep.subr.mxu0 0.0
    %392 = vmatpush1.msra.mxu0 0.0
    %393 = vmatprep.subr.mxu0 0.0
    %394 = vmatpush1.msra.mxu0 0.0
    %395 = vmatprep.subr.mxu0 0.0
    %396 = vmatpush1.msra.mxu0 0.0
    %397 = vmatprep.subr.mxu0 0.0
    %398 = vmatpush1.msra.mxu0 0.0
    %399 = vmatprep.subr.mxu0 0.0
    %400 = vmatpush1.msra.mxu0 0.0
    %401 = vmatprep.subr.mxu0 0.0
    %402 = vmatpush1.msra.mxu0 0.0
    %403 = vmatprep.subr.mxu0 0.0
    %404 = vmatpush1.msra.mxu0 0.0
    %405 = vmatprep.subr.mxu0 0.0
    %406 = vmatpush1.msra.mxu0 0.0
    %407 = vmatprep.subr.mxu0 0.0
    %408 = vmatpush1.msra.mxu0 0.0
    %409 = vmatprep.subr.mxu0 0.0
    %410 = vmatpush1.msra.mxu0 %v60
    %411 = vmatprep.subr.mxu0 0.0
    %412 = vmatpush1.msra.mxu0 %v59
    %413 = vmatprep.subr.mxu0 0.0
    %414 = vmatpush1.msra.mxu0 %v58
    %415 = vmatprep.subr.mxu0 0.0
    %416 = vmatpush1.msra.mxu0 %v57
    %417 = vmatprep.subr.mxu0 0.0
    %418 = vmatpush2.msra.mxu0 0.0
    %419 = vmatprep.subr.mxu0 0.0
    %420 = vmatpush2.msra.mxu0 0.0
    %421 = vmatprep.subr.mxu0 0.0
    %422 = vmatpush2.msra.mxu0 0.0
    %423 = vmatprep.subr.mxu0 0.0
    %424 = vmatpush2.msra.mxu0 0.0
    %425 = vmatprep.subr.mxu0 0.0
    %426 = vmatpush2.msra.mxu0 0.0
    %427 = vmatprep.subr.mxu0 0.0
    %428 = vmatpush2.msra.mxu0 0.0
    %429 = vmatprep.subr.mxu0 0.0
    %430 = vmatpush2.msra.mxu0 0.0
    %431 = vmatprep.subr.mxu0 0.0
    %432 = vmatpush2.msra.mxu0 0.0
    %433 = vmatprep.subr.mxu0 0.0
    %434 = vmatpush2.msra.mxu0 0.0
    %435 = vmatprep.subr.mxu0 0.0
    %436 = vmatpush2.msra.mxu0 0.0
    %437 = vmatprep.subr.mxu0 0.0
    %438 = vmatpush2.msra.mxu0 0.0
    %439 = vmatprep.subr.mxu0 0.0
    %440 = vmatpush2.msra.mxu0 0.0
    %441 = vmatprep.subr.mxu0 0.0
    %442 = vmatpush2.msra.mxu0 0.0
    %443 = vmatprep.subr.mxu0 0.0
    %444 = vmatpush2.msra.mxu0 0.0
    %445 = vmatprep.subr.mxu0 0.0
    %446 = vmatpush2.msra.mxu0 0.0
    %447 = vmatprep.subr.mxu0 0.0
    %448 = vmatpush2.msra.mxu0 0.0
    %449 = vmatprep.mubr.f32.mxu0 0.0
    %450 = vmatmul.mubr.f32.gmra.mxu0 %v383
    %v451 = vpop.f32.mrf.mxu0
    %v452 = vadd.f32 %v117, %v451
    %v453 = vpop.f32.mrf.mxu0
    %454 = vdwg.mxu0
    %v455 = vtanh.pop %v452
    %v457 = vsel %vm119, %v455, 0
    %459 = vmatprep.subr.mxu0 0.0
    %460 = vmatpush1.msra.mxu0 0.0
    %461 = vmatprep.subr.mxu0 0.0
    %462 = vmatpush1.msra.mxu0 0.0
    %463 = vmatprep.subr.mxu0 0.0
    %464 = vmatpush1.msra.mxu0 0.0
    %465 = vmatprep.subr.mxu0 0.0
    %466 = vmatpush1.msra.mxu0 0.0
    %467 = vmatprep.subr.mxu0 0.0
    %468 = vmatpush1.msra.mxu0 0.0
    %469 = vmatprep.subr.mxu0 0.0
    %470 = vmatpush1.msra.mxu0 0.0
    %471 = vmatprep.subr.mxu0 0.0
    %472 = vmatpush1.msra.mxu0 0.0
    %473 = vmatprep.subr.mxu0 0.0
    %474 = vmatpush1.msra.mxu0 0.0
    %475 = vmatprep.subr.mxu0 0.0
    %476 = vmatpush1.msra.mxu0 0.0
    %477 = vmatprep.subr.mxu0 0.0
    %478 = vmatpush1.msra.mxu0 0.0
    %479 = vmatprep.subr.mxu0 0.0
    %480 = vmatpush1.msra.mxu0 0.0
    %481 = vmatprep.subr.mxu0 0.0
    %482 = vmatpush1.msra.mxu0 0.0
    %483 = vmatprep.subr.mxu0 0.0
    %484 = vmatpush1.msra.mxu0 %v65
    %485 = vmatprep.subr.mxu0 0.0
    %486 = vmatpush1.msra.mxu0 %v64
    %487 = vmatprep.subr.mxu0 0.0
    %488 = vmatpush1.msra.mxu0 %v63
    %489 = vmatprep.subr.mxu0 0.0
    %490 = vmatpush1.msra.mxu0 %v62
    %491 = vmatprep.subr.mxu0 0.0
    %492 = vmatpush2.msra.mxu0 0.0
    %493 = vmatprep.subr.mxu0 0.0
    %494 = vmatpush2.msra.mxu0 0.0
    %495 = vmatprep.subr.mxu0 0.0
    %496 = vmatpush2.msra.mxu0 0.0
    %497 = vmatprep.subr.mxu0 0.0
    %498 = vmatpush2.msra.mxu0 0.0
    %499 = vmatprep.subr.mxu0 0.0
    %500 = vmatpush2.msra.mxu0 0.0
    %501 = vmatprep.subr.mxu0 0.0
    %502 = vmatpush2.msra.mxu0 0.0
    %503 = vmatprep.subr.mxu0 0.0
    %504 = vmatpush2.msra.mxu0 0.0
    %505 = vmatprep.subr.mxu0 0.0
    %506 = vmatpush2.msra.mxu0 0.0
    %507 = vmatprep.subr.mxu0 0.0
    %508 = vmatpush2.msra.mxu0 0.0
    %509 = vmatprep.subr.mxu0 0.0
    %510 = vmatpush2.msra.mxu0 0.0
    %511 = vmatprep.subr.mxu0 0.0
    %512 = vmatpush2.msra.mxu0 0.0
    %513 = vmatprep.subr.mxu0 0.0
    %514 = vmatpush2.msra.mxu0 0.0
    %515 = vmatprep.subr.mxu0 0.0
    %516 = vmatpush2.msra.mxu0 0.0
    %517 = vmatprep.subr.mxu0 0.0
    %518 = vmatpush2.msra.mxu0 0.0
    %519 = vmatprep.subr.mxu0 0.0
    %520 = vmatpush2.msra.mxu0 0.0
    %521 = vmatprep.subr.mxu0 0.0
    %522 = vmatpush2.msra.mxu0 0.0
    %523 = vmatprep.mubr.f32.mxu0 0.0
    %524 = vmatmul.mubr.f32.gmra.mxu0 %v457
    %v525 = vpop.f32.mrf.mxu0
    %v526 = vadd.f32 %v198, %v525
    %v527 = vpop.f32.mrf.mxu0
    %528 = vdwg.mxu0
    %v529 = vsel %vm273, %v526, -inf
    %530 = vmax.xlane.f32.xlu0 %v529
    %v531 = vpop.xlane.xlu0 %530
    %v532 = vsub.f32 %v526, %v531
    %v533 = vmul.f32 %v532, 1.442695
    %v534 = vpow.pop %v533
    %v535 = vsel %vm273, %v534, 0.0
    %536 = vadd.xlane.f32.xlu0 %v535
    %v537 = vpop.xlane.xlu0 %536
    %v538 = vlog2.pop %v537
    %v539 = vmul.f32 %v538, 0.6931472
    %v540 = vadd.f32 %v531, %v539
    %vm541 = vcmp.eq.f32.partialorder %v526, %v531
    %v542 = vsel %vm541, %v94, 128
    %v543 = vsel %vm273, %v542, 2147483647
    %v544 = vand.u32 %v543, 65535
    %v545 = vshra.s32 %v543, 16
    %v546 = vcvt.s32.f32 %v544
    %v547 = vcvt.s32.f32 %v545
    %548 = vmin.xlane.f32.xlu0 %v547
    %v549 = vpop.xlane.xlu0 %548
    %vm550 = vcmp.eq.f32.partialorder %v547, %v549
    %v551 = vsel %vm550, %v546, inf
    %552 = vmin.xlane.f32.xlu0 %v551
    %v553 = vpop.xlane.xlu0 %552
    %v554 = vcvt.f32.s32 %v553
    %v555 = vcvt.f32.s32 %v549
    %v556 = vshll.u32 %v555, 16
    %v557 = vadd.s32 %v556, %v554
    %vm558 = vcmp.eq.s32.totalorder %v94, %v557
    %v559 = vsel %vm558, 1, 0
    %v560 = vcvt.s32.f32 %v559
    %v561 = vsub.f32 %v531, %v540
    %562 = vmatprep.subr.mxu0 0.0
    %563 = vmatpush1.msra.mxu0 %v56
    %564 = vmatprep.subr.mxu0 0.0
    %565 = vmatpush1.msra.mxu0 %v55
    %566 = vmatprep.subr.mxu0 0.0
    %567 = vmatpush1.msra.mxu0 %v54
    %568 = vmatprep.subr.mxu0 0.0
    %569 = vmatpush1.msra.mxu0 %v53
    %570 = vmatprep.subr.mxu0 0.0
    %571 = vmatpush1.msra.mxu0 %v52
    %572 = vmatprep.subr.mxu0 0.0
    %573 = vmatpush1.msra.mxu0 %v51
    %574 = vmatprep.subr.mxu0 0.0
    %575 = vmatpush1.msra.mxu0 %v50
    %576 = vmatprep.subr.mxu0 0.0
    %577 = vmatpush1.msra.mxu0 %v49
    %578 = vmatprep.subr.mxu0 0.0
    %579 = vmatpush1.msra.mxu0 %v48
    %580 = vmatprep.subr.mxu0 0.0
    %581 = vmatpush1.msra.mxu0 %v47
    %582 = vmatprep.subr.mxu0 0.0
    %583 = vmatpush1.msra.mxu0 %v46
    %584 = vmatprep.subr.mxu0 0.0
    %585 = vmatpush1.msra.mxu0 %v45
    %586 = vmatprep.subr.mxu0 0.0
    %587 = vmatpush1.msra.mxu0 %v44
    %588 = vmatprep.subr.mxu0 0.0
    %589 = vmatpush1.msra.mxu0 %v43
    %590 = vmatprep.subr.mxu0 0.0
    %591 = vmatpush1.msra.mxu0 %v42
    %592 = vmatprep.subr.mxu0 0.0
    %593 = vmatpush1.msra.mxu0 %v41
    %594 = vmatprep.subr.mxu0 0.0
    %595 = vmatpush2.msra.mxu0 0.0
    %596 = vmatprep.subr.mxu0 0.0
    %597 = vmatpush2.msra.mxu0 0.0
    %598 = vmatprep.subr.mxu0 0.0
    %599 = vmatpush2.msra.mxu0 0.0
    %600 = vmatprep.subr.mxu0 0.0
    %601 = vmatpush2.msra.mxu0 0.0
    %602 = vmatprep.subr.mxu0 0.0
    %603 = vmatpush2.msra.mxu0 0.0
    %604 = vmatprep.subr.mxu0 0.0
    %605 = vmatpush2.msra.mxu0 0.0
    %606 = vmatprep.subr.mxu0 0.0
    %607 = vmatpush2.msra.mxu0 0.0
    %608 = vmatprep.subr.mxu0 0.0
    %609 = vmatpush2.msra.mxu0 0.0
    %610 = vmatprep.subr.mxu0 0.0
    %611 = vmatpush2.msra.mxu0 0.0
    %612 = vmatprep.subr.mxu0 0.0
    %613 = vmatpush2.msra.mxu0 0.0
    %614 = vmatprep.subr.mxu0 0.0
    %615 = vmatpush2.msra.mxu0 0.0
    %616 = vmatprep.subr.mxu0 0.0
    %617 = vmatpush2.msra.mxu0 0.0
    %618 = vmatprep.subr.mxu0 0.0
    %619 = vmatpush2.msra.mxu0 0.0
    %620 = vmatprep.subr.mxu0 0.0
    %621 = vmatpush2.msra.mxu0 0.0
    %622 = vmatprep.subr.mxu0 0.0
    %623 = vmatpush2.msra.mxu0 0.0
    %624 = vmatprep.subr.mxu0 0.0
    %625 = vmatpush2.msra.mxu0 0.0
    %626 = vmatprep.mubr.f32.mxu0 0.0
    %627 = vmatmul.mubr.f32.gmra.mxu0 %v560
    %v628 = vpop.f32.mrf.mxu0
    %v629 = vadd.f32 0.0, %v628
    %v630 = vpop.f32.mrf.mxu0
    %631 = vdwg.mxu0
    %v632 = vadd.f32 %v374, %v629
    %v633 = vadd.f32 %v103, %v632
    %s634 = sadd.f32 %s107, 2.0
    %v635 = vstv %s634
    %v636 = vrcp.pop %v635
    %v637 = vmul.f32 %v633, %v636
    %v639 = vsel %vm119, %v637, 0
    %641 = vmatprep.subr.mxu0 0.0
    %642 = vmatpush1.msra.mxu0 0.0
    %643 = vmatprep.subr.mxu0 0.0
    %644 = vmatpush1.msra.mxu0 0.0
    %645 = vmatprep.subr.mxu0 0.0
    %646 = vmatpush1.msra.mxu0 0.0
    %647 = vmatprep.subr.mxu0 0.0
    %648 = vmatpush1.msra.mxu0 0.0
    %649 = vmatprep.subr.mxu0 0.0
    %650 = vmatpush1.msra.mxu0 0.0
    %651 = vmatprep.subr.mxu0 0.0
    %652 = vmatpush1.msra.mxu0 0.0
    %653 = vmatprep.subr.mxu0 0.0
    %654 = vmatpush1.msra.mxu0 0.0
    %655 = vmatprep.subr.mxu0 0.0
    %656 = vmatpush1.msra.mxu0 0.0
    %657 = vmatprep.subr.mxu0 0.0
    %658 = vmatpush1.msra.mxu0 0.0
    %659 = vmatprep.subr.mxu0 0.0
    %660 = vmatpush1.msra.mxu0 0.0
    %661 = vmatprep.subr.mxu0 0.0
    %662 = vmatpush1.msra.mxu0 0.0
    %663 = vmatprep.subr.mxu0 0.0
    %664 = vmatpush1.msra.mxu0 0.0
    %665 = vmatprep.subr.mxu0 0.0
    %666 = vmatpush1.msra.mxu0 %v60
    %667 = vmatprep.subr.mxu0 0.0
    %668 = vmatpush1.msra.mxu0 %v59
    %669 = vmatprep.subr.mxu0 0.0
    %670 = vmatpush1.msra.mxu0 %v58
    %671 = vmatprep.subr.mxu0 0.0
    %672 = vmatpush1.msra.mxu0 %v57
    %673 = vmatprep.subr.mxu0 0.0
    %674 = vmatpush2.msra.mxu0 0.0
    %675 = vmatprep.subr.mxu0 0.0
    %676 = vmatpush2.msra.mxu0 0.0
    %677 = vmatprep.subr.mxu0 0.0
    %678 = vmatpush2.msra.mxu0 0.0
    %679 = vmatprep.subr.mxu0 0.0
    %680 = vmatpush2.msra.mxu0 0.0
    %681 = vmatprep.subr.mxu0 0.0
    %682 = vmatpush2.msra.mxu0 0.0
    %683 = vmatprep.subr.mxu0 0.0
    %684 = vmatpush2.msra.mxu0 0.0
    %685 = vmatprep.subr.mxu0 0.0
    %686 = vmatpush2.msra.mxu0 0.0
    %687 = vmatprep.subr.mxu0 0.0
    %688 = vmatpush2.msra.mxu0 0.0
    %689 = vmatprep.subr.mxu0 0.0
    %690 = vmatpush2.msra.mxu0 0.0
    %691 = vmatprep.subr.mxu0 0.0
    %692 = vmatpush2.msra.mxu0 0.0
    %693 = vmatprep.subr.mxu0 0.0
    %694 = vmatpush2.msra.mxu0 0.0
    %695 = vmatprep.subr.mxu0 0.0
    %696 = vmatpush2.msra.mxu0 0.0
    %697 = vmatprep.subr.mxu0 0.0
    %698 = vmatpush2.msra.mxu0 0.0
    %699 = vmatprep.subr.mxu0 0.0
    %700 = vmatpush2.msra.mxu0 0.0
    %701 = vmatprep.subr.mxu0 0.0
    %702 = vmatpush2.msra.mxu0 0.0
    %703 = vmatprep.subr.mxu0 0.0
    %704 = vmatpush2.msra.mxu0 0.0
    %705 = vmatprep.mubr.f32.mxu0 0.0
    %706 = vmatmul.mubr.f32.gmra.mxu0 %v639
    %v707 = vpop.f32.mrf.mxu0
    %v708 = vadd.f32 %v117, %v707
    %v709 = vpop.f32.mrf.mxu0
    %710 = vdwg.mxu0
    %v711 = vtanh.pop %v708
    %v713 = vsel %vm119, %v711, 0
    %715 = vmatprep.subr.mxu0 0.0
    %716 = vmatpush1.msra.mxu0 0.0
    %717 = vmatprep.subr.mxu0 0.0
    %718 = vmatpush1.msra.mxu0 0.0
    %719 = vmatprep.subr.mxu0 0.0
    %720 = vmatpush1.msra.mxu0 0.0
    %721 = vmatprep.subr.mxu0 0.0
    %722 = vmatpush1.msra.mxu0 0.0
    %723 = vmatprep.subr.mxu0 0.0
    %724 = vmatpush1.msra.mxu0 0.0
    %725 = vmatprep.subr.mxu0 0.0
    %726 = vmatpush1.msra.mxu0 0.0
    %727 = vmatprep.subr.mxu0 0.0
    %728 = vmatpush1.msra.mxu0 0.0
    %729 = vmatprep.subr.mxu0 0.0
    %730 = vmatpush1.msra.mxu0 0.0
    %731 = vmatprep.subr.mxu0 0.0
    %732 = vmatpush1.msra.mxu0 0.0
    %733 = vmatprep.subr.mxu0 0.0
    %734 = vmatpush1.msra.mxu0 0.0
    %735 = vmatprep.subr.mxu0 0.0
    %736 = vmatpush1.msra.mxu0 0.0
    %737 = vmatprep.subr.mxu0 0.0
    %738 = vmatpush1.msra.mxu0 0.0
    %739 = vmatprep.subr.mxu0 0.0
    %740 = vmatpush1.msra.mxu0 %v65
    %741 = vmatprep.subr.mxu0 0.0
    %742 = vmatpush1.msra.mxu0 %v64
    %743 = vmatprep.subr.mxu0 0.0
    %744 = vmatpush1.msra.mxu0 %v63
    %745 = vmatprep.subr.mxu0 0.0
    %746 = vmatpush1.msra.mxu0 %v62
    %747 = vmatprep.subr.mxu0 0.0
    %748 = vmatpush2.msra.mxu0 0.0
    %749 = vmatprep.subr.mxu0 0.0
    %750 = vmatpush2.msra.mxu0 0.0
    %751 = vmatprep.subr.mxu0 0.0
    %752 = vmatpush2.msra.mxu0 0.0
    %753 = vmatprep.subr.mxu0 0.0
    %754 = vmatpush2.msra.mxu0 0.0
    %755 = vmatprep.subr.mxu0 0.0
    %756 = vmatpush2.msra.mxu0 0.0
    %757 = vmatprep.subr.mxu0 0.0
    %758 = vmatpush2.msra.mxu0 0.0
    %759 = vmatprep.subr.mxu0 0.0
    %760 = vmatpush2.msra.mxu0 0.0
    %761 = vmatprep.subr.mxu0 0.0
    %762 = vmatpush2.msra.mxu0 0.0
    %763 = vmatprep.subr.mxu0 0.0
    %764 = vmatpush2.msra.mxu0 0.0
    %765 = vmatprep.subr.mxu0 0.0
    %766 = vmatpush2.msra.mxu0 0.0
    %767 = vmatprep.subr.mxu0 0.0
    %768 = vmatpush2.msra.mxu0 0.0
    %769 = vmatprep.subr.mxu0 0.0
    %770 = vmatpush2.msra.mxu0 0.0
    %771 = vmatprep.subr.mxu0 0.0
    %772 = vmatpush2.msra.mxu0 0.0
    %773 = vmatprep.subr.mxu0 0.0
    %774 = vmatpush2.msra.mxu0 0.0
    %775 = vmatprep.subr.mxu0 0.0
    %776 = vmatpush2.msra.mxu0 0.0
    %777 = vmatprep.subr.mxu0 0.0
    %778 = vmatpush2.msra.mxu0 0.0
    %779 = vmatprep.mubr.f32.mxu0 0.0
    %780 = vmatmul.mubr.f32.gmra.mxu0 %v713
    %v781 = vpop.f32.mrf.mxu0
    %v782 = vadd.f32 %v198, %v781
    %v783 = vpop.f32.mrf.mxu0
    %784 = vdwg.mxu0
    %v785 = vsel %vm273, %v782, -inf
    %786 = vmax.xlane.f32.xlu0 %v785
    %v787 = vpop.xlane.xlu0 %786
    %v788 = vsub.f32 %v782, %v787
    %v789 = vmul.f32 %v788, 1.442695
    %v790 = vpow.pop %v789
    %v791 = vsel %vm273, %v790, 0.0
    %792 = vadd.xlane.f32.xlu0 %v791
    %v793 = vpop.xlane.xlu0 %792
    %v794 = vlog2.pop %v793
    %v795 = vmul.f32 %v794, 0.6931472
    %v796 = vadd.f32 %v787, %v795
    %vm797 = vcmp.eq.f32.partialorder %v782, %v787
    %v798 = vsel %vm797, %v94, 128
    %v799 = vsel %vm273, %v798, 2147483647
    %v800 = vand.u32 %v799, 65535
    %v801 = vshra.s32 %v799, 16
    %v802 = vcvt.s32.f32 %v800
    %v803 = vcvt.s32.f32 %v801
    %804 = vmin.xlane.f32.xlu0 %v803
    %v805 = vpop.xlane.xlu0 %804
    %vm806 = vcmp.eq.f32.partialorder %v803, %v805
    %v807 = vsel %vm806, %v802, inf
    %808 = vmin.xlane.f32.xlu0 %v807
    %v809 = vpop.xlane.xlu0 %808
    %v810 = vcvt.f32.s32 %v809
    %v811 = vcvt.f32.s32 %v805
    %v812 = vshll.u32 %v811, 16
    %v813 = vadd.s32 %v812, %v810
    %vm814 = vcmp.eq.s32.totalorder %v94, %v813
    %v815 = vsel %vm814, 1, 0
    %v816 = vcvt.s32.f32 %v815
    %v817 = vsub.f32 %v787, %v796
    %818 = vmatprep.subr.mxu0 0.0
    %819 = vmatpush1.msra.mxu0 %v56
    %820 = vmatprep.subr.mxu0 0.0
    %821 = vmatpush1.msra.mxu0 %v55
    %822 = vmatprep.subr.mxu0 0.0
    %823 = vmatpush1.msra.mxu0 %v54
    %824 = vmatprep.subr.mxu0 0.0
    %825 = vmatpush1.msra.mxu0 %v53
    %826 = vmatprep.subr.mxu0 0.0
    %827 = vmatpush1.msra.mxu0 %v52
    %828 = vmatprep.subr.mxu0 0.0
    %829 = vmatpush1.msra.mxu0 %v51
    %830 = vmatprep.subr.mxu0 0.0
    %831 = vmatpush1.msra.mxu0 %v50
    %832 = vmatprep.subr.mxu0 0.0
    %833 = vmatpush1.msra.mxu0 %v49
    %834 = vmatprep.subr.mxu0 0.0
    %835 = vmatpush1.msra.mxu0 %v48
    %836 = vmatprep.subr.mxu0 0.0
    %837 = vmatpush1.msra.mxu0 %v47
    %838 = vmatprep.subr.mxu0 0.0
    %839 = vmatpush1.msra.mxu0 %v46
    %840 = vmatprep.subr.mxu0 0.0
    %841 = vmatpush1.msra.mxu0 %v45
    %842 = vmatprep.subr.mxu0 0.0
    %843 = vmatpush1.msra.mxu0 %v44
    %844 = vmatprep.subr.mxu0 0.0
    %845 = vmatpush1.msra.mxu0 %v43
    %846 = vmatprep.subr.mxu0 0.0
    %847 = vmatpush1.msra.mxu0 %v42
    %848 = vmatprep.subr.mxu0 0.0
    %849 = vmatpush1.msra.mxu0 %v41
    %850 = vmatprep.subr.mxu0 0.0
    %851 = vmatpush2.msra.mxu0 0.0
    %852 = vmatprep.subr.mxu0 0.0
    %853 = vmatpush2.msra.mxu0 0.0
    %854 = vmatprep.subr.mxu0 0.0
    %855 = vmatpush2.msra.mxu0 0.0
    %856 = vmatprep.subr.mxu0 0.0
    %857 = vmatpush2.msra.mxu0 0.0
    %858 = vmatprep.subr.mxu0 0.0
    %859 = vmatpush2.msra.mxu0 0.0
    %860 = vmatprep.subr.mxu0 0.0
    %861 = vmatpush2.msra.mxu0 0.0
    %862 = vmatprep.subr.mxu0 0.0
    %863 = vmatpush2.msra.mxu0 0.0
    %864 = vmatprep.subr.mxu0 0.0
    %865 = vmatpush2.msra.mxu0 0.0
    %866 = vmatprep.subr.mxu0 0.0
    %867 = vmatpush2.msra.mxu0 0.0
    %868 = vmatprep.subr.mxu0 0.0
    %869 = vmatpush2.msra.mxu0 0.0
    %870 = vmatprep.subr.mxu0 0.0
    %871 = vmatpush2.msra.mxu0 0.0
    %872 = vmatprep.subr.mxu0 0.0
    %873 = vmatpush2.msra.mxu0 0.0
    %874 = vmatprep.subr.mxu0 0.0
    %875 = vmatpush2.msra.mxu0 0.0
    %876 = vmatprep.subr.mxu0 0.0
    %877 = vmatpush2.msra.mxu0 0.0
    %878 = vmatprep.subr.mxu0 0.0
    %879 = vmatpush2.msra.mxu0 0.0
    %880 = vmatprep.subr.mxu0 0.0
    %881 = vmatpush2.msra.mxu0 0.0
    %882 = vmatprep.mubr.f32.mxu0 0.0
    %883 = vmatmul.mubr.f32.gmra.mxu0 %v816
    %v884 = vpop.f32.mrf.mxu0
    %v885 = vadd.f32 0.0, %v884
    %v886 = vpop.f32.mrf.mxu0
    %887 = vdwg.mxu0
    %v888 = vadd.f32 %v632, %v885
    %v889 = vadd.f32 %v103, %v888
    %s890 = sadd.f32 %s107, 3.0
    %v891 = vstv %s890
    %v892 = vrcp.pop %v891
    %v893 = vmul.f32 %v889, %v892
    %v895 = vsel %vm119, %v893, 0
    %897 = vmatprep.subr.mxu0 0.0
    %898 = vmatpush1.msra.mxu0 0.0
    %899 = vmatprep.subr.mxu0 0.0
    %900 = vmatpush1.msra.mxu0 0.0
    %901 = vmatprep.subr.mxu0 0.0
    %902 = vmatpush1.msra.mxu0 0.0
    %903 = vmatprep.subr.mxu0 0.0
    %904 = vmatpush1.msra.mxu0 0.0
    %905 = vmatprep.subr.mxu0 0.0
    %906 = vmatpush1.msra.mxu0 0.0
    %907 = vmatprep.subr.mxu0 0.0
    %908 = vmatpush1.msra.mxu0 0.0
    %909 = vmatprep.subr.mxu0 0.0
    %910 = vmatpush1.msra.mxu0 0.0
    %911 = vmatprep.subr.mxu0 0.0
    %912 = vmatpush1.msra.mxu0 0.0
    %913 = vmatprep.subr.mxu0 0.0
    %914 = vmatpush1.msra.mxu0 0.0
    %915 = vmatprep.subr.mxu0 0.0
    %916 = vmatpush1.msra.mxu0 0.0
    %917 = vmatprep.subr.mxu0 0.0
    %918 = vmatpush1.msra.mxu0 0.0
    %919 = vmatprep.subr.mxu0 0.0
    %920 = vmatpush1.msra.mxu0 0.0
    %921 = vmatprep.subr.mxu0 0.0
    %922 = vmatpush1.msra.mxu0 %v60
    %923 = vmatprep.subr.mxu0 0.0
    %924 = vmatpush1.msra.mxu0 %v59
    %925 = vmatprep.subr.mxu0 0.0
    %926 = vmatpush1.msra.mxu0 %v58
    %927 = vmatprep.subr.mxu0 0.0
    %928 = vmatpush1.msra.mxu0 %v57
    %929 = vmatprep.subr.mxu0 0.0
    %930 = vmatpush2.msra.mxu0 0.0
    %931 = vmatprep.subr.mxu0 0.0
    %932 = vmatpush2.msra.mxu0 0.0
    %933 = vmatprep.subr.mxu0 0.0
    %934 = vmatpush2.msra.mxu0 0.0
    %935 = vmatprep.subr.mxu0 0.0
    %936 = vmatpush2.msra.mxu0 0.0
    %937 = vmatprep.subr.mxu0 0.0
    %938 = vmatpush2.msra.mxu0 0.0
    %939 = vmatprep.subr.mxu0 0.0
    %940 = vmatpush2.msra.mxu0 0.0
    %941 = vmatprep.subr.mxu0 0.0
    %942 = vmatpush2.msra.mxu0 0.0
    %943 = vmatprep.subr.mxu0 0.0
    %944 = vmatpush2.msra.mxu0 0.0
    %945 = vmatprep.subr.mxu0 0.0
    %946 = vmatpush2.msra.mxu0 0.0
    %947 = vmatprep.subr.mxu0 0.0
    %948 = vmatpush2.msra.mxu0 0.0
    %949 = vmatprep.subr.mxu0 0.0
    %950 = vmatpush2.msra.mxu0 0.0
    %951 = vmatprep.subr.mxu0 0.0
    %952 = vmatpush2.msra.mxu0 0.0
    %953 = vmatprep.subr.mxu0 0.0
    %954 = vmatpush2.msra.mxu0 0.0
    %955 = vmatprep.subr.mxu0 0.0
    %956 = vmatpush2.msra.mxu0 0.0
    %957 = vmatprep.subr.mxu0 0.0
    %958 = vmatpush2.msra.mxu0 0.0
    %959 = vmatprep.subr.mxu0 0.0
    %960 = vmatpush2.msra.mxu0 0.0
    %961 = vmatprep.mubr.f32.mxu0 0.0
    %962 = vmatmul.mubr.f32.gmra.mxu0 %v895
    %v963 = vpop.f32.mrf.mxu0
    %v964 = vadd.f32 %v117, %v963
    %v965 = vpop.f32.mrf.mxu0
    %966 = vdwg.mxu0
    %v967 = vtanh.pop %v964
    %v969 = vsel %vm119, %v967, 0
    %971 = vmatprep.subr.mxu0 0.0
    %972 = vmatpush1.msra.mxu0 0.0
    %973 = vmatprep.subr.mxu0 0.0
    %974 = vmatpush1.msra.mxu0 0.0
    %975 = vmatprep.subr.mxu0 0.0
    %976 = vmatpush1.msra.mxu0 0.0
    %977 = vmatprep.subr.mxu0 0.0
    %978 = vmatpush1.msra.mxu0 0.0
    %979 = vmatprep.subr.mxu0 0.0
    %980 = vmatpush1.msra.mxu0 0.0
    %981 = vmatprep.subr.mxu0 0.0
    %982 = vmatpush1.msra.mxu0 0.0
    %983 = vmatprep.subr.mxu0 0.0
    %984 = vmatpush1.msra.mxu0 0.0
    %985 = vmatprep.subr.mxu0 0.0
    %986 = vmatpush1.msra.mxu0 0.0
    %987 = vmatprep.subr.mxu0 0.0
    %988 = vmatpush1.msra.mxu0 0.0
    %989 = vmatprep.subr.mxu0 0.0
    %990 = vmatpush1.msra.mxu0 0.0
    %991 = vmatprep.subr.mxu0 0.0
    %992 = vmatpush1.msra.mxu0 0.0
    %993 = vmatprep.subr.mxu0 0.0
    %994 = vmatpush1.msra.mxu0 0.0
    %995 = vmatprep.subr.mxu0 0.0
    %996 = vmatpush1.msra.mxu0 %v65
    %997 = vmatprep.subr.mxu0 0.0
    %998 = vmatpush1.msra.mxu0 %v64
    %999 = vmatprep.subr.mxu0 0.0
    %1000 = vmatpush1.msra.mxu0 %v63
    %1001 = vmatprep.subr.mxu0 0.0
    %1002 = vmatpush1.msra.mxu0 %v62
    %1003 = vmatprep.subr.mxu0 0.0
    %1004 = vmatpush2.msra.mxu0 0.0
    %1005 = vmatprep.subr.mxu0 0.0
    %1006 = vmatpush2.msra.mxu0 0.0
    %1007 = vmatprep.subr.mxu0 0.0
    %1008 = vmatpush2.msra.mxu0 0.0
    %1009 = vmatprep.subr.mxu0 0.0
    %1010 = vmatpush2.msra.mxu0 0.0
    %1011 = vmatprep.subr.mxu0 0.0
    %1012 = vmatpush2.msra.mxu0 0.0
    %1013 = vmatprep.subr.mxu0 0.0
    %1014 = vmatpush2.msra.mxu0 0.0
    %1015 = vmatprep.subr.mxu0 0.0
    %1016 = vmatpush2.msra.mxu0 0.0
    %1017 = vmatprep.subr.mxu0 0.0
    %1018 = vmatpush2.msra.mxu0 0.0
    %1019 = vmatprep.subr.mxu0 0.0
    %1020 = vmatpush2.msra.mxu0 0.0
    %1021 = vmatprep.subr.mxu0 0.0
    %1022 = vmatpush2.msra.mxu0 0.0
    %1023 = vmatprep.subr.mxu0 0.0
    %1024 = vmatpush2.msra.mxu0 0.0
    %1025 = vmatprep.subr.mxu0 0.0
    %1026 = vmatpush2.msra.mxu0 0.0
    %1027 = vmatprep.subr.mxu0 0.0
    %1028 = vmatpush2.msra.mxu0 0.0
    %1029 = vmatprep.subr.mxu0 0.0
    %1030 = vmatpush2.msra.mxu0 0.0
    %1031 = vmatprep.subr.mxu0 0.0
    %1032 = vmatpush2.msra.mxu0 0.0
    %1033 = vmatprep.subr.mxu0 0.0
    %1034 = vmatpush2.msra.mxu0 0.0
    %1035 = vmatprep.mubr.f32.mxu0 0.0
    %1036 = vmatmul.mubr.f32.gmra.mxu0 %v969
    %v1037 = vpop.f32.mrf.mxu0
    %v1038 = vadd.f32 %v198, %v1037
    %v1039 = vpop.f32.mrf.mxu0
    %1040 = vdwg.mxu0
    %v1041 = vsel %vm273, %v1038, -inf
    %1042 = vmax.xlane.f32.xlu0 %v1041
    %v1043 = vpop.xlane.xlu0 %1042
    %v1044 = vsub.f32 %v1038, %v1043
    %v1045 = vmul.f32 %v1044, 1.442695
    %v1046 = vpow.pop %v1045
    %v1047 = vsel %vm273, %v1046, 0.0
    %1048 = vadd.xlane.f32.xlu0 %v1047
    %v1049 = vpop.xlane.xlu0 %1048
    %v1050 = vlog2.pop %v1049
    %v1051 = vmul.f32 %v1050, 0.6931472
    %v1052 = vadd.f32 %v1043, %v1051
    %vm1053 = vcmp.eq.f32.partialorder %v1038, %v1043
    %v1054 = vsel %vm1053, %v94, 128
    %v1055 = vsel %vm273, %v1054, 2147483647
    %v1056 = vand.u32 %v1055, 65535
    %v1057 = vshra.s32 %v1055, 16
    %v1058 = vcvt.s32.f32 %v1056
    %v1059 = vcvt.s32.f32 %v1057
    %1060 = vmin.xlane.f32.xlu0 %v1059
    %v1061 = vpop.xlane.xlu0 %1060
    %vm1062 = vcmp.eq.f32.partialorder %v1059, %v1061
    %v1063 = vsel %vm1062, %v1058, inf
    %1064 = vmin.xlane.f32.xlu0 %v1063
    %v1065 = vpop.xlane.xlu0 %1064
    %v1066 = vcvt.f32.s32 %v1065
    %v1067 = vcvt.f32.s32 %v1061
    %v1068 = vshll.u32 %v1067, 16
    %v1069 = vadd.s32 %v1068, %v1066
    %vm1070 = vcmp.eq.s32.totalorder %v94, %v1069
    %v1071 = vsel %vm1070, 1, 0
    %v1072 = vcvt.s32.f32 %v1071
    %v1073 = vsub.f32 %v1043, %v1052
    %1074 = vmatprep.subr.mxu0 0.0
    %1075 = vmatpush1.msra.mxu0 %v56
    %1076 = vmatprep.subr.mxu0 0.0
    %1077 = vmatpush1.msra.mxu0 %v55
    %1078 = vmatprep.subr.mxu0 0.0
    %1079 = vmatpush1.msra.mxu0 %v54
    %1080 = vmatprep.subr.mxu0 0.0
    %1081 = vmatpush1.msra.mxu0 %v53
    %1082 = vmatprep.subr.mxu0 0.0
    %1083 = vmatpush1.msra.mxu0 %v52
    %1084 = vmatprep.subr.mxu0 0.0
    %1085 = vmatpush1.msra.mxu0 %v51
    %1086 = vmatprep.subr.mxu0 0.0
    %1087 = vmatpush1.msra.mxu0 %v50
    %1088 = vmatprep.subr.mxu0 0.0
    %1089 = vmatpush1.msra.mxu0 %v49
    %1090 = vmatprep.subr.mxu0 0.0
    %1091 = vmatpush1.msra.mxu0 %v48
    %1092 = vmatprep.subr.mxu0 0.0
    %1093 = vmatpush1.msra.mxu0 %v47
    %1094 = vmatprep.subr.mxu0 0.0
    %1095 = vmatpush1.msra.mxu0 %v46
    %1096 = vmatprep.subr.mxu0 0.0
    %1097 = vmatpush1.msra.mxu0 %v45
    %1098 = vmatprep.subr.mxu0 0.0
    %1099 = vmatpush1.msra.mxu0 %v44
    %1100 = vmatprep.subr.mxu0 0.0
    %1101 = vmatpush1.msra.mxu0 %v43
    %1102 = vmatprep.subr.mxu0 0.0
    %1103 = vmatpush1.msra.mxu0 %v42
    %1104 = vmatprep.subr.mxu0 0.0
    %1105 = vmatpush1.msra.mxu0 %v41
    %1106 = vmatprep.subr.mxu0 0.0
    %1107 = vmatpush2.msra.mxu0 0.0
    %1108 = vmatprep.subr.mxu0 0.0
    %1109 = vmatpush2.msra.mxu0 0.0
    %1110 = vmatprep.subr.mxu0 0.0
    %1111 = vmatpush2.msra.mxu0 0.0
    %1112 = vmatprep.subr.mxu0 0.0
    %1113 = vmatpush2.msra.mxu0 0.0
    %1114 = vmatprep.subr.mxu0 0.0
    %1115 = vmatpush2.msra.mxu0 0.0
    %1116 = vmatprep.subr.mxu0 0.0
    %1117 = vmatpush2.msra.mxu0 0.0
    %1118 = vmatprep.subr.mxu0 0.0
    %1119 = vmatpush2.msra.mxu0 0.0
    %1120 = vmatprep.subr.mxu0 0.0
    %1121 = vmatpush2.msra.mxu0 0.0
    %1122 = vmatprep.subr.mxu0 0.0
    %1123 = vmatpush2.msra.mxu0 0.0
    %1124 = vmatprep.subr.mxu0 0.0
    %1125 = vmatpush2.msra.mxu0 0.0
    %1126 = vmatprep.subr.mxu0 0.0
    %1127 = vmatpush2.msra.mxu0 0.0
    %1128 = vmatprep.subr.mxu0 0.0
    %1129 = vmatpush2.msra.mxu0 0.0
    %1130 = vmatprep.subr.mxu0 0.0
    %1131 = vmatpush2.msra.mxu0 0.0
    %1132 = vmatprep.subr.mxu0 0.0
    %1133 = vmatpush2.msra.mxu0 0.0
    %1134 = vmatprep.subr.mxu0 0.0
    %1135 = vmatpush2.msra.mxu0 0.0
    %1136 = vmatprep.subr.mxu0 0.0
    %1137 = vmatpush2.msra.mxu0 0.0
    %1138 = vmatprep.mubr.f32.mxu0 0.0
    %1139 = vmatmul.mubr.f32.gmra.mxu0 %v1072
    %v1140 = vpop.f32.mrf.mxu0
    %v1141 = vadd.f32 0.0, %v1140
    %v1142 = vpop.f32.mrf.mxu0
    %1143 = vdwg.mxu0
    %v1144 = vadd.f32 %v888, %v1141
    %v1145 = vadd.f32 %v103, %v1144
    %s1146 = sadd.f32 %s107, 4.0
    %v1147 = vstv %s1146
    %v1148 = vrcp.pop %v1147
    %v1149 = vmul.f32 %v1145, %v1148
    %v1151 = vsel %vm119, %v1149, 0
    %1153 = vmatprep.subr.mxu0 0.0
    %1154 = vmatpush1.msra.mxu0 0.0
    %1155 = vmatprep.subr.mxu0 0.0
    %1156 = vmatpush1.msra.mxu0 0.0
    %1157 = vmatprep.subr.mxu0 0.0
    %1158 = vmatpush1.msra.mxu0 0.0
    %1159 = vmatprep.subr.mxu0 0.0
    %1160 = vmatpush1.msra.mxu0 0.0
    %1161 = vmatprep.subr.mxu0 0.0
    %1162 = vmatpush1.msra.mxu0 0.0
    %1163 = vmatprep.subr.mxu0 0.0
    %1164 = vmatpush1.msra.mxu0 0.0
    %1165 = vmatprep.subr.mxu0 0.0
    %1166 = vmatpush1.msra.mxu0 0.0
    %1167 = vmatprep.subr.mxu0 0.0
    %1168 = vmatpush1.msra.mxu0 0.0
    %1169 = vmatprep.subr.mxu0 0.0
    %1170 = vmatpush1.msra.mxu0 0.0
    %1171 = vmatprep.subr.mxu0 0.0
    %1172 = vmatpush1.msra.mxu0 0.0
    %1173 = vmatprep.subr.mxu0 0.0
    %1174 = vmatpush1.msra.mxu0 0.0
    %1175 = vmatprep.subr.mxu0 0.0
    %1176 = vmatpush1.msra.mxu0 0.0
    %1177 = vmatprep.subr.mxu0 0.0
    %1178 = vmatpush1.msra.mxu0 %v60
    %1179 = vmatprep.subr.mxu0 0.0
    %1180 = vmatpush1.msra.mxu0 %v59
    %1181 = vmatprep.subr.mxu0 0.0
    %1182 = vmatpush1.msra.mxu0 %v58
    %1183 = vmatprep.subr.mxu0 0.0
    %1184 = vmatpush1.msra.mxu0 %v57
    %1185 = vmatprep.subr.mxu0 0.0
    %1186 = vmatpush2.msra.mxu0 0.0
    %1187 = vmatprep.subr.mxu0 0.0
    %1188 = vmatpush2.msra.mxu0 0.0
    %1189 = vmatprep.subr.mxu0 0.0
    %1190 = vmatpush2.msra.mxu0 0.0
    %1191 = vmatprep.subr.mxu0 0.0
    %1192 = vmatpush2.msra.mxu0 0.0
    %1193 = vmatprep.subr.mxu0 0.0
    %1194 = vmatpush2.msra.mxu0 0.0
    %1195 = vmatprep.subr.mxu0 0.0
    %1196 = vmatpush2.msra.mxu0 0.0
    %1197 = vmatprep.subr.mxu0 0.0
    %1198 = vmatpush2.msra.mxu0 0.0
    %1199 = vmatprep.subr.mxu0 0.0
    %1200 = vmatpush2.msra.mxu0 0.0
    %1201 = vmatprep.subr.mxu0 0.0
    %1202 = vmatpush2.msra.mxu0 0.0
    %1203 = vmatprep.subr.mxu0 0.0
    %1204 = vmatpush2.msra.mxu0 0.0
    %1205 = vmatprep.subr.mxu0 0.0
    %1206 = vmatpush2.msra.mxu0 0.0
    %1207 = vmatprep.subr.mxu0 0.0
    %1208 = vmatpush2.msra.mxu0 0.0
    %1209 = vmatprep.subr.mxu0 0.0
    %1210 = vmatpush2.msra.mxu0 0.0
    %1211 = vmatprep.subr.mxu0 0.0
    %1212 = vmatpush2.msra.mxu0 0.0
    %1213 = vmatprep.subr.mxu0 0.0
    %1214 = vmatpush2.msra.mxu0 0.0
    %1215 = vmatprep.subr.mxu0 0.0
    %1216 = vmatpush2.msra.mxu0 0.0
    %1217 = vmatprep.mubr.f32.mxu0 0.0
    %1218 = vmatmul.mubr.f32.gmra.mxu0 %v1151
    %v1219 = vpop.f32.mrf.mxu0
    %v1220 = vadd.f32 %v117, %v1219
    %v1221 = vpop.f32.mrf.mxu0
    %1222 = vdwg.mxu0
    %v1223 = vtanh.pop %v1220
    %v1225 = vsel %vm119, %v1223, 0
    %1227 = vmatprep.subr.mxu0 0.0
    %1228 = vmatpush1.msra.mxu0 0.0
    %1229 = vmatprep.subr.mxu0 0.0
    %1230 = vmatpush1.msra.mxu0 0.0
    %1231 = vmatprep.subr.mxu0 0.0
    %1232 = vmatpush1.msra.mxu0 0.0
    %1233 = vmatprep.subr.mxu0 0.0
    %1234 = vmatpush1.msra.mxu0 0.0
    %1235 = vmatprep.subr.mxu0 0.0
    %1236 = vmatpush1.msra.mxu0 0.0
    %1237 = vmatprep.subr.mxu0 0.0
    %1238 = vmatpush1.msra.mxu0 0.0
    %1239 = vmatprep.subr.mxu0 0.0
    %1240 = vmatpush1.msra.mxu0 0.0
    %1241 = vmatprep.subr.mxu0 0.0
    %1242 = vmatpush1.msra.mxu0 0.0
    %1243 = vmatprep.subr.mxu0 0.0
    %1244 = vmatpush1.msra.mxu0 0.0
    %1245 = vmatprep.subr.mxu0 0.0
    %1246 = vmatpush1.msra.mxu0 0.0
    %1247 = vmatprep.subr.mxu0 0.0
    %1248 = vmatpush1.msra.mxu0 0.0
    %1249 = vmatprep.subr.mxu0 0.0
    %1250 = vmatpush1.msra.mxu0 0.0
    %1251 = vmatprep.subr.mxu0 0.0
    %1252 = vmatpush1.msra.mxu0 %v65
    %1253 = vmatprep.subr.mxu0 0.0
    %1254 = vmatpush1.msra.mxu0 %v64
    %1255 = vmatprep.subr.mxu0 0.0
    %1256 = vmatpush1.msra.mxu0 %v63
    %1257 = vmatprep.subr.mxu0 0.0
    %1258 = vmatpush1.msra.mxu0 %v62
    %1259 = vmatprep.subr.mxu0 0.0
    %1260 = vmatpush2.msra.mxu0 0.0
    %1261 = vmatprep.subr.mxu0 0.0
    %1262 = vmatpush2.msra.mxu0 0.0
    %1263 = vmatprep.subr.mxu0 0.0
    %1264 = vmatpush2.msra.mxu0 0.0
    %1265 = vmatprep.subr.mxu0 0.0
    %1266 = vmatpush2.msra.mxu0 0.0
    %1267 = vmatprep.subr.mxu0 0.0
    %1268 = vmatpush2.msra.mxu0 0.0
    %1269 = vmatprep.subr.mxu0 0.0
    %1270 = vmatpush2.msra.mxu0 0.0
    %1271 = vmatprep.subr.mxu0 0.0
    %1272 = vmatpush2.msra.mxu0 0.0
    %1273 = vmatprep.subr.mxu0 0.0
    %1274 = vmatpush2.msra.mxu0 0.0
    %1275 = vmatprep.subr.mxu0 0.0
    %1276 = vmatpush2.msra.mxu0 0.0
    %1277 = vmatprep.subr.mxu0 0.0
    %1278 = vmatpush2.msra.mxu0 0.0
    %1279 = vmatprep.subr.mxu0 0.0
    %1280 = vmatpush2.msra.mxu0 0.0
    %1281 = vmatprep.subr.mxu0 0.0
    %1282 = vmatpush2.msra.mxu0 0.0
    %1283 = vmatprep.subr.mxu0 0.0
    %1284 = vmatpush2.msra.mxu0 0.0
    %1285 = vmatprep.subr.mxu0 0.0
    %1286 = vmatpush2.msra.mxu0 0.0
    %1287 = vmatprep.subr.mxu0 0.0
    %1288 = vmatpush2.msra.mxu0 0.0
    %1289 = vmatprep.subr.mxu0 0.0
    %1290 = vmatpush2.msra.mxu0 0.0
    %1291 = vmatprep.mubr.f32.mxu0 0.0
    %1292 = vmatmul.mubr.f32.gmra.mxu0 %v1225
    %v1293 = vpop.f32.mrf.mxu0
    %v1294 = vadd.f32 %v198, %v1293
    %v1295 = vpop.f32.mrf.mxu0
    %1296 = vdwg.mxu0
    %v1297 = vsel %vm273, %v1294, -inf
    %1298 = vmax.xlane.f32.xlu0 %v1297
    %v1299 = vpop.xlane.xlu0 %1298
    %v1300 = vsub.f32 %v1294, %v1299
    %v1301 = vmul.f32 %v1300, 1.442695
    %v1302 = vpow.pop %v1301
    %v1303 = vsel %vm273, %v1302, 0.0
    %1304 = vadd.xlane.f32.xlu0 %v1303
    %v1305 = vpop.xlane.xlu0 %1304
    %v1306 = vlog2.pop %v1305
    %v1307 = vmul.f32 %v1306, 0.6931472
    %v1308 = vadd.f32 %v1299, %v1307
    %vm1309 = vcmp.eq.f32.partialorder %v1294, %v1299
    %v1310 = vsel %vm1309, %v94, 128
    %v1311 = vsel %vm273, %v1310, 2147483647
    %v1312 = vand.u32 %v1311, 65535
    %v1313 = vshra.s32 %v1311, 16
    %v1314 = vcvt.s32.f32 %v1312
    %v1315 = vcvt.s32.f32 %v1313
    %1316 = vmin.xlane.f32.xlu0 %v1315
    %v1317 = vpop.xlane.xlu0 %1316
    %vm1318 = vcmp.eq.f32.partialorder %v1315, %v1317
    %v1319 = vsel %vm1318, %v1314, inf
    %1320 = vmin.xlane.f32.xlu0 %v1319
    %v1321 = vpop.xlane.xlu0 %1320
    %v1322 = vcvt.f32.s32 %v1321
    %v1323 = vcvt.f32.s32 %v1317
    %v1324 = vshll.u32 %v1323, 16
    %v1325 = vadd.s32 %v1324, %v1322
    %vm1326 = vcmp.eq.s32.totalorder %v94, %v1325
    %v1327 = vsel %vm1326, 1, 0
    %v1328 = vcvt.s32.f32 %v1327
    %v1329 = vsub.f32 %v1299, %v1308
    %1330 = vmatprep.subr.mxu0 0.0
    %1331 = vmatpush1.msra.mxu0 %v82
    %1332 = vmatprep.subr.mxu0 0.0
    %1333 = vmatpush1.msra.mxu0 %v81
    %1334 = vmatprep.subr.mxu0 0.0
    %1335 = vmatpush1.msra.mxu0 %v80
    %1336 = vmatprep.subr.mxu0 0.0
    %1337 = vmatpush1.msra.mxu0 %v79
    %1338 = vmatprep.subr.mxu0 0.0
    %1339 = vmatpush1.msra.mxu0 %v78
    %1340 = vmatprep.subr.mxu0 0.0
    %1341 = vmatpush1.msra.mxu0 %v77
    %1342 = vmatprep.subr.mxu0 0.0
    %1343 = vmatpush1.msra.mxu0 %v76
    %1344 = vmatprep.subr.mxu0 0.0
    %1345 = vmatpush1.msra.mxu0 %v75
    %1346 = vmatprep.subr.mxu0 0.0
    %1347 = vmatpush1.msra.mxu0 %v74
    %1348 = vmatprep.subr.mxu0 0.0
    %1349 = vmatpush1.msra.mxu0 %v73
    %1350 = vmatprep.subr.mxu0 0.0
    %1351 = vmatpush1.msra.mxu0 %v72
    %1352 = vmatprep.subr.mxu0 0.0
    %1353 = vmatpush1.msra.mxu0 %v71
    %1354 = vmatprep.subr.mxu0 0.0
    %1355 = vmatpush1.msra.mxu0 %v70
    %1356 = vmatprep.subr.mxu0 0.0
    %1357 = vmatpush1.msra.mxu0 %v69
    %1358 = vmatprep.subr.mxu0 0.0
    %1359 = vmatpush1.msra.mxu0 %v68
    %1360 = vmatprep.subr.mxu0 0.0
    %1361 = vmatpush1.msra.mxu0 %v67
    %1362 = vmatprep.subr.mxu0 0.0
    %1363 = vmatpush2.msra.mxu0 0.0
    %1364 = vmatprep.subr.mxu0 0.0
    %1365 = vmatpush2.msra.mxu0 0.0
    %1366 = vmatprep.subr.mxu0 0.0
    %1367 = vmatpush2.msra.mxu0 0.0
    %1368 = vmatprep.subr.mxu0 0.0
    %1369 = vmatpush2.msra.mxu0 0.0
    %1370 = vmatprep.subr.mxu0 0.0
    %1371 = vmatpush2.msra.mxu0 0.0
    %1372 = vmatprep.subr.mxu0 0.0
    %1373 = vmatpush2.msra.mxu0 0.0
    %1374 = vmatprep.subr.mxu0 0.0
    %1375 = vmatpush2.msra.mxu0 0.0
    %1376 = vmatprep.subr.mxu0 0.0
    %1377 = vmatpush2.msra.mxu0 0.0
    %1378 = vmatprep.subr.mxu0 0.0
    %1379 = vmatpush2.msra.mxu0 0.0
    %1380 = vmatprep.subr.mxu0 0.0
    %1381 = vmatpush2.msra.mxu0 0.0
    %1382 = vmatprep.subr.mxu0 0.0
    %1383 = vmatpush2.msra.mxu0 0.0
    %1384 = vmatprep.subr.mxu0 0.0
    %1385 = vmatpush2.msra.mxu0 0.0
    %1386 = vmatprep.subr.mxu0 0.0
    %1387 = vmatpush2.msra.mxu0 0.0
    %1388 = vmatprep.subr.mxu0 0.0
    %1389 = vmatpush2.msra.mxu0 0.0
    %1390 = vmatprep.subr.mxu0 0.0
    %1391 = vmatpush2.msra.mxu0 0.0
    %1392 = vmatprep.subr.mxu0 0.0
    %1393 = vmatpush2.msra.mxu0 0.0
    %1394 = vmatprep.mubr.f32.mxu0 0.0
    %1395 = vmatmul.mubr.f32.gmra.mxu0 %v305
    %v1396 = vpop.f32.mrf.mxu0
    %v1397 = vadd.f32 0.0, %v1396
    %v1398 = vpop.f32.mrf.mxu0
    %1399 = vdwg.mxu0
    %v1400 = vadd.f32 %v104, %v1397
    %v1401 = vmul.f32 %v1400, %v380
    %v1403 = vlaneseq
    %v1404 = vshrl.u32 %v1403, 7
    %v1405 = vsub.s32 0, %v1404
    %v1406 = vrot.slane %v87, %v1405
    %v1409 = vsel %vm119, %v1401, 0
    %1411 = vmatprep.subr.mxu0 0.0
    %1412 = vmatpush1.msra.mxu0 0.0
    %1413 = vmatprep.subr.mxu0 0.0
    %1414 = vmatpush1.msra.mxu0 0.0
    %1415 = vmatprep.subr.mxu0 0.0
    %1416 = vmatpush1.msra.mxu0 0.0
    %1417 = vmatprep.subr.mxu0 0.0
    %1418 = vmatpush1.msra.mxu0 0.0
    %1419 = vmatprep.subr.mxu0 0.0
    %1420 = vmatpush1.msra.mxu0 0.0
    %1421 = vmatprep.subr.mxu0 0.0
    %1422 = vmatpush1.msra.mxu0 0.0
    %1423 = vmatprep.subr.mxu0 0.0
    %1424 = vmatpush1.msra.mxu0 0.0
    %1425 = vmatprep.subr.mxu0 0.0
    %1426 = vmatpush1.msra.mxu0 0.0
    %1427 = vmatprep.subr.mxu0 0.0
    %1428 = vmatpush1.msra.mxu0 0.0
    %1429 = vmatprep.subr.mxu0 0.0
    %1430 = vmatpush1.msra.mxu0 0.0
    %1431 = vmatprep.subr.mxu0 0.0
    %1432 = vmatpush1.msra.mxu0 0.0
    %1433 = vmatprep.subr.mxu0 0.0
    %1434 = vmatpush1.msra.mxu0 0.0
    %1435 = vmatprep.subr.mxu0 0.0
    %1436 = vmatpush1.msra.mxu0 %v86
    %1437 = vmatprep.subr.mxu0 0.0
    %1438 = vmatpush1.msra.mxu0 %v85
    %1439 = vmatprep.subr.mxu0 0.0
    %1440 = vmatpush1.msra.mxu0 %v84
    %1441 = vmatprep.subr.mxu0 0.0
    %1442 = vmatpush1.msra.mxu0 %v83
    %1443 = vmatprep.subr.mxu0 0.0
    %1444 = vmatpush2.msra.mxu0 0.0
    %1445 = vmatprep.subr.mxu0 0.0
    %1446 = vmatpush2.msra.mxu0 0.0
    %1447 = vmatprep.subr.mxu0 0.0
    %1448 = vmatpush2.msra.mxu0 0.0
    %1449 = vmatprep.subr.mxu0 0.0
    %1450 = vmatpush2.msra.mxu0 0.0
    %1451 = vmatprep.subr.mxu0 0.0
    %1452 = vmatpush2.msra.mxu0 0.0
    %1453 = vmatprep.subr.mxu0 0.0
    %1454 = vmatpush2.msra.mxu0 0.0
    %1455 = vmatprep.subr.mxu0 0.0
    %1456 = vmatpush2.msra.mxu0 0.0
    %1457 = vmatprep.subr.mxu0 0.0
    %1458 = vmatpush2.msra.mxu0 0.0
    %1459 = vmatprep.subr.mxu0 0.0
    %1460 = vmatpush2.msra.mxu0 0.0
    %1461 = vmatprep.subr.mxu0 0.0
    %1462 = vmatpush2.msra.mxu0 0.0
    %1463 = vmatprep.subr.mxu0 0.0
    %1464 = vmatpush2.msra.mxu0 0.0
    %1465 = vmatprep.subr.mxu0 0.0
    %1466 = vmatpush2.msra.mxu0 0.0
    %1467 = vmatprep.subr.mxu0 0.0
    %1468 = vmatpush2.msra.mxu0 0.0
    %1469 = vmatprep.subr.mxu0 0.0
    %1470 = vmatpush2.msra.mxu0 0.0
    %1471 = vmatprep.subr.mxu0 0.0
    %1472 = vmatpush2.msra.mxu0 0.0
    %1473 = vmatprep.subr.mxu0 0.0
    %1474 = vmatpush2.msra.mxu0 0.0
    %1475 = vmatprep.mubr.f32.mxu0 0.0
    %1476 = vmatmul.mubr.f32.gmra.mxu0 %v1409
    %v1477 = vpop.f32.mrf.mxu0
    %v1478 = vadd.f32 %v1406, %v1477
    %v1479 = vpop.f32.mrf.mxu0
    %1480 = vdwg.mxu0
    %v1481 = vtanh.pop %v1478
    %v1483 = vlaneseq
    %v1484 = vshrl.u32 %v1483, 7
    %v1485 = vsub.s32 0, %v1484
    %v1486 = vrot.slane %v92, %v1485
    %v1489 = vsel %vm119, %v1481, 0
    %1491 = vmatprep.subr.mxu0 0.0
    %1492 = vmatpush1.msra.mxu0 0.0
    %1493 = vmatprep.subr.mxu0 0.0
    %1494 = vmatpush1.msra.mxu0 0.0
    %1495 = vmatprep.subr.mxu0 0.0
    %1496 = vmatpush1.msra.mxu0 0.0
    %1497 = vmatprep.subr.mxu0 0.0
    %1498 = vmatpush1.msra.mxu0 0.0
    %1499 = vmatprep.subr.mxu0 0.0
    %1500 = vmatpush1.msra.mxu0 0.0
    %1501 = vmatprep.subr.mxu0 0.0
    %1502 = vmatpush1.msra.mxu0 0.0
    %1503 = vmatprep.subr.mxu0 0.0
    %1504 = vmatpush1.msra.mxu0 0.0
    %1505 = vmatprep.subr.mxu0 0.0
    %1506 = vmatpush1.msra.mxu0 0.0
    %1507 = vmatprep.subr.mxu0 0.0
    %1508 = vmatpush1.msra.mxu0 0.0
    %1509 = vmatprep.subr.mxu0 0.0
    %1510 = vmatpush1.msra.mxu0 0.0
    %1511 = vmatprep.subr.mxu0 0.0
    %1512 = vmatpush1.msra.mxu0 0.0
    %1513 = vmatprep.subr.mxu0 0.0
    %1514 = vmatpush1.msra.mxu0 0.0
    %1515 = vmatprep.subr.mxu0 0.0
    %1516 = vmatpush1.msra.mxu0 %v91
    %1517 = vmatprep.subr.mxu0 0.0
    %1518 = vmatpush1.msra.mxu0 %v90
    %1519 = vmatprep.subr.mxu0 0.0
    %1520 = vmatpush1.msra.mxu0 %v89
    %1521 = vmatprep.subr.mxu0 0.0
    %1522 = vmatpush1.msra.mxu0 %v88
    %1523 = vmatprep.subr.mxu0 0.0
    %1524 = vmatpush2.msra.mxu0 0.0
    %1525 = vmatprep.subr.mxu0 0.0
    %1526 = vmatpush2.msra.mxu0 0.0
    %1527 = vmatprep.subr.mxu0 0.0
    %1528 = vmatpush2.msra.mxu0 0.0
    %1529 = vmatprep.subr.mxu0 0.0
    %1530 = vmatpush2.msra.mxu0 0.0
    %1531 = vmatprep.subr.mxu0 0.0
    %1532 = vmatpush2.msra.mxu0 0.0
    %1533 = vmatprep.subr.mxu0 0.0
    %1534 = vmatpush2.msra.mxu0 0.0
    %1535 = vmatprep.subr.mxu0 0.0
    %1536 = vmatpush2.msra.mxu0 0.0
    %1537 = vmatprep.subr.mxu0 0.0
    %1538 = vmatpush2.msra.mxu0 0.0
    %1539 = vmatprep.subr.mxu0 0.0
    %1540 = vmatpush2.msra.mxu0 0.0
    %1541 = vmatprep.subr.mxu0 0.0
    %1542 = vmatpush2.msra.mxu0 0.0
    %1543 = vmatprep.subr.mxu0 0.0
    %1544 = vmatpush2.msra.mxu0 0.0
    %1545 = vmatprep.subr.mxu0 0.0
    %1546 = vmatpush2.msra.mxu0 0.0
    %1547 = vmatprep.subr.mxu0 0.0
    %1548 = vmatpush2.msra.mxu0 0.0
    %1549 = vmatprep.subr.mxu0 0.0
    %1550 = vmatpush2.msra.mxu0 0.0
    %1551 = vmatprep.subr.mxu0 0.0
    %1552 = vmatpush2.msra.mxu0 0.0
    %1553 = vmatprep.subr.mxu0 0.0
    %1554 = vmatpush2.msra.mxu0 0.0
    %1555 = vmatprep.mubr.f32.mxu0 0.0
    %1556 = vmatmul.mubr.f32.gmra.mxu0 %v1489
    %v1557 = vpop.f32.mrf.mxu0
    %v1558 = vadd.f32 %v1486, %v1557
    %v1559 = vpop.f32.mrf.mxu0
    %1560 = vdwg.mxu0
    %v1561 = vsel %vm273, %v1558, -inf
    %1562 = vmax.xlane.f32.xlu0 %v1561
    %v1563 = vpop.xlane.xlu0 %1562
    %v1564 = vsub.f32 %v1558, %v1563
    %v1565 = vmul.f32 %v1564, 1.442695
    %v1566 = vpow.pop %v1565
    %v1567 = vsel %vm273, %v1566, 0.0
    %1568 = vadd.xlane.f32.xlu0 %v1567
    %v1569 = vpop.xlane.xlu0 %1568
    %v1570 = vlog2.pop %v1569
    %v1571 = vmul.f32 %v1570, 0.6931472
    %v1572 = vadd.f32 %v1563, %v1571
    %vm1573 = vcmp.eq.f32.partialorder %v1558, %v1563
    %v1574 = vsel %vm1573, %v94, 128
    %v1575 = vsel %vm273, %v1574, 2147483647
    %v1576 = vand.u32 %v1575, 65535
    %v1577 = vshra.s32 %v1575, 16
    %v1578 = vcvt.s32.f32 %v1576
    %v1579 = vcvt.s32.f32 %v1577
    %1580 = vmin.xlane.f32.xlu0 %v1579
    %v1581 = vpop.xlane.xlu0 %1580
    %vm1582 = vcmp.eq.f32.partialorder %v1579, %v1581
    %v1583 = vsel %vm1582, %v1578, inf
    %1584 = vmin.xlane.f32.xlu0 %v1583
    %v1585 = vpop.xlane.xlu0 %1584
    %v1586 = vcvt.f32.s32 %v1585
    %v1587 = vcvt.f32.s32 %v1581
    %v1588 = vshll.u32 %v1587, 16
    %v1589 = vadd.s32 %v1588, %v1586
    %v1590 = vmul.f32 %v1558, %v305
    %v1591 = vsel %vm273, %v1590, 0.0
    %1592 = vadd.xlane.f32.xlu0 %v1591
    %v1593 = vpop.xlane.xlu0 %1592
    %v1594 = vsub.f32 %v1593, %v1572
    %vm1595 = vcmp.ge.f32.partialorder %v1594, %v306
    %v1596 = vsel %vm1595, %v302, %v1589
    %vm1597 = vcmp.eq.s32.totalorder %v94, %v1589
    %v1598 = vsel %vm1597, 1, 0
    %v1599 = vcvt.s32.f32 %v1598
    %v1600 = vsel %vm1595, 1, 0
    %vm1601 = vcmp.eq.s32.totalorder %v1600, 1
    %v1602 = vsel %vm1601, %v305, %v1599
    %v1603 = vadd.f32 %v1602, 0.0
    %vm1604 = vcmp.eq.s32.totalorder %v94, 0
    %v1605 = vsel %vm1604, %v1596, 0
    %1606 = vmatprep.subr.mxu0 0.0
    %1607 = vmatpush1.msra.mxu0 %v82
    %1608 = vmatprep.subr.mxu0 0.0
    %1609 = vmatpush1.msra.mxu0 %v81
    %1610 = vmatprep.subr.mxu0 0.0
    %1611 = vmatpush1.msra.mxu0 %v80
    %1612 = vmatprep.subr.mxu0 0.0
    %1613 = vmatpush1.msra.mxu0 %v79
    %1614 = vmatprep.subr.mxu0 0.0
    %1615 = vmatpush1.msra.mxu0 %v78
    %1616 = vmatprep.subr.mxu0 0.0
    %1617 = vmatpush1.msra.mxu0 %v77
    %1618 = vmatprep.subr.mxu0 0.0
    %1619 = vmatpush1.msra.mxu0 %v76
    %1620 = vmatprep.subr.mxu0 0.0
    %1621 = vmatpush1.msra.mxu0 %v75
    %1622 = vmatprep.subr.mxu0 0.0
    %1623 = vmatpush1.msra.mxu0 %v74
    %1624 = vmatprep.subr.mxu0 0.0
    %1625 = vmatpush1.msra.mxu0 %v73
    %1626 = vmatprep.subr.mxu0 0.0
    %1627 = vmatpush1.msra.mxu0 %v72
    %1628 = vmatprep.subr.mxu0 0.0
    %1629 = vmatpush1.msra.mxu0 %v71
    %1630 = vmatprep.subr.mxu0 0.0
    %1631 = vmatpush1.msra.mxu0 %v70
    %1632 = vmatprep.subr.mxu0 0.0
    %1633 = vmatpush1.msra.mxu0 %v69
    %1634 = vmatprep.subr.mxu0 0.0
    %1635 = vmatpush1.msra.mxu0 %v68
    %1636 = vmatprep.subr.mxu0 0.0
    %1637 = vmatpush1.msra.mxu0 %v67
    %1638 = vmatprep.subr.mxu0 0.0
    %1639 = vmatpush2.msra.mxu0 0.0
    %1640 = vmatprep.subr.mxu0 0.0
    %1641 = vmatpush2.msra.mxu0 0.0
    %1642 = vmatprep.subr.mxu0 0.0
    %1643 = vmatpush2.msra.mxu0 0.0
    %1644 = vmatprep.subr.mxu0 0.0
    %1645 = vmatpush2.msra.mxu0 0.0
    %1646 = vmatprep.subr.mxu0 0.0
    %1647 = vmatpush2.msra.mxu0 0.0
    %1648 = vmatprep.subr.mxu0 0.0
    %1649 = vmatpush2.msra.mxu0 0.0
    %1650 = vmatprep.subr.mxu0 0.0
    %1651 = vmatpush2.msra.mxu0 0.0
    %1652 = vmatprep.subr.mxu0 0.0
    %1653 = vmatpush2.msra.mxu0 0.0
    %1654 = vmatprep.subr.mxu0 0.0
    %1655 = vmatpush2.msra.mxu0 0.0
    %1656 = vmatprep.subr.mxu0 0.0
    %1657 = vmatpush2.msra.mxu0 0.0
    %1658 = vmatprep.subr.mxu0 0.0
    %1659 = vmatpush2.msra.mxu0 0.0
    %1660 = vmatprep.subr.mxu0 0.0
    %1661 = vmatpush2.msra.mxu0 0.0
    %1662 = vmatprep.subr.mxu0 0.0
    %1663 = vmatpush2.msra.mxu0 0.0
    %1664 = vmatprep.subr.mxu0 0.0
    %1665 = vmatpush2.msra.mxu0 0.0
    %1666 = vmatprep.subr.mxu0 0.0
    %1667 = vmatpush2.msra.mxu0 0.0
    %1668 = vmatprep.subr.mxu0 0.0
    %1669 = vmatpush2.msra.mxu0 0.0
    %1670 = vmatprep.mubr.f32.mxu0 0.0
    %1671 = vmatmul.mubr.f32.gmra.mxu0 %v560
    %v1672 = vpop.f32.mrf.mxu0
    %v1673 = vadd.f32 0.0, %v1672
    %v1674 = vpop.f32.mrf.mxu0
    %1675 = vdwg.mxu0
    %v1676 = vadd.f32 %v1397, %v1673
    %v1677 = vadd.f32 %v104, %v1676
    %v1678 = vmul.f32 %v1677, %v636
    %v1680 = vsel %vm119, %v1678, 0
    %1682 = vmatprep.subr.mxu0 0.0
    %1683 = vmatpush1.msra.mxu0 0.0
    %1684 = vmatprep.subr.mxu0 0.0
    %1685 = vmatpush1.msra.mxu0 0.0
    %1686 = vmatprep.subr.mxu0 0.0
    %1687 = vmatpush1.msra.mxu0 0.0
    %1688 = vmatprep.subr.mxu0 0.0
    %1689 = vmatpush1.msra.mxu0 0.0
    %1690 = vmatprep.subr.mxu0 0.0
    %1691 = vmatpush1.msra.mxu0 0.0
    %1692 = vmatprep.subr.mxu0 0.0
    %1693 = vmatpush1.msra.mxu0 0.0
    %1694 = vmatprep.subr.mxu0 0.0
    %1695 = vmatpush1.msra.mxu0 0.0
    %1696 = vmatprep.subr.mxu0 0.0
    %1697 = vmatpush1.msra.mxu0 0.0
    %1698 = vmatprep.subr.mxu0 0.0
    %1699 = vmatpush1.msra.mxu0 0.0
    %1700 = vmatprep.subr.mxu0 0.0
    %1701 = vmatpush1.msra.mxu0 0.0
    %1702 = vmatprep.subr.mxu0 0.0
    %1703 = vmatpush1.msra.mxu0 0.0
    %1704 = vmatprep.subr.mxu0 0.0
    %1705 = vmatpush1.msra.mxu0 0.0
    %1706 = vmatprep.subr.mxu0 0.0
    %1707 = vmatpush1.msra.mxu0 %v86
    %1708 = vmatprep.subr.mxu0 0.0
    %1709 = vmatpush1.msra.mxu0 %v85
    %1710 = vmatprep.subr.mxu0 0.0
    %1711 = vmatpush1.msra.mxu0 %v84
    %1712 = vmatprep.subr.mxu0 0.0
    %1713 = vmatpush1.msra.mxu0 %v83
    %1714 = vmatprep.subr.mxu0 0.0
    %1715 = vmatpush2.msra.mxu0 0.0
    %1716 = vmatprep.subr.mxu0 0.0
    %1717 = vmatpush2.msra.mxu0 0.0
    %1718 = vmatprep.subr.mxu0 0.0
    %1719 = vmatpush2.msra.mxu0 0.0
    %1720 = vmatprep.subr.mxu0 0.0
    %1721 = vmatpush2.msra.mxu0 0.0
    %1722 = vmatprep.subr.mxu0 0.0
    %1723 = vmatpush2.msra.mxu0 0.0
    %1724 = vmatprep.subr.mxu0 0.0
    %1725 = vmatpush2.msra.mxu0 0.0
    %1726 = vmatprep.subr.mxu0 0.0
    %1727 = vmatpush2.msra.mxu0 0.0
    %1728 = vmatprep.subr.mxu0 0.0
    %1729 = vmatpush2.msra.mxu0 0.0
    %1730 = vmatprep.subr.mxu0 0.0
    %1731 = vmatpush2.msra.mxu0 0.0
    %1732 = vmatprep.subr.mxu0 0.0
    %1733 = vmatpush2.msra.mxu0 0.0
    %1734 = vmatprep.subr.mxu0 0.0
    %1735 = vmatpush2.msra.mxu0 0.0
    %1736 = vmatprep.subr.mxu0 0.0
    %1737 = vmatpush2.msra.mxu0 0.0
    %1738 = vmatprep.subr.mxu0 0.0
    %1739 = vmatpush2.msra.mxu0 0.0
    %1740 = vmatprep.subr.mxu0 0.0
    %1741 = vmatpush2.msra.mxu0 0.0
    %1742 = vmatprep.subr.mxu0 0.0
    %1743 = vmatpush2.msra.mxu0 0.0
    %1744 = vmatprep.subr.mxu0 0.0
    %1745 = vmatpush2.msra.mxu0 0.0
    %1746 = vmatprep.mubr.f32.mxu0 0.0
    %1747 = vmatmul.mubr.f32.gmra.mxu0 %v1680
    %v1748 = vpop.f32.mrf.mxu0
    %v1749 = vadd.f32 %v1406, %v1748
    %v1750 = vpop.f32.mrf.mxu0
    %1751 = vdwg.mxu0
    %v1752 = vtanh.pop %v1749
    %v1754 = vsel %vm119, %v1752, 0
    %1756 = vmatprep.subr.mxu0 0.0
    %1757 = vmatpush1.msra.mxu0 0.0
    %1758 = vmatprep.subr.mxu0 0.0
    %1759 = vmatpush1.msra.mxu0 0.0
    %1760 = vmatprep.subr.mxu0 0.0
    %1761 = vmatpush1.msra.mxu0 0.0
    %1762 = vmatprep.subr.mxu0 0.0
    %1763 = vmatpush1.msra.mxu0 0.0
    %1764 = vmatprep.subr.mxu0 0.0
    %1765 = vmatpush1.msra.mxu0 0.0
    %1766 = vmatprep.subr.mxu0 0.0
    %1767 = vmatpush1.msra.mxu0 0.0
    %1768 = vmatprep.subr.mxu0 0.0
    %1769 = vmatpush1.msra.mxu0 0.0
    %1770 = vmatprep.subr.mxu0 0.0
    %1771 = vmatpush1.msra.mxu0 0.0
    %1772 = vmatprep.subr.mxu0 0.0
    %1773 = vmatpush1.msra.mxu0 0.0
    %1774 = vmatprep.subr.mxu0 0.0
    %1775 = vmatpush1.msra.mxu0 0.0
    %1776 = vmatprep.subr.mxu0 0.0
    %1777 = vmatpush1.msra.mxu0 0.0
    %1778 = vmatprep.subr.mxu0 0.0
    %1779 = vmatpush1.msra.mxu0 0.0
    %1780 = vmatprep.subr.mxu0 0.0
    %1781 = vmatpush1.msra.mxu0 %v91
    %1782 = vmatprep.subr.mxu0 0.0
    %1783 = vmatpush1.msra.mxu0 %v90
    %1784 = vmatprep.subr.mxu0 0.0
    %1785 = vmatpush1.msra.mxu0 %v89
    %1786 = vmatprep.subr.mxu0 0.0
    %1787 = vmatpush1.msra.mxu0 %v88
    %1788 = vmatprep.subr.mxu0 0.0
    %1789 = vmatpush2.msra.mxu0 0.0
    %1790 = vmatprep.subr.mxu0 0.0
    %1791 = vmatpush2.msra.mxu0 0.0
    %1792 = vmatprep.subr.mxu0 0.0
    %1793 = vmatpush2.msra.mxu0 0.0
    %1794 = vmatprep.subr.mxu0 0.0
    %1795 = vmatpush2.msra.mxu0 0.0
    %1796 = vmatprep.subr.mxu0 0.0
    %1797 = vmatpush2.msra.mxu0 0.0
    %1798 = vmatprep.subr.mxu0 0.0
    %1799 = vmatpush2.msra.mxu0 0.0
    %1800 = vmatprep.subr.mxu0 0.0
    %1801 = vmatpush2.msra.mxu0 0.0
    %1802 = vmatprep.subr.mxu0 0.0
    %1803 = vmatpush2.msra.mxu0 0.0
    %1804 = vmatprep.subr.mxu0 0.0
    %1805 = vmatpush2.msra.mxu0 0.0
    %1806 = vmatprep.subr.mxu0 0.0
    %1807 = vmatpush2.msra.mxu0 0.0
    %1808 = vmatprep.subr.mxu0 0.0
    %1809 = vmatpush2.msra.mxu0 0.0
    %1810 = vmatprep.subr.mxu0 0.0
    %1811 = vmatpush2.msra.mxu0 0.0
    %1812 = vmatprep.subr.mxu0 0.0
    %1813 = vmatpush2.msra.mxu0 0.0
    %1814 = vmatprep.subr.mxu0 0.0
    %1815 = vmatpush2.msra.mxu0 0.0
    %1816 = vmatprep.subr.mxu0 0.0
    %1817 = vmatpush2.msra.mxu0 0.0
    %1818 = vmatprep.subr.mxu0 0.0
    %1819 = vmatpush2.msra.mxu0 0.0
    %1820 = vmatprep.mubr.f32.mxu0 0.0
    %1821 = vmatmul.mubr.f32.gmra.mxu0 %v1754
    %v1822 = vpop.f32.mrf.mxu0
    %v1823 = vadd.f32 %v1486, %v1822
    %v1824 = vpop.f32.mrf.mxu0
    %1825 = vdwg.mxu0
    %v1826 = vsel %vm273, %v1823, -inf
    %1827 = vmax.xlane.f32.xlu0 %v1826
    %v1828 = vpop.xlane.xlu0 %1827
    %v1829 = vsub.f32 %v1823, %v1828
    %v1830 = vmul.f32 %v1829, 1.442695
    %v1831 = vpow.pop %v1830
    %v1832 = vsel %vm273, %v1831, 0.0
    %1833 = vadd.xlane.f32.xlu0 %v1832
    %v1834 = vpop.xlane.xlu0 %1833
    %v1835 = vlog2.pop %v1834
    %v1836 = vmul.f32 %v1835, 0.6931472
    %v1837 = vadd.f32 %v1828, %v1836
    %vm1838 = vcmp.eq.f32.partialorder %v1823, %v1828
    %v1839 = vsel %vm1838, %v94, 128
    %v1840 = vsel %vm273, %v1839, 2147483647
    %v1841 = vand.u32 %v1840, 65535
    %v1842 = vshra.s32 %v1840, 16
    %v1843 = vcvt.s32.f32 %v1841
    %v1844 = vcvt.s32.f32 %v1842
    %1845 = vmin.xlane.f32.xlu0 %v1844
    %v1846 = vpop.xlane.xlu0 %1845
    %vm1847 = vcmp.eq.f32.partialorder %v1844, %v1846
    %v1848 = vsel %vm1847, %v1843, inf
    %1849 = vmin.xlane.f32.xlu0 %v1848
    %v1850 = vpop.xlane.xlu0 %1849
    %v1851 = vcvt.f32.s32 %v1850
    %v1852 = vcvt.f32.s32 %v1846
    %v1853 = vshll.u32 %v1852, 16
    %v1854 = vadd.s32 %v1853, %v1851
    %v1855 = vmul.f32 %v1823, %v560
    %v1856 = vsel %vm273, %v1855, 0.0
    %1857 = vadd.xlane.f32.xlu0 %v1856
    %v1858 = vpop.xlane.xlu0 %1857
    %v1859 = vsub.f32 %v1858, %v1837
    %vm1860 = vcmp.ge.f32.partialorder %v1859, %v561
    %v1861 = vsel %vm1860, %v557, %v1854
    %vm1862 = vcmp.eq.s32.totalorder %v94, %v1854
    %v1863 = vsel %vm1862, 1, 0
    %v1864 = vcvt.s32.f32 %v1863
    %v1865 = vsel %vm1860, 1, 0
    %vm1866 = vcmp.eq.s32.totalorder %v1865, 1
    %v1867 = vsel %vm1866, %v560, %v1864
    %v1868 = vadd.f32 %v1603, %v1867
    %vm1869 = vcmp.eq.s32.totalorder %v94, 1
    %v1870 = vsel %vm1869, %v1861, %v1605
    %1871 = vmatprep.subr.mxu0 0.0
    %1872 = vmatpush1.msra.mxu0 %v82
    %1873 = vmatprep.subr.mxu0 0.0
    %1874 = vmatpush1.msra.mxu0 %v81
    %1875 = vmatprep.subr.mxu0 0.0
    %1876 = vmatpush1.msra.mxu0 %v80
    %1877 = vmatprep.subr.mxu0 0.0
    %1878 = vmatpush1.msra.mxu0 %v79
    %1879 = vmatprep.subr.mxu0 0.0
    %1880 = vmatpush1.msra.mxu0 %v78
    %1881 = vmatprep.subr.mxu0 0.0
    %1882 = vmatpush1.msra.mxu0 %v77
    %1883 = vmatprep.subr.mxu0 0.0
    %1884 = vmatpush1.msra.mxu0 %v76
    %1885 = vmatprep.subr.mxu0 0.0
    %1886 = vmatpush1.msra.mxu0 %v75
    %1887 = vmatprep.subr.mxu0 0.0
    %1888 = vmatpush1.msra.mxu0 %v74
    %1889 = vmatprep.subr.mxu0 0.0
    %1890 = vmatpush1.msra.mxu0 %v73
    %1891 = vmatprep.subr.mxu0 0.0
    %1892 = vmatpush1.msra.mxu0 %v72
    %1893 = vmatprep.subr.mxu0 0.0
    %1894 = vmatpush1.msra.mxu0 %v71
    %1895 = vmatprep.subr.mxu0 0.0
    %1896 = vmatpush1.msra.mxu0 %v70
    %1897 = vmatprep.subr.mxu0 0.0
    %1898 = vmatpush1.msra.mxu0 %v69
    %1899 = vmatprep.subr.mxu0 0.0
    %1900 = vmatpush1.msra.mxu0 %v68
    %1901 = vmatprep.subr.mxu0 0.0
    %1902 = vmatpush1.msra.mxu0 %v67
    %1903 = vmatprep.subr.mxu0 0.0
    %1904 = vmatpush2.msra.mxu0 0.0
    %1905 = vmatprep.subr.mxu0 0.0
    %1906 = vmatpush2.msra.mxu0 0.0
    %1907 = vmatprep.subr.mxu0 0.0
    %1908 = vmatpush2.msra.mxu0 0.0
    %1909 = vmatprep.subr.mxu0 0.0
    %1910 = vmatpush2.msra.mxu0 0.0
    %1911 = vmatprep.subr.mxu0 0.0
    %1912 = vmatpush2.msra.mxu0 0.0
    %1913 = vmatprep.subr.mxu0 0.0
    %1914 = vmatpush2.msra.mxu0 0.0
    %1915 = vmatprep.subr.mxu0 0.0
    %1916 = vmatpush2.msra.mxu0 0.0
    %1917 = vmatprep.subr.mxu0 0.0
    %1918 = vmatpush2.msra.mxu0 0.0
    %1919 = vmatprep.subr.mxu0 0.0
    %1920 = vmatpush2.msra.mxu0 0.0
    %1921 = vmatprep.subr.mxu0 0.0
    %1922 = vmatpush2.msra.mxu0 0.0
    %1923 = vmatprep.subr.mxu0 0.0
    %1924 = vmatpush2.msra.mxu0 0.0
    %1925 = vmatprep.subr.mxu0 0.0
    %1926 = vmatpush2.msra.mxu0 0.0
    %1927 = vmatprep.subr.mxu0 0.0
    %1928 = vmatpush2.msra.mxu0 0.0
    %1929 = vmatprep.subr.mxu0 0.0
    %1930 = vmatpush2.msra.mxu0 0.0
    %1931 = vmatprep.subr.mxu0 0.0
    %1932 = vmatpush2.msra.mxu0 0.0
    %1933 = vmatprep.subr.mxu0 0.0
    %1934 = vmatpush2.msra.mxu0 0.0
    %1935 = vmatprep.mubr.f32.mxu0 0.0
    %1936 = vmatmul.mubr.f32.gmra.mxu0 %v816
    %v1937 = vpop.f32.mrf.mxu0
    %v1938 = vadd.f32 0.0, %v1937
    %v1939 = vpop.f32.mrf.mxu0
    %1940 = vdwg.mxu0
    %v1941 = vadd.f32 %v1676, %v1938
    %v1942 = vadd.f32 %v104, %v1941
    %v1943 = vmul.f32 %v1942, %v892
    %v1945 = vsel %vm119, %v1943, 0
    %1947 = vmatprep.subr.mxu0 0.0
    %1948 = vmatpush1.msra.mxu0 0.0
    %1949 = vmatprep.subr.mxu0 0.0
    %1950 = vmatpush1.msra.mxu0 0.0
    %1951 = vmatprep.subr.mxu0 0.0
    %1952 = vmatpush1.msra.mxu0 0.0
    %1953 = vmatprep.subr.mxu0 0.0
    %1954 = vmatpush1.msra.mxu0 0.0
    %1955 = vmatprep.subr.mxu0 0.0
    %1956 = vmatpush1.msra.mxu0 0.0
    %1957 = vmatprep.subr.mxu0 0.0
    %1958 = vmatpush1.msra.mxu0 0.0
    %1959 = vmatprep.subr.mxu0 0.0
    %1960 = vmatpush1.msra.mxu0 0.0
    %1961 = vmatprep.subr.mxu0 0.0
    %1962 = vmatpush1.msra.mxu0 0.0
    %1963 = vmatprep.subr.mxu0 0.0
    %1964 = vmatpush1.msra.mxu0 0.0
    %1965 = vmatprep.subr.mxu0 0.0
    %1966 = vmatpush1.msra.mxu0 0.0
    %1967 = vmatprep.subr.mxu0 0.0
    %1968 = vmatpush1.msra.mxu0 0.0
    %1969 = vmatprep.subr.mxu0 0.0
    %1970 = vmatpush1.msra.mxu0 0.0
    %1971 = vmatprep.subr.mxu0 0.0
    %1972 = vmatpush1.msra.mxu0 %v86
    %1973 = vmatprep.subr.mxu0 0.0
    %1974 = vmatpush1.msra.mxu0 %v85
    %1975 = vmatprep.subr.mxu0 0.0
    %1976 = vmatpush1.msra.mxu0 %v84
    %1977 = vmatprep.subr.mxu0 0.0
    %1978 = vmatpush1.msra.mxu0 %v83
    %1979 = vmatprep.subr.mxu0 0.0
    %1980 = vmatpush2.msra.mxu0 0.0
    %1981 = vmatprep.subr.mxu0 0.0
    %1982 = vmatpush2.msra.mxu0 0.0
    %1983 = vmatprep.subr.mxu0 0.0
    %1984 = vmatpush2.msra.mxu0 0.0
    %1985 = vmatprep.subr.mxu0 0.0
    %1986 = vmatpush2.msra.mxu0 0.0
    %1987 = vmatprep.subr.mxu0 0.0
    %1988 = vmatpush2.msra.mxu0 0.0
    %1989 = vmatprep.subr.mxu0 0.0
    %1990 = vmatpush2.msra.mxu0 0.0
    %1991 = vmatprep.subr.mxu0 0.0
    %1992 = vmatpush2.msra.mxu0 0.0
    %1993 = vmatprep.subr.mxu0 0.0
    %1994 = vmatpush2.msra.mxu0 0.0
    %1995 = vmatprep.subr.mxu0 0.0
    %1996 = vmatpush2.msra.mxu0 0.0
    %1997 = vmatprep.subr.mxu0 0.0
    %1998 = vmatpush2.msra.mxu0 0.0
    %1999 = vmatprep.subr.mxu0 0.0
    %2000 = vmatpush2.msra.mxu0 0.0
    %2001 = vmatprep.subr.mxu0 0.0
    %2002 = vmatpush2.msra.mxu0 0.0
    %2003 = vmatprep.subr.mxu0 0.0
    %2004 = vmatpush2.msra.mxu0 0.0
    %2005 = vmatprep.subr.mxu0 0.0
    %2006 = vmatpush2.msra.mxu0 0.0
    %2007 = vmatprep.subr.mxu0 0.0
    %2008 = vmatpush2.msra.mxu0 0.0
    %2009 = vmatprep.subr.mxu0 0.0
    %2010 = vmatpush2.msra.mxu0 0.0
    %2011 = vmatprep.mubr.f32.mxu0 0.0
    %2012 = vmatmul.mubr.f32.gmra.mxu0 %v1945
    %v2013 = vpop.f32.mrf.mxu0
    %v2014 = vadd.f32 %v1406, %v2013
    %v2015 = vpop.f32.mrf.mxu0
    %2016 = vdwg.mxu0
    %v2017 = vtanh.pop %v2014
    %v2019 = vsel %vm119, %v2017, 0
    %2021 = vmatprep.subr.mxu0 0.0
    %2022 = vmatpush1.msra.mxu0 0.0
    %2023 = vmatprep.subr.mxu0 0.0
    %2024 = vmatpush1.msra.mxu0 0.0
    %2025 = vmatprep.subr.mxu0 0.0
    %2026 = vmatpush1.msra.mxu0 0.0
    %2027 = vmatprep.subr.mxu0 0.0
    %2028 = vmatpush1.msra.mxu0 0.0
    %2029 = vmatprep.subr.mxu0 0.0
    %2030 = vmatpush1.msra.mxu0 0.0
    %2031 = vmatprep.subr.mxu0 0.0
    %2032 = vmatpush1.msra.mxu0 0.0
    %2033 = vmatprep.subr.mxu0 0.0
    %2034 = vmatpush1.msra.mxu0 0.0
    %2035 = vmatprep.subr.mxu0 0.0
    %2036 = vmatpush1.msra.mxu0 0.0
    %2037 = vmatprep.subr.mxu0 0.0
    %2038 = vmatpush1.msra.mxu0 0.0
    %2039 = vmatprep.subr.mxu0 0.0
    %2040 = vmatpush1.msra.mxu0 0.0
    %2041 = vmatprep.subr.mxu0 0.0
    %2042 = vmatpush1.msra.mxu0 0.0
    %2043 = vmatprep.subr.mxu0 0.0
    %2044 = vmatpush1.msra.mxu0 0.0
    %2045 = vmatprep.subr.mxu0 0.0
    %2046 = vmatpush1.msra.mxu0 %v91
    %2047 = vmatprep.subr.mxu0 0.0
    %2048 = vmatpush1.msra.mxu0 %v90
    %2049 = vmatprep.subr.mxu0 0.0
    %2050 = vmatpush1.msra.mxu0 %v89
    %2051 = vmatprep.subr.mxu0 0.0
    %2052 = vmatpush1.msra.mxu0 %v88
    %2053 = vmatprep.subr.mxu0 0.0
    %2054 = vmatpush2.msra.mxu0 0.0
    %2055 = vmatprep.subr.mxu0 0.0
    %2056 = vmatpush2.msra.mxu0 0.0
    %2057 = vmatprep.subr.mxu0 0.0
    %2058 = vmatpush2.msra.mxu0 0.0
    %2059 = vmatprep.subr.mxu0 0.0
    %2060 = vmatpush2.msra.mxu0 0.0
    %2061 = vmatprep.subr.mxu0 0.0
    %2062 = vmatpush2.msra.mxu0 0.0
    %2063 = vmatprep.subr.mxu0 0.0
    %2064 = vmatpush2.msra.mxu0 0.0
    %2065 = vmatprep.subr.mxu0 0.0
    %2066 = vmatpush2.msra.mxu0 0.0
    %2067 = vmatprep.subr.mxu0 0.0
    %2068 = vmatpush2.msra.mxu0 0.0
    %2069 = vmatprep.subr.mxu0 0.0
    %2070 = vmatpush2.msra.mxu0 0.0
    %2071 = vmatprep.subr.mxu0 0.0
    %2072 = vmatpush2.msra.mxu0 0.0
    %2073 = vmatprep.subr.mxu0 0.0
    %2074 = vmatpush2.msra.mxu0 0.0
    %2075 = vmatprep.subr.mxu0 0.0
    %2076 = vmatpush2.msra.mxu0 0.0
    %2077 = vmatprep.subr.mxu0 0.0
    %2078 = vmatpush2.msra.mxu0 0.0
    %2079 = vmatprep.subr.mxu0 0.0
    %2080 = vmatpush2.msra.mxu0 0.0
    %2081 = vmatprep.subr.mxu0 0.0
    %2082 = vmatpush2.msra.mxu0 0.0
    %2083 = vmatprep.subr.mxu0 0.0
    %2084 = vmatpush2.msra.mxu0 0.0
    %2085 = vmatprep.mubr.f32.mxu0 0.0
    %2086 = vmatmul.mubr.f32.gmra.mxu0 %v2019
    %v2087 = vpop.f32.mrf.mxu0
    %v2088 = vadd.f32 %v1486, %v2087
    %v2089 = vpop.f32.mrf.mxu0
    %2090 = vdwg.mxu0
    %v2091 = vsel %vm273, %v2088, -inf
    %2092 = vmax.xlane.f32.xlu0 %v2091
    %v2093 = vpop.xlane.xlu0 %2092
    %v2094 = vsub.f32 %v2088, %v2093
    %v2095 = vmul.f32 %v2094, 1.442695
    %v2096 = vpow.pop %v2095
    %v2097 = vsel %vm273, %v2096, 0.0
    %2098 = vadd.xlane.f32.xlu0 %v2097
    %v2099 = vpop.xlane.xlu0 %2098
    %v2100 = vlog2.pop %v2099
    %v2101 = vmul.f32 %v2100, 0.6931472
    %v2102 = vadd.f32 %v2093, %v2101
    %vm2103 = vcmp.eq.f32.partialorder %v2088, %v2093
    %v2104 = vsel %vm2103, %v94, 128
    %v2105 = vsel %vm273, %v2104, 2147483647
    %v2106 = vand.u32 %v2105, 65535
    %v2107 = vshra.s32 %v2105, 16
    %v2108 = vcvt.s32.f32 %v2106
    %v2109 = vcvt.s32.f32 %v2107
    %2110 = vmin.xlane.f32.xlu0 %v2109
    %v2111 = vpop.xlane.xlu0 %2110
    %vm2112 = vcmp.eq.f32.partialorder %v2109, %v2111
    %v2113 = vsel %vm2112, %v2108, inf
    %2114 = vmin.xlane.f32.xlu0 %v2113
    %v2115 = vpop.xlane.xlu0 %2114
    %v2116 = vcvt.f32.s32 %v2115
    %v2117 = vcvt.f32.s32 %v2111
    %v2118 = vshll.u32 %v2117, 16
    %v2119 = vadd.s32 %v2118, %v2116
    %v2120 = vmul.f32 %v2088, %v816
    %v2121 = vsel %vm273, %v2120, 0.0
    %2122 = vadd.xlane.f32.xlu0 %v2121
    %v2123 = vpop.xlane.xlu0 %2122
    %v2124 = vsub.f32 %v2123, %v2102
    %vm2125 = vcmp.ge.f32.partialorder %v2124, %v817
    %v2126 = vsel %vm2125, %v813, %v2119
    %vm2127 = vcmp.eq.s32.totalorder %v94, %v2119
    %v2128 = vsel %vm2127, 1, 0
    %v2129 = vcvt.s32.f32 %v2128
    %v2130 = vsel %vm2125, 1, 0
    %vm2131 = vcmp.eq.s32.totalorder %v2130, 1
    %v2132 = vsel %vm2131, %v816, %v2129
    %v2133 = vadd.f32 %v1868, %v2132
    %vm2134 = vcmp.eq.s32.totalorder %v94, 2
    %v2135 = vsel %vm2134, %v2126, %v1870
    %2136 = vmatprep.subr.mxu0 0.0
    %2137 = vmatpush1.msra.mxu0 %v82
    %2138 = vmatprep.subr.mxu0 0.0
    %2139 = vmatpush1.msra.mxu0 %v81
    %2140 = vmatprep.subr.mxu0 0.0
    %2141 = vmatpush1.msra.mxu0 %v80
    %2142 = vmatprep.subr.mxu0 0.0
    %2143 = vmatpush1.msra.mxu0 %v79
    %2144 = vmatprep.subr.mxu0 0.0
    %2145 = vmatpush1.msra.mxu0 %v78
    %2146 = vmatprep.subr.mxu0 0.0
    %2147 = vmatpush1.msra.mxu0 %v77
    %2148 = vmatprep.subr.mxu0 0.0
    %2149 = vmatpush1.msra.mxu0 %v76
    %2150 = vmatprep.subr.mxu0 0.0
    %2151 = vmatpush1.msra.mxu0 %v75
    %2152 = vmatprep.subr.mxu0 0.0
    %2153 = vmatpush1.msra.mxu0 %v74
    %2154 = vmatprep.subr.mxu0 0.0
    %2155 = vmatpush1.msra.mxu0 %v73
    %2156 = vmatprep.subr.mxu0 0.0
    %2157 = vmatpush1.msra.mxu0 %v72
    %2158 = vmatprep.subr.mxu0 0.0
    %2159 = vmatpush1.msra.mxu0 %v71
    %2160 = vmatprep.subr.mxu0 0.0
    %2161 = vmatpush1.msra.mxu0 %v70
    %2162 = vmatprep.subr.mxu0 0.0
    %2163 = vmatpush1.msra.mxu0 %v69
    %2164 = vmatprep.subr.mxu0 0.0
    %2165 = vmatpush1.msra.mxu0 %v68
    %2166 = vmatprep.subr.mxu0 0.0
    %2167 = vmatpush1.msra.mxu0 %v67
    %2168 = vmatprep.subr.mxu0 0.0
    %2169 = vmatpush2.msra.mxu0 0.0
    %2170 = vmatprep.subr.mxu0 0.0
    %2171 = vmatpush2.msra.mxu0 0.0
    %2172 = vmatprep.subr.mxu0 0.0
    %2173 = vmatpush2.msra.mxu0 0.0
    %2174 = vmatprep.subr.mxu0 0.0
    %2175 = vmatpush2.msra.mxu0 0.0
    %2176 = vmatprep.subr.mxu0 0.0
    %2177 = vmatpush2.msra.mxu0 0.0
    %2178 = vmatprep.subr.mxu0 0.0
    %2179 = vmatpush2.msra.mxu0 0.0
    %2180 = vmatprep.subr.mxu0 0.0
    %2181 = vmatpush2.msra.mxu0 0.0
    %2182 = vmatprep.subr.mxu0 0.0
    %2183 = vmatpush2.msra.mxu0 0.0
    %2184 = vmatprep.subr.mxu0 0.0
    %2185 = vmatpush2.msra.mxu0 0.0
    %2186 = vmatprep.subr.mxu0 0.0
    %2187 = vmatpush2.msra.mxu0 0.0
    %2188 = vmatprep.subr.mxu0 0.0
    %2189 = vmatpush2.msra.mxu0 0.0
    %2190 = vmatprep.subr.mxu0 0.0
    %2191 = vmatpush2.msra.mxu0 0.0
    %2192 = vmatprep.subr.mxu0 0.0
    %2193 = vmatpush2.msra.mxu0 0.0
    %2194 = vmatprep.subr.mxu0 0.0
    %2195 = vmatpush2.msra.mxu0 0.0
    %2196 = vmatprep.subr.mxu0 0.0
    %2197 = vmatpush2.msra.mxu0 0.0
    %2198 = vmatprep.subr.mxu0 0.0
    %2199 = vmatpush2.msra.mxu0 0.0
    %2200 = vmatprep.mubr.f32.mxu0 0.0
    %2201 = vmatmul.mubr.f32.gmra.mxu0 %v1072
    %v2202 = vpop.f32.mrf.mxu0
    %v2203 = vadd.f32 0.0, %v2202
    %v2204 = vpop.f32.mrf.mxu0
    %2205 = vdwg.mxu0
    %v2206 = vadd.f32 %v1941, %v2203
    %v2207 = vadd.f32 %v104, %v2206
    %v2208 = vmul.f32 %v2207, %v1148
    %v2210 = vsel %vm119, %v2208, 0
    %2212 = vmatprep.subr.mxu0 0.0
    %2213 = vmatpush1.msra.mxu0 0.0
    %2214 = vmatprep.subr.mxu0 0.0
    %2215 = vmatpush1.msra.mxu0 0.0
    %2216 = vmatprep.subr.mxu0 0.0
    %2217 = vmatpush1.msra.mxu0 0.0
    %2218 = vmatprep.subr.mxu0 0.0
    %2219 = vmatpush1.msra.mxu0 0.0
    %2220 = vmatprep.subr.mxu0 0.0
    %2221 = vmatpush1.msra.mxu0 0.0
    %2222 = vmatprep.subr.mxu0 0.0
    %2223 = vmatpush1.msra.mxu0 0.0
    %2224 = vmatprep.subr.mxu0 0.0
    %2225 = vmatpush1.msra.mxu0 0.0
    %2226 = vmatprep.subr.mxu0 0.0
    %2227 = vmatpush1.msra.mxu0 0.0
    %2228 = vmatprep.subr.mxu0 0.0
    %2229 = vmatpush1.msra.mxu0 0.0
    %2230 = vmatprep.subr.mxu0 0.0
    %2231 = vmatpush1.msra.mxu0 0.0
    %2232 = vmatprep.subr.mxu0 0.0
    %2233 = vmatpush1.msra.mxu0 0.0
    %2234 = vmatprep.subr.mxu0 0.0
    %2235 = vmatpush1.msra.mxu0 0.0
    %2236 = vmatprep.subr.mxu0 0.0
    %2237 = vmatpush1.msra.mxu0 %v86
    %2238 = vmatprep.subr.mxu0 0.0
    %2239 = vmatpush1.msra.mxu0 %v85
    %2240 = vmatprep.subr.mxu0 0.0
    %2241 = vmatpush1.msra.mxu0 %v84
    %2242 = vmatprep.subr.mxu0 0.0
    %2243 = vmatpush1.msra.mxu0 %v83
    %2244 = vmatprep.subr.mxu0 0.0
    %2245 = vmatpush2.msra.mxu0 0.0
    %2246 = vmatprep.subr.mxu0 0.0
    %2247 = vmatpush2.msra.mxu0 0.0
    %2248 = vmatprep.subr.mxu0 0.0
    %2249 = vmatpush2.msra.mxu0 0.0
    %2250 = vmatprep.subr.mxu0 0.0
    %2251 = vmatpush2.msra.mxu0 0.0
    %2252 = vmatprep.subr.mxu0 0.0
    %2253 = vmatpush2.msra.mxu0 0.0
    %2254 = vmatprep.subr.mxu0 0.0
    %2255 = vmatpush2.msra.mxu0 0.0
    %2256 = vmatprep.subr.mxu0 0.0
    %2257 = vmatpush2.msra.mxu0 0.0
    %2258 = vmatprep.subr.mxu0 0.0
    %2259 = vmatpush2.msra.mxu0 0.0
    %2260 = vmatprep.subr.mxu0 0.0
    %2261 = vmatpush2.msra.mxu0 0.0
    %2262 = vmatprep.subr.mxu0 0.0
    %2263 = vmatpush2.msra.mxu0 0.0
    %2264 = vmatprep.subr.mxu0 0.0
    %2265 = vmatpush2.msra.mxu0 0.0
    %2266 = vmatprep.subr.mxu0 0.0
    %2267 = vmatpush2.msra.mxu0 0.0
    %2268 = vmatprep.subr.mxu0 0.0
    %2269 = vmatpush2.msra.mxu0 0.0
    %2270 = vmatprep.subr.mxu0 0.0
    %2271 = vmatpush2.msra.mxu0 0.0
    %2272 = vmatprep.subr.mxu0 0.0
    %2273 = vmatpush2.msra.mxu0 0.0
    %2274 = vmatprep.subr.mxu0 0.0
    %2275 = vmatpush2.msra.mxu0 0.0
    %2276 = vmatprep.mubr.f32.mxu0 0.0
    %2277 = vmatmul.mubr.f32.gmra.mxu0 %v2210
    %v2278 = vpop.f32.mrf.mxu0
    %v2279 = vadd.f32 %v1406, %v2278
    %v2280 = vpop.f32.mrf.mxu0
    %2281 = vdwg.mxu0
    %v2282 = vtanh.pop %v2279
    %v2284 = vsel %vm119, %v2282, 0
    %2286 = vmatprep.subr.mxu0 0.0
    %2287 = vmatpush1.msra.mxu0 0.0
    %2288 = vmatprep.subr.mxu0 0.0
    %2289 = vmatpush1.msra.mxu0 0.0
    %2290 = vmatprep.subr.mxu0 0.0
    %2291 = vmatpush1.msra.mxu0 0.0
    %2292 = vmatprep.subr.mxu0 0.0
    %2293 = vmatpush1.msra.mxu0 0.0
    %2294 = vmatprep.subr.mxu0 0.0
    %2295 = vmatpush1.msra.mxu0 0.0
    %2296 = vmatprep.subr.mxu0 0.0
    %2297 = vmatpush1.msra.mxu0 0.0
    %2298 = vmatprep.subr.mxu0 0.0
    %2299 = vmatpush1.msra.mxu0 0.0
    %2300 = vmatprep.subr.mxu0 0.0
    %2301 = vmatpush1.msra.mxu0 0.0
    %2302 = vmatprep.subr.mxu0 0.0
    %2303 = vmatpush1.msra.mxu0 0.0
    %2304 = vmatprep.subr.mxu0 0.0
    %2305 = vmatpush1.msra.mxu0 0.0
    %2306 = vmatprep.subr.mxu0 0.0
    %2307 = vmatpush1.msra.mxu0 0.0
    %2308 = vmatprep.subr.mxu0 0.0
    %2309 = vmatpush1.msra.mxu0 0.0
    %2310 = vmatprep.subr.mxu0 0.0
    %2311 = vmatpush1.msra.mxu0 %v91
    %2312 = vmatprep.subr.mxu0 0.0
    %2313 = vmatpush1.msra.mxu0 %v90
    %2314 = vmatprep.subr.mxu0 0.0
    %2315 = vmatpush1.msra.mxu0 %v89
    %2316 = vmatprep.subr.mxu0 0.0
    %2317 = vmatpush1.msra.mxu0 %v88
    %2318 = vmatprep.subr.mxu0 0.0
    %2319 = vmatpush2.msra.mxu0 0.0
    %2320 = vmatprep.subr.mxu0 0.0
    %2321 = vmatpush2.msra.mxu0 0.0
    %2322 = vmatprep.subr.mxu0 0.0
    %2323 = vmatpush2.msra.mxu0 0.0
    %2324 = vmatprep.subr.mxu0 0.0
    %2325 = vmatpush2.msra.mxu0 0.0
    %2326 = vmatprep.subr.mxu0 0.0
    %2327 = vmatpush2.msra.mxu0 0.0
    %2328 = vmatprep.subr.mxu0 0.0
    %2329 = vmatpush2.msra.mxu0 0.0
    %2330 = vmatprep.subr.mxu0 0.0
    %2331 = vmatpush2.msra.mxu0 0.0
    %2332 = vmatprep.subr.mxu0 0.0
    %2333 = vmatpush2.msra.mxu0 0.0
    %2334 = vmatprep.subr.mxu0 0.0
    %2335 = vmatpush2.msra.mxu0 0.0
    %2336 = vmatprep.subr.mxu0 0.0
    %2337 = vmatpush2.msra.mxu0 0.0
    %2338 = vmatprep.subr.mxu0 0.0
    %2339 = vmatpush2.msra.mxu0 0.0
    %2340 = vmatprep.subr.mxu0 0.0
    %2341 = vmatpush2.msra.mxu0 0.0
    %2342 = vmatprep.subr.mxu0 0.0
    %2343 = vmatpush2.msra.mxu0 0.0
    %2344 = vmatprep.subr.mxu0 0.0
    %2345 = vmatpush2.msra.mxu0 0.0
    %2346 = vmatprep.subr.mxu0 0.0
    %2347 = vmatpush2.msra.mxu0 0.0
    %2348 = vmatprep.subr.mxu0 0.0
    %2349 = vmatpush2.msra.mxu0 0.0
    %2350 = vmatprep.mubr.f32.mxu0 0.0
    %2351 = vmatmul.mubr.f32.gmra.mxu0 %v2284
    %v2352 = vpop.f32.mrf.mxu0
    %v2353 = vadd.f32 %v1486, %v2352
    %v2354 = vpop.f32.mrf.mxu0
    %2355 = vdwg.mxu0
    %v2356 = vsel %vm273, %v2353, -inf
    %2357 = vmax.xlane.f32.xlu0 %v2356
    %v2358 = vpop.xlane.xlu0 %2357
    %v2359 = vsub.f32 %v2353, %v2358
    %v2360 = vmul.f32 %v2359, 1.442695
    %v2361 = vpow.pop %v2360
    %v2362 = vsel %vm273, %v2361, 0.0
    %2363 = vadd.xlane.f32.xlu0 %v2362
    %v2364 = vpop.xlane.xlu0 %2363
    %v2365 = vlog2.pop %v2364
    %v2366 = vmul.f32 %v2365, 0.6931472
    %v2367 = vadd.f32 %v2358, %v2366
    %vm2368 = vcmp.eq.f32.partialorder %v2353, %v2358
    %v2369 = vsel %vm2368, %v94, 128
    %v2370 = vsel %vm273, %v2369, 2147483647
    %v2371 = vand.u32 %v2370, 65535
    %v2372 = vshra.s32 %v2370, 16
    %v2373 = vcvt.s32.f32 %v2371
    %v2374 = vcvt.s32.f32 %v2372
    %2375 = vmin.xlane.f32.xlu0 %v2374
    %v2376 = vpop.xlane.xlu0 %2375
    %vm2377 = vcmp.eq.f32.partialorder %v2374, %v2376
    %v2378 = vsel %vm2377, %v2373, inf
    %2379 = vmin.xlane.f32.xlu0 %v2378
    %v2380 = vpop.xlane.xlu0 %2379
    %v2381 = vcvt.f32.s32 %v2380
    %v2382 = vcvt.f32.s32 %v2376
    %v2383 = vshll.u32 %v2382, 16
    %v2384 = vadd.s32 %v2383, %v2381
    %v2385 = vmul.f32 %v2353, %v1072
    %v2386 = vsel %vm273, %v2385, 0.0
    %2387 = vadd.xlane.f32.xlu0 %v2386
    %v2388 = vpop.xlane.xlu0 %2387
    %v2389 = vsub.f32 %v2388, %v2367
    %vm2390 = vcmp.ge.f32.partialorder %v2389, %v1073
    %v2391 = vsel %vm2390, %v1069, %v2384
    %vm2392 = vcmp.eq.s32.totalorder %v94, %v2384
    %v2393 = vsel %vm2392, 1, 0
    %v2394 = vcvt.s32.f32 %v2393
    %v2395 = vsel %vm2390, 1, 0
    %vm2396 = vcmp.eq.s32.totalorder %v2395, 1
    %v2397 = vsel %vm2396, %v1072, %v2394
    %v2398 = vadd.f32 %v2133, %v2397
    %vm2399 = vcmp.eq.s32.totalorder %v94, 3
    %v2400 = vsel %vm2399, %v2391, %v2135
    %2401 = vmatprep.subr.mxu0 0.0
    %2402 = vmatpush1.msra.mxu0 %v82
    %2403 = vmatprep.subr.mxu0 0.0
    %2404 = vmatpush1.msra.mxu0 %v81
    %2405 = vmatprep.subr.mxu0 0.0
    %2406 = vmatpush1.msra.mxu0 %v80
    %2407 = vmatprep.subr.mxu0 0.0
    %2408 = vmatpush1.msra.mxu0 %v79
    %2409 = vmatprep.subr.mxu0 0.0
    %2410 = vmatpush1.msra.mxu0 %v78
    %2411 = vmatprep.subr.mxu0 0.0
    %2412 = vmatpush1.msra.mxu0 %v77
    %2413 = vmatprep.subr.mxu0 0.0
    %2414 = vmatpush1.msra.mxu0 %v76
    %2415 = vmatprep.subr.mxu0 0.0
    %2416 = vmatpush1.msra.mxu0 %v75
    %2417 = vmatprep.subr.mxu0 0.0
    %2418 = vmatpush1.msra.mxu0 %v74
    %2419 = vmatprep.subr.mxu0 0.0
    %2420 = vmatpush1.msra.mxu0 %v73
    %2421 = vmatprep.subr.mxu0 0.0
    %2422 = vmatpush1.msra.mxu0 %v72
    %2423 = vmatprep.subr.mxu0 0.0
    %2424 = vmatpush1.msra.mxu0 %v71
    %2425 = vmatprep.subr.mxu0 0.0
    %2426 = vmatpush1.msra.mxu0 %v70
    %2427 = vmatprep.subr.mxu0 0.0
    %2428 = vmatpush1.msra.mxu0 %v69
    %2429 = vmatprep.subr.mxu0 0.0
    %2430 = vmatpush1.msra.mxu0 %v68
    %2431 = vmatprep.subr.mxu0 0.0
    %2432 = vmatpush1.msra.mxu0 %v67
    %2433 = vmatprep.subr.mxu0 0.0
    %2434 = vmatpush2.msra.mxu0 0.0
    %2435 = vmatprep.subr.mxu0 0.0
    %2436 = vmatpush2.msra.mxu0 0.0
    %2437 = vmatprep.subr.mxu0 0.0
    %2438 = vmatpush2.msra.mxu0 0.0
    %2439 = vmatprep.subr.mxu0 0.0
    %2440 = vmatpush2.msra.mxu0 0.0
    %2441 = vmatprep.subr.mxu0 0.0
    %2442 = vmatpush2.msra.mxu0 0.0
    %2443 = vmatprep.subr.mxu0 0.0
    %2444 = vmatpush2.msra.mxu0 0.0
    %2445 = vmatprep.subr.mxu0 0.0
    %2446 = vmatpush2.msra.mxu0 0.0
    %2447 = vmatprep.subr.mxu0 0.0
    %2448 = vmatpush2.msra.mxu0 0.0
    %2449 = vmatprep.subr.mxu0 0.0
    %2450 = vmatpush2.msra.mxu0 0.0
    %2451 = vmatprep.subr.mxu0 0.0
    %2452 = vmatpush2.msra.mxu0 0.0
    %2453 = vmatprep.subr.mxu0 0.0
    %2454 = vmatpush2.msra.mxu0 0.0
    %2455 = vmatprep.subr.mxu0 0.0
    %2456 = vmatpush2.msra.mxu0 0.0
    %2457 = vmatprep.subr.mxu0 0.0
    %2458 = vmatpush2.msra.mxu0 0.0
    %2459 = vmatprep.subr.mxu0 0.0
    %2460 = vmatpush2.msra.mxu0 0.0
    %2461 = vmatprep.subr.mxu0 0.0
    %2462 = vmatpush2.msra.mxu0 0.0
    %2463 = vmatprep.subr.mxu0 0.0
    %2464 = vmatpush2.msra.mxu0 0.0
    %2465 = vmatprep.mubr.f32.mxu0 0.0
    %2466 = vmatmul.mubr.f32.gmra.mxu0 %v1328
    %v2467 = vpop.f32.mrf.mxu0
    %v2468 = vadd.f32 0.0, %v2467
    %v2469 = vpop.f32.mrf.mxu0
    %2470 = vdwg.mxu0
    %v2471 = vadd.f32 %v2206, %v2468
    %v2472 = vadd.f32 %v104, %v2471
    %s2473 = sadd.f32 %s107, 5.0
    %v2474 = vstv %s2473
    %v2475 = vrcp.pop %v2474
    %v2476 = vmul.f32 %v2472, %v2475
    %v2478 = vsel %vm119, %v2476, 0
    %2480 = vmatprep.subr.mxu0 0.0
    %2481 = vmatpush1.msra.mxu0 0.0
    %2482 = vmatprep.subr.mxu0 0.0
    %2483 = vmatpush1.msra.mxu0 0.0
    %2484 = vmatprep.subr.mxu0 0.0
    %2485 = vmatpush1.msra.mxu0 0.0
    %2486 = vmatprep.subr.mxu0 0.0
    %2487 = vmatpush1.msra.mxu0 0.0
    %2488 = vmatprep.subr.mxu0 0.0
    %2489 = vmatpush1.msra.mxu0 0.0
    %2490 = vmatprep.subr.mxu0 0.0
    %2491 = vmatpush1.msra.mxu0 0.0
    %2492 = vmatprep.subr.mxu0 0.0
    %2493 = vmatpush1.msra.mxu0 0.0
    %2494 = vmatprep.subr.mxu0 0.0
    %2495 = vmatpush1.msra.mxu0 0.0
    %2496 = vmatprep.subr.mxu0 0.0
    %2497 = vmatpush1.msra.mxu0 0.0
    %2498 = vmatprep.subr.mxu0 0.0
    %2499 = vmatpush1.msra.mxu0 0.0
    %2500 = vmatprep.subr.mxu0 0.0
    %2501 = vmatpush1.msra.mxu0 0.0
    %2502 = vmatprep.subr.mxu0 0.0
    %2503 = vmatpush1.msra.mxu0 0.0
    %2504 = vmatprep.subr.mxu0 0.0
    %2505 = vmatpush1.msra.mxu0 %v86
    %2506 = vmatprep.subr.mxu0 0.0
    %2507 = vmatpush1.msra.mxu0 %v85
    %2508 = vmatprep.subr.mxu0 0.0
    %2509 = vmatpush1.msra.mxu0 %v84
    %2510 = vmatprep.subr.mxu0 0.0
    %2511 = vmatpush1.msra.mxu0 %v83
    %2512 = vmatprep.subr.mxu0 0.0
    %2513 = vmatpush2.msra.mxu0 0.0
    %2514 = vmatprep.subr.mxu0 0.0
    %2515 = vmatpush2.msra.mxu0 0.0
    %2516 = vmatprep.subr.mxu0 0.0
    %2517 = vmatpush2.msra.mxu0 0.0
    %2518 = vmatprep.subr.mxu0 0.0
    %2519 = vmatpush2.msra.mxu0 0.0
    %2520 = vmatprep.subr.mxu0 0.0
    %2521 = vmatpush2.msra.mxu0 0.0
    %2522 = vmatprep.subr.mxu0 0.0
    %2523 = vmatpush2.msra.mxu0 0.0
    %2524 = vmatprep.subr.mxu0 0.0
    %2525 = vmatpush2.msra.mxu0 0.0
    %2526 = vmatprep.subr.mxu0 0.0
    %2527 = vmatpush2.msra.mxu0 0.0
    %2528 = vmatprep.subr.mxu0 0.0
    %2529 = vmatpush2.msra.mxu0 0.0
    %2530 = vmatprep.subr.mxu0 0.0
    %2531 = vmatpush2.msra.mxu0 0.0
    %2532 = vmatprep.subr.mxu0 0.0
    %2533 = vmatpush2.msra.mxu0 0.0
    %2534 = vmatprep.subr.mxu0 0.0
    %2535 = vmatpush2.msra.mxu0 0.0
    %2536 = vmatprep.subr.mxu0 0.0
    %2537 = vmatpush2.msra.mxu0 0.0
    %2538 = vmatprep.subr.mxu0 0.0
    %2539 = vmatpush2.msra.mxu0 0.0
    %2540 = vmatprep.subr.mxu0 0.0
    %2541 = vmatpush2.msra.mxu0 0.0
    %2542 = vmatprep.subr.mxu0 0.0
    %2543 = vmatpush2.msra.mxu0 0.0
    %2544 = vmatprep.mubr.f32.mxu0 0.0
    %2545 = vmatmul.mubr.f32.gmra.mxu0 %v2478
    %v2546 = vpop.f32.mrf.mxu0
    %v2547 = vadd.f32 %v1406, %v2546
    %v2548 = vpop.f32.mrf.mxu0
    %2549 = vdwg.mxu0
    %v2550 = vtanh.pop %v2547
    %v2552 = vsel %vm119, %v2550, 0
    %2554 = vmatprep.subr.mxu0 0.0
    %2555 = vmatpush1.msra.mxu0 0.0
    %2556 = vmatprep.subr.mxu0 0.0
    %2557 = vmatpush1.msra.mxu0 0.0
    %2558 = vmatprep.subr.mxu0 0.0
    %2559 = vmatpush1.msra.mxu0 0.0
    %2560 = vmatprep.subr.mxu0 0.0
    %2561 = vmatpush1.msra.mxu0 0.0
    %2562 = vmatprep.subr.mxu0 0.0
    %2563 = vmatpush1.msra.mxu0 0.0
    %2564 = vmatprep.subr.mxu0 0.0
    %2565 = vmatpush1.msra.mxu0 0.0
    %2566 = vmatprep.subr.mxu0 0.0
    %2567 = vmatpush1.msra.mxu0 0.0
    %2568 = vmatprep.subr.mxu0 0.0
    %2569 = vmatpush1.msra.mxu0 0.0
    %2570 = vmatprep.subr.mxu0 0.0
    %2571 = vmatpush1.msra.mxu0 0.0
    %2572 = vmatprep.subr.mxu0 0.0
    %2573 = vmatpush1.msra.mxu0 0.0
    %2574 = vmatprep.subr.mxu0 0.0
    %2575 = vmatpush1.msra.mxu0 0.0
    %2576 = vmatprep.subr.mxu0 0.0
    %2577 = vmatpush1.msra.mxu0 0.0
    %2578 = vmatprep.subr.mxu0 0.0
    %2579 = vmatpush1.msra.mxu0 %v91
    %2580 = vmatprep.subr.mxu0 0.0
    %2581 = vmatpush1.msra.mxu0 %v90
    %2582 = vmatprep.subr.mxu0 0.0
    %2583 = vmatpush1.msra.mxu0 %v89
    %2584 = vmatprep.subr.mxu0 0.0
    %2585 = vmatpush1.msra.mxu0 %v88
    %2586 = vmatprep.subr.mxu0 0.0
    %2587 = vmatpush2.msra.mxu0 0.0
    %2588 = vmatprep.subr.mxu0 0.0
    %2589 = vmatpush2.msra.mxu0 0.0
    %2590 = vmatprep.subr.mxu0 0.0
    %2591 = vmatpush2.msra.mxu0 0.0
    %2592 = vmatprep.subr.mxu0 0.0
    %2593 = vmatpush2.msra.mxu0 0.0
    %2594 = vmatprep.subr.mxu0 0.0
    %2595 = vmatpush2.msra.mxu0 0.0
    %2596 = vmatprep.subr.mxu0 0.0
    %2597 = vmatpush2.msra.mxu0 0.0
    %2598 = vmatprep.subr.mxu0 0.0
    %2599 = vmatpush2.msra.mxu0 0.0
    %2600 = vmatprep.subr.mxu0 0.0
    %2601 = vmatpush2.msra.mxu0 0.0
    %2602 = vmatprep.subr.mxu0 0.0
    %2603 = vmatpush2.msra.mxu0 0.0
    %2604 = vmatprep.subr.mxu0 0.0
    %2605 = vmatpush2.msra.mxu0 0.0
    %2606 = vmatprep.subr.mxu0 0.0
    %2607 = vmatpush2.msra.mxu0 0.0
    %2608 = vmatprep.subr.mxu0 0.0
    %2609 = vmatpush2.msra.mxu0 0.0
    %2610 = vmatprep.subr.mxu0 0.0
    %2611 = vmatpush2.msra.mxu0 0.0
    %2612 = vmatprep.subr.mxu0 0.0
    %2613 = vmatpush2.msra.mxu0 0.0
    %2614 = vmatprep.subr.mxu0 0.0
    %2615 = vmatpush2.msra.mxu0 0.0
    %2616 = vmatprep.subr.mxu0 0.0
    %2617 = vmatpush2.msra.mxu0 0.0
    %2618 = vmatprep.mubr.f32.mxu0 0.0
    %2619 = vmatmul.mubr.f32.gmra.mxu0 %v2552
    %v2620 = vpop.f32.mrf.mxu0
    %v2621 = vadd.f32 %v1486, %v2620
    %v2622 = vpop.f32.mrf.mxu0
    %2623 = vdwg.mxu0
    %v2624 = vsel %vm273, %v2621, -inf
    %2625 = vmax.xlane.f32.xlu0 %v2624
    %v2626 = vpop.xlane.xlu0 %2625
    %v2627 = vsub.f32 %v2621, %v2626
    %v2628 = vmul.f32 %v2627, 1.442695
    %v2629 = vpow.pop %v2628
    %v2630 = vsel %vm273, %v2629, 0.0
    %2631 = vadd.xlane.f32.xlu0 %v2630
    %v2632 = vpop.xlane.xlu0 %2631
    %v2633 = vlog2.pop %v2632
    %v2634 = vmul.f32 %v2633, 0.6931472
    %v2635 = vadd.f32 %v2626, %v2634
    %vm2636 = vcmp.eq.f32.partialorder %v2621, %v2626
    %v2637 = vsel %vm2636, %v94, 128
    %v2638 = vsel %vm273, %v2637, 2147483647
    %v2639 = vand.u32 %v2638, 65535
    %v2640 = vshra.s32 %v2638, 16
    %v2641 = vcvt.s32.f32 %v2639
    %v2642 = vcvt.s32.f32 %v2640
    %2643 = vmin.xlane.f32.xlu0 %v2642
    %v2644 = vpop.xlane.xlu0 %2643
    %vm2645 = vcmp.eq.f32.partialorder %v2642, %v2644
    %v2646 = vsel %vm2645, %v2641, inf
    %2647 = vmin.xlane.f32.xlu0 %v2646
    %v2648 = vpop.xlane.xlu0 %2647
    %v2649 = vcvt.f32.s32 %v2648
    %v2650 = vcvt.f32.s32 %v2644
    %v2651 = vshll.u32 %v2650, 16
    %v2652 = vadd.s32 %v2651, %v2649
    %v2653 = vmul.f32 %v2621, %v1328
    %v2654 = vsel %vm273, %v2653, 0.0
    %2655 = vadd.xlane.f32.xlu0 %v2654
    %v2656 = vpop.xlane.xlu0 %2655
    %v2657 = vsub.f32 %v2656, %v2635
    %vm2658 = vcmp.ge.f32.partialorder %v2657, %v1329
    %v2659 = vsel %vm2658, %v1325, %v2652
    %vm2660 = vcmp.eq.s32.totalorder %v94, %v2652
    %v2661 = vsel %vm2660, 1, 0
    %v2662 = vcvt.s32.f32 %v2661
    %v2663 = vsel %vm2658, 1, 0
    %vm2664 = vcmp.eq.s32.totalorder %v2663, 1
    %v2665 = vsel %vm2664, %v1328, %v2662
    %v2666 = vadd.f32 %v2398, %v2665
    %vm2667 = vcmp.eq.s32.totalorder %v94, 4
    %v2668 = vsel %vm2667, %v2659, %v2400
    %s2669 = smul.u32 %s98, 2
    %s2670 = scalar_lea.vmem %s12, %s2669
    %vm2671 = vcmask 33792
    %2672 = vst.msk [vmem:[%s2670] sm:$0x3] %vm2671, %v2668
    %2673 = vmatprep.subr.mxu0 0.0
    %2674 = vmatpush1.msra.mxu0 %v56
    %2675 = vmatprep.subr.mxu0 0.0
    %2676 = vmatpush1.msra.mxu0 %v55
    %2677 = vmatprep.subr.mxu0 0.0
    %2678 = vmatpush1.msra.mxu0 %v54
    %2679 = vmatprep.subr.mxu0 0.0
    %2680 = vmatpush1.msra.mxu0 %v53
    %2681 = vmatprep.subr.mxu0 0.0
    %2682 = vmatpush1.msra.mxu0 %v52
    %2683 = vmatprep.subr.mxu0 0.0
    %2684 = vmatpush1.msra.mxu0 %v51
    %2685 = vmatprep.subr.mxu0 0.0
    %2686 = vmatpush1.msra.mxu0 %v50
    %2687 = vmatprep.subr.mxu0 0.0
    %2688 = vmatpush1.msra.mxu0 %v49
    %2689 = vmatprep.subr.mxu0 0.0
    %2690 = vmatpush1.msra.mxu0 %v48
    %2691 = vmatprep.subr.mxu0 0.0
    %2692 = vmatpush1.msra.mxu0 %v47
    %2693 = vmatprep.subr.mxu0 0.0
    %2694 = vmatpush1.msra.mxu0 %v46
    %2695 = vmatprep.subr.mxu0 0.0
    %2696 = vmatpush1.msra.mxu0 %v45
    %2697 = vmatprep.subr.mxu0 0.0
    %2698 = vmatpush1.msra.mxu0 %v44
    %2699 = vmatprep.subr.mxu0 0.0
    %2700 = vmatpush1.msra.mxu0 %v43
    %2701 = vmatprep.subr.mxu0 0.0
    %2702 = vmatpush1.msra.mxu0 %v42
    %2703 = vmatprep.subr.mxu0 0.0
    %2704 = vmatpush1.msra.mxu0 %v41
    %2705 = vmatprep.subr.mxu0 0.0
    %2706 = vmatpush2.msra.mxu0 0.0
    %2707 = vmatprep.subr.mxu0 0.0
    %2708 = vmatpush2.msra.mxu0 0.0
    %2709 = vmatprep.subr.mxu0 0.0
    %2710 = vmatpush2.msra.mxu0 0.0
    %2711 = vmatprep.subr.mxu0 0.0
    %2712 = vmatpush2.msra.mxu0 0.0
    %2713 = vmatprep.subr.mxu0 0.0
    %2714 = vmatpush2.msra.mxu0 0.0
    %2715 = vmatprep.subr.mxu0 0.0
    %2716 = vmatpush2.msra.mxu0 0.0
    %2717 = vmatprep.subr.mxu0 0.0
    %2718 = vmatpush2.msra.mxu0 0.0
    %2719 = vmatprep.subr.mxu0 0.0
    %2720 = vmatpush2.msra.mxu0 0.0
    %2721 = vmatprep.subr.mxu0 0.0
    %2722 = vmatpush2.msra.mxu0 0.0
    %2723 = vmatprep.subr.mxu0 0.0
    %2724 = vmatpush2.msra.mxu0 0.0
    %2725 = vmatprep.subr.mxu0 0.0
    %2726 = vmatpush2.msra.mxu0 0.0
    %2727 = vmatprep.subr.mxu0 0.0
    %2728 = vmatpush2.msra.mxu0 0.0
    %2729 = vmatprep.subr.mxu0 0.0
    %2730 = vmatpush2.msra.mxu0 0.0
    %2731 = vmatprep.subr.mxu0 0.0
    %2732 = vmatpush2.msra.mxu0 0.0
    %2733 = vmatprep.subr.mxu0 0.0
    %2734 = vmatpush2.msra.mxu0 0.0
    %2735 = vmatprep.subr.mxu0 0.0
    %2736 = vmatpush2.msra.mxu0 0.0
    %2737 = vmatprep.mubr.f32.mxu0 0.0
    %2738 = vmatmul.mubr.f32.gmra.mxu0 %v2666
    %v2739 = vpop.f32.mrf.mxu0
    %v2740 = vadd.f32 0.0, %v2739
    %v2741 = vpop.f32.mrf.mxu0
    %2742 = vdwg.mxu0
    %v2743 = vadd.f32 %v103, %v2740
    %2744 = vmatprep.subr.mxu0 0.0
    %2745 = vmatpush1.msra.mxu0 %v82
    %2746 = vmatprep.subr.mxu0 0.0
    %2747 = vmatpush1.msra.mxu0 %v81
    %2748 = vmatprep.subr.mxu0 0.0
    %2749 = vmatpush1.msra.mxu0 %v80
    %2750 = vmatprep.subr.mxu0 0.0
    %2751 = vmatpush1.msra.mxu0 %v79
    %2752 = vmatprep.subr.mxu0 0.0
    %2753 = vmatpush1.msra.mxu0 %v78
    %2754 = vmatprep.subr.mxu0 0.0
    %2755 = vmatpush1.msra.mxu0 %v77
    %2756 = vmatprep.subr.mxu0 0.0
    %2757 = vmatpush1.msra.mxu0 %v76
    %2758 = vmatprep.subr.mxu0 0.0
    %2759 = vmatpush1.msra.mxu0 %v75
    %2760 = vmatprep.subr.mxu0 0.0
    %2761 = vmatpush1.msra.mxu0 %v74
    %2762 = vmatprep.subr.mxu0 0.0
    %2763 = vmatpush1.msra.mxu0 %v73
    %2764 = vmatprep.subr.mxu0 0.0
    %2765 = vmatpush1.msra.mxu0 %v72
    %2766 = vmatprep.subr.mxu0 0.0
    %2767 = vmatpush1.msra.mxu0 %v71
    %2768 = vmatprep.subr.mxu0 0.0
    %2769 = vmatpush1.msra.mxu0 %v70
    %2770 = vmatprep.subr.mxu0 0.0
    %2771 = vmatpush1.msra.mxu0 %v69
    %2772 = vmatprep.subr.mxu0 0.0
    %2773 = vmatpush1.msra.mxu0 %v68
    %2774 = vmatprep.subr.mxu0 0.0
    %2775 = vmatpush1.msra.mxu0 %v67
    %2776 = vmatprep.subr.mxu0 0.0
    %2777 = vmatpush2.msra.mxu0 0.0
    %2778 = vmatprep.subr.mxu0 0.0
    %2779 = vmatpush2.msra.mxu0 0.0
    %2780 = vmatprep.subr.mxu0 0.0
    %2781 = vmatpush2.msra.mxu0 0.0
    %2782 = vmatprep.subr.mxu0 0.0
    %2783 = vmatpush2.msra.mxu0 0.0
    %2784 = vmatprep.subr.mxu0 0.0
    %2785 = vmatpush2.msra.mxu0 0.0
    %2786 = vmatprep.subr.mxu0 0.0
    %2787 = vmatpush2.msra.mxu0 0.0
    %2788 = vmatprep.subr.mxu0 0.0
    %2789 = vmatpush2.msra.mxu0 0.0
    %2790 = vmatprep.subr.mxu0 0.0
    %2791 = vmatpush2.msra.mxu0 0.0
    %2792 = vmatprep.subr.mxu0 0.0
    %2793 = vmatpush2.msra.mxu0 0.0
    %2794 = vmatprep.subr.mxu0 0.0
    %2795 = vmatpush2.msra.mxu0 0.0
    %2796 = vmatprep.subr.mxu0 0.0
    %2797 = vmatpush2.msra.mxu0 0.0
    %2798 = vmatprep.subr.mxu0 0.0
    %2799 = vmatpush2.msra.mxu0 0.0
    %2800 = vmatprep.subr.mxu0 0.0
    %2801 = vmatpush2.msra.mxu0 0.0
    %2802 = vmatprep.subr.mxu0 0.0
    %2803 = vmatpush2.msra.mxu0 0.0
    %2804 = vmatprep.subr.mxu0 0.0
    %2805 = vmatpush2.msra.mxu0 0.0
    %2806 = vmatprep.subr.mxu0 0.0
    %2807 = vmatpush2.msra.mxu0 0.0
    %2808 = vmatprep.mubr.f32.mxu0 0.0
    %2809 = vmatmul.mubr.f32.gmra.mxu0 %v2666
    %v2810 = vpop.f32.mrf.mxu0
    %v2811 = vadd.f32 0.0, %v2810
    %v2812 = vpop.f32.mrf.mxu0
    %2813 = vdwg.mxu0
    %v2814 = vadd.f32 %v104, %v2811
  $region54: #{speculative_forward.1} parent=0 // loop_footer
    %s102 = sadd.s32 1, %s98
  $region55: #{speculative_forward.1} parent=0 // loop_footer_branch
    %97 = sbr.rel target = $region51
  $region56: #{speculative_forward.1} parent=0 // loop_exit
    _
  // Predicated region
  $region57: #{speculative_forward.1} parent=0 // pred_check
    _
  $region58: #{speculative_forward.1} parent=0 // pred_check_branch
    %2816 = sbr.rel (0) target = $region60
  $region59: #{speculative_forward.1} parent=0 // pred_region
    _
  $region60: #{speculative_forward.1} parent=0 // pred_fallthru
    _
  // Predicated region
  $region61: #{speculative_forward.1} parent=0 // pred_check
    _
  $region62: #{speculative_forward.1} parent=0 // pred_check_branch
    %2818 = sbr.rel (0) target = $region64
  $region63: #{speculative_forward.1} parent=0 // pred_region
    _
  $region64: #{speculative_forward.1} parent=0 // pred_fallthru
    _

</llo_original>
